<compile_context>
chip_gen: v5e
topology: v5e:2x2
jax: 0.10.0
libtpu: 0.0.40
codegen_flags: <defaults>
</compile_context>

<pallas_src>
import functools
import math

import jax
import jax.numpy as jnp
from jax.experimental import pallas as pl
from jax.experimental.pallas import tpu as pltpu

LN_EPS = 1e-5
_STAT_ROWS = 8          # row 0: sum_n k ; row 1: per-lane sum_n q^2 ; row 2: per-lane sum_n k^2
_VMEM_LIMIT = 48 * 1024 * 1024        # raised scoped-VMEM cap (still < v7x's 64 MiB physical)
_RESIDENT_BUDGET = 12 * 1024 * 1024   # take the single-call resident-h fast path below this


def _round_up(x, m):
    return ((x + m - 1) // m) * m


# ----------------------------- in-kernel helpers -----------------------------

def _layernorm(h, gamma, beta):
    mean = jnp.mean(h, axis=-1, keepdims=True)
    var = jnp.mean((h - mean) ** 2, axis=-1, keepdims=True)
    return (h - mean) * jax.lax.rsqrt(var + LN_EPS) * gamma + beta


def _recip(x):
    # EUP approx reciprocal + one Newton-Raphson step: ~1e-7 relative error,
    # moves the divide off the VALU (otherwise a full VPU divide per tile).
    r = pl.reciprocal(x, approx=True)
    return r * (2.0 - x * r)


def _accumulate_next_stats(h, w_qkv, b_qkv, g_ref, s_ref, *, hc, tile, n_valid, n_pad):
    """Accumulate the global linear-attention statistics of the NEXT layer.

    g_ref : [HC, HC] running K^T V (full; consumer masks to block-diagonal per head)
    s_ref : [_STAT_ROWS, HC] rows 0..2 = sum_n k, per-lane sum_n q^2, per-lane sum_n k^2
    Padded rows (row index >= n_valid) are masked out so the stats are exact.
    """
    qkv = jnp.dot(h, w_qkv, preferred_element_type=jnp.float32) + b_qkv   # [T, 3HC]
    q = qkv[:, 0:hc]
    k = qkv[:, hc:2 * hc]
    v = qkv[:, 2 * hc:3 * hc]
    if n_valid < n_pad:   # static branch: only emitted when padding actually exists
        rows = pl.program_id(0) * tile + jax.lax.broadcasted_iota(jnp.int32, (tile, 1), 0)
        m = (rows < n_valid).astype(jnp.float32)
        q = q * m
        k = k * m        # zeroed k rows also zero their K^T V contribution

    # K^T V contracting over the row axis — no materialized transpose.
    g_part = jax.lax.dot_general(
        k, v, dimension_numbers=(((0,), (0,)), ((), ())),
        preferred_element_type=jnp.float32)

    @pl.when(pl.program_id(0) == 0)
    def _():
        g_ref[...] = jnp.zeros_like(g_ref)
        s_ref[...] = jnp.zeros_like(s_ref)

    g_ref[...] += g_part
    s_ref[0:1, :] += jnp.sum(k, axis=0, keepdims=True)
    s_ref[1:2, :] += jnp.sum(q * q, axis=0, keepdims=True)
    s_ref[2:3, :] += jnp.sum(k * k, axis=0, keepdims=True)


def _attention_rows(x, w_qv, b_qv, nd_mat, head_avg, gamma, beta,
                    *, n_total, hc, alpha, use_act):
    """Row-tile output of one TransConvLayer + residual + LayerNorm (+ ReLU).

    nd_mat [HC, 2HC] is precomputed in the wrapper:
        cols 0:HC   = blockdiag(K^T V) / (|q|_F |k|_F)      (numerator matrix)
        cols HC:2HC = ksum_h / (|q|_F |k|_F) broadcast over each head block (denominator)
    """
    nf = float(n_total)
    qv = jnp.dot(x, w_qv, preferred_element_type=jnp.float32) + b_qv      # [T, 2HC]
    q = qv[:, 0:hc]
    v = qv[:, hc:2 * hc]
    nd = jnp.dot(q, nd_mat, preferred_element_type=jnp.float32)           # [T, 2HC]
    num = nd[:, 0:hc] + nf * v
    den = nd[:, hc:2 * hc] + nf
    attn = num * _recip(den)
    # Mean over heads via a [HC, C] averaging matmul (stays on the MXU, no relayout).
    attn_mean = jnp.dot(attn, head_avg, preferred_element_type=jnp.float32)  # [T, C]
    h_new = alpha * attn_mean + (1.0 - alpha) * x
    h_new = _layernorm(h_new, gamma, beta)
    if use_act:
        h_new = jnp.maximum(h_new, 0.0)
    return h_new


# ------------------------------- Pallas kernels ------------------------------

def first_kernel(x_ref, fcw_ref, fcb_ref, g0_ref, b0_ref, wqkv_ref, bqkv_ref,
                 h_ref, gacc_ref, sacc_ref, *, hc, tile, n_valid, n_pad):
    # h0 = relu(LayerNorm(x @ W_fc + b_fc)); also accumulate layer-0 stats (fused).
    h = jnp.dot(x_ref[...], fcw_ref[...], preferred_element_type=jnp.float32) + fcb_ref[...]
    h = jnp.maximum(_layernorm(h, g0_ref[...], b0_ref[...]), 0.0)
    h_ref[...] = h
    _accumulate_next_stats(h, wqkv_ref[...], bqkv_ref[...], gacc_ref, sacc_ref,
                           hc=hc, tile=tile, n_valid=n_valid, n_pad=n_pad)


def mid_kernel(h_ref, wqv_ref, bqv_ref, nd_ref, havg_ref, lng_ref, lnb_ref,
               nwqkv_ref, nbqkv_ref,
               o_ref, gacc_ref, sacc_ref,
               *, n_total, hc, alpha, use_act, tile, n_valid, n_pad):
    # Layer-i output rows + accumulate layer-(i+1) stats (fused: h makes one HBM trip/layer).
    h_new = _attention_rows(h_ref[...], wqv_ref[...], bqv_ref[...], nd_ref[...],
                            havg_ref[...], lng_ref[...], lnb_ref[...],
                            n_total=n_total, hc=hc, alpha=alpha, use_act=use_act)
    o_ref[...] = h_new
    _accumulate_next_stats(h_new, nwqkv_ref[...], nbqkv_ref[...], gacc_ref, sacc_ref,
                           hc=hc, tile=tile, n_valid=n_valid, n_pad=n_pad)


def last_kernel(h_ref, wqv_ref, bqv_ref, nd_ref, havg_ref, lng_ref, lnb_ref, o_ref,
                *, n_total, hc, alpha, use_act):
    o_ref[...] = _attention_rows(h_ref[...], wqv_ref[...], bqv_ref[...], nd_ref[...],
                                 havg_ref[...], lng_ref[...], lnb_ref[...],
                                 n_total=n_total, hc=hc, alpha=alpha, use_act=use_act)


def fused_all_kernel(x_ref, fcw_ref, fcb_ref, lng_ref, lnb_ref,
                     wqkv_ref, bqkv_ref, hmask_ref, havg_ref, o_ref,
                     *, n_total, num_layers, hc, alpha, use_act):
    """Resident-h fast path: all layers in one kernel, h never leaves VMEM."""
    nf = float(n_total)
    h = jnp.dot(x_ref[...], fcw_ref[...], preferred_element_type=jnp.float32) + fcb_ref[...]
    h = jnp.maximum(_layernorm(h, lng_ref[0], lnb_ref[0]), 0.0)
    hmask = hmask_ref[...]
    havg = havg_ref[...]
    for li in range(num_layers):                           # static unroll (num_layers small)
        qkv = (jnp.dot(h, wqkv_ref[li], preferred_element_type=jnp.float32)
               + bqkv_ref[li])                             # [N, 3HC], one wide MXU matmul
        q = qkv[:, 0:hc]
        k = qkv[:, hc:2 * hc]
        v = qkv[:, 2 * hc:3 * hc]
        inv_qk = jax.lax.rsqrt(jnp.sum(q * q)) * jax.lax.rsqrt(jnp.sum(k * k))
        g = jax.lax.dot_general(k, v, dimension_numbers=(((0,), (0,)), ((), ())),
                                preferred_element_type=jnp.float32)       # K^T V, [HC, HC]
        ksum = jnp.sum(k, axis=0, keepdims=True)                          # [1, HC]
        num = inv_qk * jnp.dot(q, g * hmask, preferred_element_type=jnp.float32) + nf * v
        den = inv_qk * jnp.dot(q * ksum, hmask, preferred_element_type=jnp.float32) + nf
        attn = num * _recip(den)
        attn_mean = jnp.dot(attn, havg, preferred_element_type=jnp.float32)
        h = _layernorm(alpha * attn_mean + (1.0 - alpha) * h, lng_ref[li + 1], lnb_ref[li + 1])
        if use_act:
            h = jnp.maximum(h, 0.0)
    o_ref[...] = h


# ------------------------------- host-side helpers ----------------------------

def _make_head_mask(num_heads, out_c):
    hc = num_heads * out_c
    ri = jnp.arange(hc)[:, None] // out_c
    ci = jnp.arange(hc)[None, :] // out_c
    return (ri == ci).astype(jnp.float32)                 # [HC, HC] block-diagonal


def _make_head_avg(num_heads, out_c):
    hc = num_heads * out_c
    ri = jnp.arange(hc)[:, None] % out_c
    ci = jnp.arange(out_c)[None, :]
    return (ri == ci).astype(jnp.float32) / float(num_heads)   # [HC, C] head-mean matmul


class TransConvPallas:
    """Pallas implementation of SGformer's TransConv (eval mode)."""

    def __init__(self, in_channels, hidden_channels, num_layers=2, num_heads=1,
                 alpha=0.5, use_act=True, seed=0, tile_n=512):
        self.hidden = hidden_channels
        self.num_layers = num_layers
        self.num_heads = num_heads
        self.alpha = alpha
        self.use_act = use_act
        # Row-tile size (tiled path). 512 fills the 256-tall MXU and keeps per-step
        # overhead (~0.35 us) negligible; use 1024 on v5e/v6e (128 MiB VMEM) if desired.
        self.tile_n = tile_n

        key = jax.random.PRNGKey(seed)

        def linear_params(key, fan_in, fan_out):
            kw, kb = jax.random.split(key)
            bound = 1.0 / math.sqrt(fan_in)
            w = jax.random.uniform(kw, (fan_in, fan_out), jnp.float32, -bound, bound)
            b = jax.random.uniform(kb, (1, fan_out), jnp.float32, -bound, bound)
            return w, b

        keys = jax.random.split(key, 1 + 3 * num_layers)
        self.fc_w, self.fc_b = linear_params(keys[0], in_channels, hidden_channels)
        self.ln0_g = jnp.ones((1, hidden_channels), jnp.float32)
        self.ln0_b = jnp.zeros((1, hidden_channels), jnp.float32)

        self.layers = []
        for i in range(num_layers):
            wq, bq = linear_params(keys[1 + 3 * i], hidden_channels, hidden_channels * num_heads)
            wk, bk = linear_params(keys[2 + 3 * i], hidden_channels, hidden_channels * num_heads)
            wv, bv = linear_params(keys[3 + 3 * i], hidden_channels, hidden_channels * num_heads)
            g = jnp.ones((1, hidden_channels), jnp.float32)
            b = jnp.zeros((1, hidden_channels), jnp.float32)
            self.layers.append((wq, bq, wk, bk, wv, bv, g, b))

        # Packed weight slabs: [D, 3HC] (stats pass) and [D, 2HC] (output pass).
        self.packed = []
        for (wq, bq, wk, bk, wv, bv, _, _) in self.layers:
            self.packed.append((jnp.concatenate([wq, wk, wv], axis=1),
                                jnp.concatenate([bq, bk, bv], axis=1),
                                jnp.concatenate([wq, wv], axis=1),
                                jnp.concatenate([bq, bv], axis=1)))
        self.wqkv_stack = jnp.stack([p[0] for p in self.packed])            # [L, D, 3HC]
        self.bqkv_stack = jnp.stack([p[1] for p in self.packed])            # [L, 1, 3HC]
        self.ln_g_stack = jnp.stack([self.ln0_g] + [l[6] for l in self.layers])  # [L+1,1,D]
        self.ln_b_stack = jnp.stack([self.ln0_b] + [l[7] for l in self.layers])

        # Hoisted grid-invariant constants (were rebuilt per tile before).
        self.head_mask = _make_head_mask(num_heads, hidden_channels)        # [HC, HC]
        self.head_avg = _make_head_avg(num_heads, hidden_channels)          # [HC, C]

        self._resident_jit = jax.jit(self._forward_resident)
        self._tiled_jit = jax.jit(self._forward_tiled)

    # --------------------------------------------------------------------- API
    def __call__(self, x, force_tiled=False):
        n, in_c = x.shape
        if not force_tiled and self._fits_resident(n, in_c):
            return self._resident_jit(x)
        return self._tiled_jit(x)

    def _fits_resident(self, n, in_c):
        d = self.hidden
        hc = d * self.num_heads
        rows = 4 * n * (in_c + 6 * d + 6 * hc)
        weights = 4 * (in_c * d + self.num_layers * 3 * d * hc + 4 * hc * hc)
        return rows + weights <= _RESIDENT_BUDGET

    # ----------------------------------------------- fast path (single call)
    def _forward_resident(self, x):
        n, in_c = x.shape
        d = self.hidden
        hc = d * self.num_heads

        def full(shape):
            return pl.BlockSpec(shape, lambda i, _s=shape: (0,) * len(_s))

        kern = functools.partial(fused_all_kernel, n_total=n, num_layers=self.num_layers,
                                 hc=hc, alpha=self.alpha, use_act=self.use_act)
        return pl.pallas_call(
            kern,
            grid=(1,),
            out_shape=jax.ShapeDtypeStruct((n, d), jnp.float32),
            in_specs=[full(x.shape), full(self.fc_w.shape), full(self.fc_b.shape),
                      full(self.ln_g_stack.shape), full(self.ln_b_stack.shape),
                      full(self.wqkv_stack.shape), full(self.bqkv_stack.shape),
                      full(self.head_mask.shape), full(self.head_avg.shape)],
            out_specs=full((n, d)),
            compiler_params=pltpu.CompilerParams(
                dimension_semantics=("arbitrary",),
                vmem_limit_bytes=_VMEM_LIMIT),
        )(x, self.fc_w, self.fc_b, self.ln_g_stack, self.ln_b_stack,
          self.wqkv_stack, self.bqkv_stack, self.head_mask, self.head_avg)

    # ----------------------------------------------- tiled path (large N)
    def _forward_tiled(self, x):
        n, in_c = x.shape
        d = self.hidden
        hc = d * self.num_heads
        L = self.num_layers

        tile = min(self.tile_n, _round_up(n, 8))
        n_pad = _round_up(n, tile)
        if n_pad != n:
            x = jnp.concatenate([x, jnp.zeros((n_pad - n, in_c), x.dtype)], axis=0)
        grid = (n_pad // tile,)

        h_shape = jax.ShapeDtypeStruct((n_pad, d), jnp.float32)
        g_shape = jax.ShapeDtypeStruct((hc, hc), jnp.float32)
        s_shape = jax.ShapeDtypeStruct((_STAT_ROWS, hc), jnp.float32)

        def row_spec(dim):
            return pl.BlockSpec((tile, dim), lambda i: (i, 0))

        def full_spec(shape):
            # Constant index_map: stays VMEM-resident across grid steps (no re-DMA).
            return pl.BlockSpec(shape, lambda i: (0, 0))

        seq_params = pltpu.CompilerParams(dimension_semantics=("arbitrary",),
                                          vmem_limit_bytes=_VMEM_LIMIT)
        par_params = pltpu.CompilerParams(dimension_semantics=("parallel",),
                                          vmem_limit_bytes=_VMEM_LIMIT)
        # TODO(synk): on v7x, give the stats passes a (core, row_tile) grid with per-core
        # partial g/s accumulators (reduced in the wrapper) so both TensorCores share work.

        # ---- fc + LN + ReLU fused with layer-0 stats reduction ----
        wqkv0, bqkv0 = self.packed[0][0], self.packed[0][1]
        kern = functools.partial(first_kernel, hc=hc, tile=tile, n_valid=n, n_pad=n_pad)
        h, g_stat, s_stat = pl.pallas_call(
            kern, grid=grid,
            out_shape=(h_shape, g_shape, s_shape),
            in_specs=[row_spec(in_c),
                      full_spec(self.fc_w.shape), full_spec(self.fc_b.shape),
                      full_spec(self.ln0_g.shape), full_spec(self.ln0_b.shape),
                      full_spec(wqkv0.shape), full_spec(bqkv0.shape)],
            out_specs=(row_spec(d), full_spec((hc, hc)), full_spec((_STAT_ROWS, hc))),
            compiler_params=seq_params,
        )(x, self.fc_w, self.fc_b, self.ln0_g, self.ln0_b, wqkv0, bqkv0)

        def make_nd_mat(g_stat, s_stat):
            # Grid-invariant attention matrices, computed ONCE per layer (tiny XLA glue
            # fused under jit) instead of per tile: 1/(|q|_F |k|_F), masked K^T V and the
            # per-head ksum denominator folded into one [HC, 2HC] slab.
            inv_qk = (jax.lax.rsqrt(jnp.sum(s_stat[1, :])) *
                      jax.lax.rsqrt(jnp.sum(s_stat[2, :])))
            g_eff = g_stat * self.head_mask * inv_qk
            den_mat = (s_stat[0, :] * inv_qk)[:, None] * self.head_mask
            return jnp.concatenate([g_eff, den_mat], axis=1)

        out_kwargs = dict(n_total=n, hc=hc, alpha=self.alpha, use_act=self.use_act)

        # ---- layers 0 .. L-2: layer-i output rows + layer-(i+1) stats (fused) ----
        for li in range(L - 1):
            _, _, w_qv, b_qv = self.packed[li]
            g_ln, b_ln = self.layers[li][6], self.layers[li][7]
            nwqkv, nbqkv = self.packed[li + 1][0], self.packed[li + 1][1]
            nd_mat = make_nd_mat(g_stat, s_stat)
            kern = functools.partial(mid_kernel, tile=tile, n_valid=n, n_pad=n_pad,
                                     **out_kwargs)
            h, g_stat, s_stat = pl.pallas_call(
                kern, grid=grid,
                out_shape=(h_shape, g_shape, s_shape),
                in_specs=[row_spec(d),
                          full_spec(w_qv.shape), full_spec(b_qv.shape),
                          full_spec((hc, 2 * hc)), full_spec(self.head_avg.shape),
                          full_spec(g_ln.shape), full_spec(b_ln.shape),
                          full_spec(nwqkv.shape), full_spec(nbqkv.shape)],
                out_specs=(row_spec(d), full_spec((hc, hc)), full_spec((_STAT_ROWS, hc))),
                compiler_params=seq_params,
            )(h, w_qv, b_qv, nd_mat, self.head_avg, g_ln, b_ln, nwqkv, nbqkv)

        # ---- final layer: pure row-parallel output pass ----
        _, _, w_qv, b_qv = self.packed[-1]
        g_ln, b_ln = self.layers[-1][6], self.layers[-1][7]
        nd_mat = make_nd_mat(g_stat, s_stat)
        kern = functools.partial(last_kernel, **out_kwargs)
        h = pl.pallas_call(
            kern, grid=grid,
            out_shape=h_shape,
            in_specs=[row_spec(d),
                      full_spec(w_qv.shape), full_spec(b_qv.shape),
                      full_spec((hc, 2 * hc)), full_spec(self.head_avg.shape),
                      full_spec(g_ln.shape), full_spec(b_ln.shape)],
            out_specs=row_spec(d),
            compiler_params=par_params,
        )(h, w_qv, b_qv, nd_mat, self.head_avg, g_ln, b_ln)

        return h[:n] if n_pad != n else h


# ------------------------------ pure-JAX reference ----------------------------

def _ref_forward(model, x):
    def layernorm(h, g, b):
        m = jnp.mean(h, axis=-1, keepdims=True)
        v = jnp.mean((h - m) ** 2, axis=-1, keepdims=True)
        return (h - m) / jnp.sqrt(v + LN_EPS) * g + b

    H, C = model.num_heads, model.hidden
    h = x @ model.fc_w + model.fc_b
    h = jnp.maximum(layernorm(h, model.ln0_g, model.ln0_b), 0.0)
    for (wq, bq, wk, bk, wv, bv, g, b) in model.layers:
        n = h.shape[0]
        q = (h @ wq + bq).reshape(n, H, C)
        k = (h @ wk + bk).reshape(n, H, C)
        v = (h @ wv + bv).reshape(n, H, C)
        qs = q / jnp.linalg.norm(q)
        ks = k / jnp.linalg.norm(k)
        kvs = jnp.einsum('lhm,lhd->hmd', ks, v)
        num = jnp.einsum('nhm,hmd->nhd', qs, kvs) + n * v
        den = jnp.einsum('nhm,hm->nh', qs, jnp.sum(ks, axis=0))[..., None] + n
        attn = (num / den).mean(axis=1)
        hn = model.alpha * attn + (1 - model.alpha) * h
        hn = layernorm(hn, g, b)
        if model.use_act:
            hn = jnp.maximum(hn, 0.0)
        h = hn
    return h


# ------------------------------------ main -------------------------------------

if __name__ == "__main__":
    # TODO(synk): dropout is identity in eval mode (training-mode RNG dropout not implemented).
    N, IN_C, HIDDEN, HEADS, LAYERS = 256, 32, 64, 2, 2   # H*C = 128 -> lane-dense q/k/v slabs

    model = TransConvPallas(IN_C, HIDDEN, num_layers=LAYERS, num_heads=HEADS,
                            alpha=0.5, use_act=True, seed=0, tile_n=512)

    x = jax.random.normal(jax.random.PRNGKey(0), (N, IN_C), dtype=jnp.float32)

    # Fast path: whole graph resident in VMEM, all layers in a single pallas_call.
    out = jax.block_until_ready(model(x))
    ref = _ref_forward(model, x)
    assert out.shape == (N, HIDDEN)
    assert jnp.allclose(out, ref, atol=1e-4, rtol=1e-4), "fast-path mismatch vs. JAX reference"

    # Tiled path (row-padded with masked stats) — exercised explicitly on a ragged N.
    N2 = 250
    x2 = jax.random.normal(jax.random.PRNGKey(1), (N2, IN_C), dtype=jnp.float32)
    out2 = jax.block_until_ready(model(x2, force_tiled=True))
    ref2 = _ref_forward(model, x2)
    assert out2.shape == (N2, HIDDEN)
    assert jnp.allclose(out2, ref2, atol=1e-4, rtol=1e-4), "tiled-path mismatch vs. JAX reference"

    print("KERNEL_OK")
</pallas_src>

<mosaic_0001>
module attributes {stable_mosaic.version = 11 : i64} {
  func.func @fused_all_kernel(%arg0: i32, %arg1: memref<256x32xf32, #tpu.memory_space<vmem>>, %arg2: memref<32x64xf32, #tpu.memory_space<vmem>>, %arg3: memref<1x64xf32, #tpu.memory_space<vmem>>, %arg4: memref<3x1x64xf32, #tpu.memory_space<vmem>>, %arg5: memref<3x1x64xf32, #tpu.memory_space<vmem>>, %arg6: memref<2x64x384xf32, #tpu.memory_space<vmem>>, %arg7: memref<2x1x384xf32, #tpu.memory_space<vmem>>, %arg8: memref<128x128xf32, #tpu.memory_space<vmem>>, %arg9: memref<128x64xf32, #tpu.memory_space<vmem>>, %arg10: memref<256x64xf32, #tpu.memory_space<vmem>>) attributes {dimension_semantics = [#tpu.dimension_semantics<arbitrary>], iteration_bounds = array<i64: 1>, scalar_prefetch = 0 : i64, scratch_operands = 0 : i64, tpu.core_type = #tpu.core_type<tc>, window_params = [{pipeline_mode = #tpu.pipeline_mode<synchronous>, transform_indices = @transform_0, window_bounds = array<i64: 256, 32>}, {pipeline_mode = #tpu.pipeline_mode<synchronous>, transform_indices = @transform_1, window_bounds = array<i64: 32, 64>}, {pipeline_mode = #tpu.pipeline_mode<synchronous>, transform_indices = @transform_2, window_bounds = array<i64: 1, 64>}, {pipeline_mode = #tpu.pipeline_mode<synchronous>, transform_indices = @transform_3, window_bounds = array<i64: 3, 1, 64>}, {pipeline_mode = #tpu.pipeline_mode<synchronous>, transform_indices = @transform_4, window_bounds = array<i64: 3, 1, 64>}, {pipeline_mode = #tpu.pipeline_mode<synchronous>, transform_indices = @transform_5, window_bounds = array<i64: 2, 64, 384>}, {pipeline_mode = #tpu.pipeline_mode<synchronous>, transform_indices = @transform_6, window_bounds = array<i64: 2, 1, 384>}, {pipeline_mode = #tpu.pipeline_mode<synchronous>, transform_indices = @transform_7, window_bounds = array<i64: 128, 128>}, {pipeline_mode = #tpu.pipeline_mode<synchronous>, transform_indices = @transform_8, window_bounds = array<i64: 128, 64>}, {pipeline_mode = #tpu.pipeline_mode<synchronous>, transform_indices = @transform_9, window_bounds = array<i64: 256, 64>}]} {
    %c0 = arith.constant 0 : index
    %c0_0 = arith.constant 0 : index
    %0 = vector.load %arg1[%c0, %c0_0] : memref<256x32xf32, #tpu.memory_space<vmem>>, vector<256x32xf32>
    %c0_1 = arith.constant 0 : index
    %c0_2 = arith.constant 0 : index
    %1 = vector.load %arg2[%c0_1, %c0_2] : memref<32x64xf32, #tpu.memory_space<vmem>>, vector<32x64xf32>
    %cst = arith.constant dense<0.000000e+00> : vector<256x64xf32>
    %2 = tpu.matmul %0, %1, %cst {dimension_numbers = #tpu.dot_dimension_numbers<[1], [0], [0], [1], [0, 0, 1, 1], [], []>} : vector<256x32xf32>, vector<32x64xf32>, vector<256x64xf32> -> vector<256x64xf32>
    %c0_3 = arith.constant 0 : index
    %c0_4 = arith.constant 0 : index
    %3 = vector.load %arg3[%c0_3, %c0_4] : memref<1x64xf32, #tpu.memory_space<vmem>>, vector<1x64xf32>
    %4 = vector.broadcast %3 : vector<1x64xf32> to vector<256x64xf32>
    %5 = arith.addf %2, %4 : vector<256x64xf32>
    %c0_5 = arith.constant 0 : index
    %c0_6 = arith.constant 0 : index
    %c0_7 = arith.constant 0 : index
    %6 = vector.load %arg4[%c0_5, %c0_6, %c0_7] : memref<3x1x64xf32, #tpu.memory_space<vmem>>, vector<1x1x64xf32>
    %7 = vector.shape_cast %6 : vector<1x1x64xf32> to vector<1x64xf32>
    %c0_8 = arith.constant 0 : index
    %c0_9 = arith.constant 0 : index
    %c0_10 = arith.constant 0 : index
    %8 = vector.load %arg5[%c0_8, %c0_9, %c0_10] : memref<3x1x64xf32, #tpu.memory_space<vmem>>, vector<1x1x64xf32>
    %9 = vector.shape_cast %8 : vector<1x1x64xf32> to vector<1x64xf32>
    %cst_11 = arith.constant dense<0.000000e+00> : vector<256xf32>
    %10 = vector.multi_reduction <add>, %5, %cst_11 [1] : vector<256x64xf32> to vector<256xf32>
    %11 = vector.shape_cast %10 : vector<256xf32> to vector<256x1xf32>
    %cst_12 = arith.constant 6.400000e+01 : f32
    %12 = vector.broadcast %cst_12 : f32 to vector<256x1xf32>
    %13 = arith.divf %11, %12 : vector<256x1xf32>
    %14 = vector.broadcast %13 : vector<256x1xf32> to vector<256x64xf32>
    %15 = arith.subf %5, %14 : vector<256x64xf32>
    %16 = arith.mulf %15, %15 : vector<256x64xf32>
    %cst_13 = arith.constant dense<0.000000e+00> : vector<256xf32>
    %17 = vector.multi_reduction <add>, %16, %cst_13 [1] : vector<256x64xf32> to vector<256xf32>
    %18 = vector.shape_cast %17 : vector<256xf32> to vector<256x1xf32>
    %cst_14 = arith.constant 6.400000e+01 : f32
    %19 = vector.broadcast %cst_14 : f32 to vector<256x1xf32>
    %20 = arith.divf %18, %19 : vector<256x1xf32>
    %21 = vector.broadcast %13 : vector<256x1xf32> to vector<256x64xf32>
    %22 = arith.subf %5, %21 : vector<256x64xf32>
    %cst_15 = arith.constant 9.99999974E-6 : f32
    %23 = vector.broadcast %cst_15 : f32 to vector<256x1xf32>
    %24 = arith.addf %20, %23 : vector<256x1xf32>
    %25 = math.rsqrt %24 : vector<256x1xf32>
    %26 = vector.broadcast %25 : vector<256x1xf32> to vector<256x64xf32>
    %27 = arith.mulf %22, %26 : vector<256x64xf32>
    %28 = vector.broadcast %7 : vector<1x64xf32> to vector<256x64xf32>
    %29 = arith.mulf %27, %28 : vector<256x64xf32>
    %30 = vector.broadcast %9 : vector<1x64xf32> to vector<256x64xf32>
    %31 = arith.addf %29, %30 : vector<256x64xf32>
    %cst_16 = arith.constant 0.000000e+00 : f32
    %32 = vector.broadcast %cst_16 : f32 to vector<256x64xf32>
    %33 = arith.maximumf %31, %32 : vector<256x64xf32>
    %c0_17 = arith.constant 0 : index
    %c0_18 = arith.constant 0 : index
    %34 = vector.load %arg8[%c0_17, %c0_18] : memref<128x128xf32, #tpu.memory_space<vmem>>, vector<128x128xf32>
    %c0_19 = arith.constant 0 : index
    %c0_20 = arith.constant 0 : index
    %35 = vector.load %arg9[%c0_19, %c0_20] : memref<128x64xf32, #tpu.memory_space<vmem>>, vector<128x64xf32>
    %c0_21 = arith.constant 0 : index
    %c0_22 = arith.constant 0 : index
    %c0_23 = arith.constant 0 : index
    %36 = vector.load %arg6[%c0_21, %c0_22, %c0_23] : memref<2x64x384xf32, #tpu.memory_space<vmem>>, vector<1x64x384xf32>
    %37 = vector.shape_cast %36 : vector<1x64x384xf32> to vector<64x384xf32>
    %cst_24 = arith.constant dense<0.000000e+00> : vector<256x384xf32>
    %38 = tpu.matmul %33, %37, %cst_24 {dimension_numbers = #tpu.dot_dimension_numbers<[1], [0], [0], [1], [0, 0, 1, 1], [], []>} : vector<256x64xf32>, vector<64x384xf32>, vector<256x384xf32> -> vector<256x384xf32>
    %c0_25 = arith.constant 0 : index
    %c0_26 = arith.constant 0 : index
    %c0_27 = arith.constant 0 : index
    %39 = vector.load %arg7[%c0_25, %c0_26, %c0_27] : memref<2x1x384xf32, #tpu.memory_space<vmem>>, vector<1x1x384xf32>
    %40 = vector.shape_cast %39 : vector<1x1x384xf32> to vector<1x384xf32>
    %41 = vector.broadcast %40 : vector<1x384xf32> to vector<256x384xf32>
    %42 = arith.addf %38, %41 : vector<256x384xf32>
    %43 = vector.extract_strided_slice %42 {offsets = [0, 0], sizes = [256, 128], strides = [1, 1]} : vector<256x384xf32> to vector<256x128xf32>
    %44 = vector.extract_strided_slice %42 {offsets = [0, 128], sizes = [256, 128], strides = [1, 1]} : vector<256x384xf32> to vector<256x128xf32>
    %45 = vector.extract_strided_slice %42 {offsets = [0, 256], sizes = [256, 128], strides = [1, 1]} : vector<256x384xf32> to vector<256x128xf32>
    %46 = arith.mulf %43, %43 : vector<256x128xf32>
    %47 = vector.shape_cast %46 : vector<256x128xf32> to vector<1x256x128xf32>
    %cst_28 = arith.constant dense<0.000000e+00> : vector<1xf32>
    %48 = vector.multi_reduction <add>, %47, %cst_28 [1, 2] : vector<1x256x128xf32> to vector<1xf32>
    %49 = vector.shape_cast %48 : vector<1xf32> to vector<1x1x1xf32>
    %50 = vector.extract %49[0, 0, 0] : f32 from vector<1x1x1xf32>
    %51 = math.rsqrt %50 : f32
    %52 = arith.mulf %44, %44 : vector<256x128xf32>
    %53 = vector.shape_cast %52 : vector<256x128xf32> to vector<1x256x128xf32>
    %cst_29 = arith.constant dense<0.000000e+00> : vector<1xf32>
    %54 = vector.multi_reduction <add>, %53, %cst_29 [1, 2] : vector<1x256x128xf32> to vector<1xf32>
    %55 = vector.shape_cast %54 : vector<1xf32> to vector<1x1x1xf32>
    %56 = vector.extract %55[0, 0, 0] : f32 from vector<1x1x1xf32>
    %57 = math.rsqrt %56 : f32
    %58 = arith.mulf %51, %57 : f32
    %cst_30 = arith.constant dense<0.000000e+00> : vector<128x128xf32>
    %59 = tpu.matmul %44, %45, %cst_30 {dimension_numbers = #tpu.dot_dimension_numbers<[0], [0], [1], [1], [0, 1, 1, 1], [], []>} : vector<256x128xf32>, vector<256x128xf32>, vector<128x128xf32> -> vector<128x128xf32>
    %cst_31 = arith.constant dense<0.000000e+00> : vector<128xf32>
    %60 = vector.multi_reduction <add>, %44, %cst_31 [0] : vector<256x128xf32> to vector<128xf32>
    %61 = vector.shape_cast %60 : vector<128xf32> to vector<1x128xf32>
    %62 = arith.mulf %59, %34 : vector<128x128xf32>
    %cst_32 = arith.constant dense<0.000000e+00> : vector<256x128xf32>
    %63 = tpu.matmul %43, %62, %cst_32 {dimension_numbers = #tpu.dot_dimension_numbers<[1], [0], [0], [1], [0, 0, 1, 1], [], []>} : vector<256x128xf32>, vector<128x128xf32>, vector<256x128xf32> -> vector<256x128xf32>
    %64 = vector.broadcast %58 : f32 to vector<256x128xf32>
    %65 = arith.mulf %64, %63 : vector<256x128xf32>
    %cst_33 = arith.constant 2.560000e+02 : f32
    %66 = vector.broadcast %cst_33 : f32 to vector<256x128xf32>
    %67 = arith.mulf %66, %45 : vector<256x128xf32>
    %68 = arith.addf %65, %67 : vector<256x128xf32>
    %69 = vector.broadcast %61 : vector<1x128xf32> to vector<256x128xf32>
    %70 = arith.mulf %43, %69 : vector<256x128xf32>
    %cst_34 = arith.constant dense<0.000000e+00> : vector<256x128xf32>
    %71 = tpu.matmul %70, %34, %cst_34 {dimension_numbers = #tpu.dot_dimension_numbers<[1], [0], [0], [1], [0, 0, 1, 1], [], []>} : vector<256x128xf32>, vector<128x128xf32>, vector<256x128xf32> -> vector<256x128xf32>
    %72 = vector.broadcast %58 : f32 to vector<256x128xf32>
    %73 = arith.mulf %72, %71 : vector<256x128xf32>
    %cst_35 = arith.constant 2.560000e+02 : f32
    %74 = vector.broadcast %cst_35 : f32 to vector<256x128xf32>
    %75 = arith.addf %73, %74 : vector<256x128xf32>
    %76 = tpu.reciprocal %75 {approx = true} : vector<256x128xf32> -> vector<256x128xf32>
    %77 = arith.mulf %75, %76 : vector<256x128xf32>
    %cst_36 = arith.constant 2.000000e+00 : f32
    %78 = vector.broadcast %cst_36 : f32 to vector<256x128xf32>
    %79 = arith.subf %78, %77 : vector<256x128xf32>
    %80 = arith.mulf %76, %79 : vector<256x128xf32>
    %81 = arith.mulf %68, %80 : vector<256x128xf32>
    %cst_37 = arith.constant dense<0.000000e+00> : vector<256x64xf32>
    %82 = tpu.matmul %81, %35, %cst_37 {dimension_numbers = #tpu.dot_dimension_numbers<[1], [0], [0], [1], [0, 0, 1, 1], [], []>} : vector<256x128xf32>, vector<128x64xf32>, vector<256x64xf32> -> vector<256x64xf32>
    %cst_38 = arith.constant 5.000000e-01 : f32
    %83 = vector.broadcast %cst_38 : f32 to vector<256x64xf32>
    %84 = arith.mulf %83, %82 : vector<256x64xf32>
    %cst_39 = arith.constant 5.000000e-01 : f32
    %85 = vector.broadcast %cst_39 : f32 to vector<256x64xf32>
    %86 = arith.mulf %85, %33 : vector<256x64xf32>
    %87 = arith.addf %84, %86 : vector<256x64xf32>
    %c1 = arith.constant 1 : index
    %c0_40 = arith.constant 0 : index
    %c0_41 = arith.constant 0 : index
    %88 = vector.load %arg4[%c1, %c0_40, %c0_41] : memref<3x1x64xf32, #tpu.memory_space<vmem>>, vector<1x1x64xf32>
    %89 = vector.shape_cast %88 : vector<1x1x64xf32> to vector<1x64xf32>
    %c1_42 = arith.constant 1 : index
    %c0_43 = arith.constant 0 : index
    %c0_44 = arith.constant 0 : index
    %90 = vector.load %arg5[%c1_42, %c0_43, %c0_44] : memref<3x1x64xf32, #tpu.memory_space<vmem>>, vector<1x1x64xf32>
    %91 = vector.shape_cast %90 : vector<1x1x64xf32> to vector<1x64xf32>
    %cst_45 = arith.constant dense<0.000000e+00> : vector<256xf32>
    %92 = vector.multi_reduction <add>, %87, %cst_45 [1] : vector<256x64xf32> to vector<256xf32>
    %93 = vector.shape_cast %92 : vector<256xf32> to vector<256x1xf32>
    %cst_46 = arith.constant 6.400000e+01 : f32
    %94 = vector.broadcast %cst_46 : f32 to vector<256x1xf32>
    %95 = arith.divf %93, %94 : vector<256x1xf32>
    %96 = vector.broadcast %95 : vector<256x1xf32> to vector<256x64xf32>
    %97 = arith.subf %87, %96 : vector<256x64xf32>
    %98 = arith.mulf %97, %97 : vector<256x64xf32>
    %cst_47 = arith.constant dense<0.000000e+00> : vector<256xf32>
    %99 = vector.multi_reduction <add>, %98, %cst_47 [1] : vector<256x64xf32> to vector<256xf32>
    %100 = vector.shape_cast %99 : vector<256xf32> to vector<256x1xf32>
    %cst_48 = arith.constant 6.400000e+01 : f32
    %101 = vector.broadcast %cst_48 : f32 to vector<256x1xf32>
    %102 = arith.divf %100, %101 : vector<256x1xf32>
    %103 = vector.broadcast %95 : vector<256x1xf32> to vector<256x64xf32>
    %104 = arith.subf %87, %103 : vector<256x64xf32>
    %cst_49 = arith.constant 9.99999974E-6 : f32
    %105 = vector.broadcast %cst_49 : f32 to vector<256x1xf32>
    %106 = arith.addf %102, %105 : vector<256x1xf32>
    %107 = math.rsqrt %106 : vector<256x1xf32>
    %108 = vector.broadcast %107 : vector<256x1xf32> to vector<256x64xf32>
    %109 = arith.mulf %104, %108 : vector<256x64xf32>
    %110 = vector.broadcast %89 : vector<1x64xf32> to vector<256x64xf32>
    %111 = arith.mulf %109, %110 : vector<256x64xf32>
    %112 = vector.broadcast %91 : vector<1x64xf32> to vector<256x64xf32>
    %113 = arith.addf %111, %112 : vector<256x64xf32>
    %cst_50 = arith.constant 0.000000e+00 : f32
    %114 = vector.broadcast %cst_50 : f32 to vector<256x64xf32>
    %115 = arith.maximumf %113, %114 : vector<256x64xf32>
    %c1_51 = arith.constant 1 : index
    %c0_52 = arith.constant 0 : index
    %c0_53 = arith.constant 0 : index
    %116 = vector.load %arg6[%c1_51, %c0_52, %c0_53] : memref<2x64x384xf32, #tpu.memory_space<vmem>>, vector<1x64x384xf32>
    %117 = vector.shape_cast %116 : vector<1x64x384xf32> to vector<64x384xf32>
    %cst_54 = arith.constant dense<0.000000e+00> : vector<256x384xf32>
    %118 = tpu.matmul %115, %117, %cst_54 {dimension_numbers = #tpu.dot_dimension_numbers<[1], [0], [0], [1], [0, 0, 1, 1], [], []>} : vector<256x64xf32>, vector<64x384xf32>, vector<256x384xf32> -> vector<256x384xf32>
    %c1_55 = arith.constant 1 : index
    %c0_56 = arith.constant 0 : index
    %c0_57 = arith.constant 0 : index
    %119 = vector.load %arg7[%c1_55, %c0_56, %c0_57] : memref<2x1x384xf32, #tpu.memory_space<vmem>>, vector<1x1x384xf32>
    %120 = vector.shape_cast %119 : vector<1x1x384xf32> to vector<1x384xf32>
    %121 = vector.broadcast %120 : vector<1x384xf32> to vector<256x384xf32>
    %122 = arith.addf %118, %121 : vector<256x384xf32>
    %123 = vector.extract_strided_slice %122 {offsets = [0, 0], sizes = [256, 128], strides = [1, 1]} : vector<256x384xf32> to vector<256x128xf32>
    %124 = vector.extract_strided_slice %122 {offsets = [0, 128], sizes = [256, 128], strides = [1, 1]} : vector<256x384xf32> to vector<256x128xf32>
    %125 = vector.extract_strided_slice %122 {offsets = [0, 256], sizes = [256, 128], strides = [1, 1]} : vector<256x384xf32> to vector<256x128xf32>
    %126 = arith.mulf %123, %123 : vector<256x128xf32>
    %127 = vector.shape_cast %126 : vector<256x128xf32> to vector<1x256x128xf32>
    %cst_58 = arith.constant dense<0.000000e+00> : vector<1xf32>
    %128 = vector.multi_reduction <add>, %127, %cst_58 [1, 2] : vector<1x256x128xf32> to vector<1xf32>
    %129 = vector.shape_cast %128 : vector<1xf32> to vector<1x1x1xf32>
    %130 = vector.extract %129[0, 0, 0] : f32 from vector<1x1x1xf32>
    %131 = math.rsqrt %130 : f32
    %132 = arith.mulf %124, %124 : vector<256x128xf32>
    %133 = vector.shape_cast %132 : vector<256x128xf32> to vector<1x256x128xf32>
    %cst_59 = arith.constant dense<0.000000e+00> : vector<1xf32>
    %134 = vector.multi_reduction <add>, %133, %cst_59 [1, 2] : vector<1x256x128xf32> to vector<1xf32>
    %135 = vector.shape_cast %134 : vector<1xf32> to vector<1x1x1xf32>
    %136 = vector.extract %135[0, 0, 0] : f32 from vector<1x1x1xf32>
    %137 = math.rsqrt %136 : f32
    %138 = arith.mulf %131, %137 : f32
    %cst_60 = arith.constant dense<0.000000e+00> : vector<128x128xf32>
    %139 = tpu.matmul %124, %125, %cst_60 {dimension_numbers = #tpu.dot_dimension_numbers<[0], [0], [1], [1], [0, 1, 1, 1], [], []>} : vector<256x128xf32>, vector<256x128xf32>, vector<128x128xf32> -> vector<128x128xf32>
    %cst_61 = arith.constant dense<0.000000e+00> : vector<128xf32>
    %140 = vector.multi_reduction <add>, %124, %cst_61 [0] : vector<256x128xf32> to vector<128xf32>
    %141 = vector.shape_cast %140 : vector<128xf32> to vector<1x128xf32>
    %142 = arith.mulf %139, %34 : vector<128x128xf32>
    %cst_62 = arith.constant dense<0.000000e+00> : vector<256x128xf32>
    %143 = tpu.matmul %123, %142, %cst_62 {dimension_numbers = #tpu.dot_dimension_numbers<[1], [0], [0], [1], [0, 0, 1, 1], [], []>} : vector<256x128xf32>, vector<128x128xf32>, vector<256x128xf32> -> vector<256x128xf32>
    %144 = vector.broadcast %138 : f32 to vector<256x128xf32>
    %145 = arith.mulf %144, %143 : vector<256x128xf32>
    %cst_63 = arith.constant 2.560000e+02 : f32
    %146 = vector.broadcast %cst_63 : f32 to vector<256x128xf32>
    %147 = arith.mulf %146, %125 : vector<256x128xf32>
    %148 = arith.addf %145, %147 : vector<256x128xf32>
    %149 = vector.broadcast %141 : vector<1x128xf32> to vector<256x128xf32>
    %150 = arith.mulf %123, %149 : vector<256x128xf32>
    %cst_64 = arith.constant dense<0.000000e+00> : vector<256x128xf32>
    %151 = tpu.matmul %150, %34, %cst_64 {dimension_numbers = #tpu.dot_dimension_numbers<[1], [0], [0], [1], [0, 0, 1, 1], [], []>} : vector<256x128xf32>, vector<128x128xf32>, vector<256x128xf32> -> vector<256x128xf32>
    %152 = vector.broadcast %138 : f32 to vector<256x128xf32>
    %153 = arith.mulf %152, %151 : vector<256x128xf32>
    %cst_65 = arith.constant 2.560000e+02 : f32
    %154 = vector.broadcast %cst_65 : f32 to vector<256x128xf32>
    %155 = arith.addf %153, %154 : vector<256x128xf32>
    %156 = tpu.reciprocal %155 {approx = true} : vector<256x128xf32> -> vector<256x128xf32>
    %157 = arith.mulf %155, %156 : vector<256x128xf32>
    %cst_66 = arith.constant 2.000000e+00 : f32
    %158 = vector.broadcast %cst_66 : f32 to vector<256x128xf32>
    %159 = arith.subf %158, %157 : vector<256x128xf32>
    %160 = arith.mulf %156, %159 : vector<256x128xf32>
    %161 = arith.mulf %148, %160 : vector<256x128xf32>
    %cst_67 = arith.constant dense<0.000000e+00> : vector<256x64xf32>
    %162 = tpu.matmul %161, %35, %cst_67 {dimension_numbers = #tpu.dot_dimension_numbers<[1], [0], [0], [1], [0, 0, 1, 1], [], []>} : vector<256x128xf32>, vector<128x64xf32>, vector<256x64xf32> -> vector<256x64xf32>
    %cst_68 = arith.constant 5.000000e-01 : f32
    %163 = vector.broadcast %cst_68 : f32 to vector<256x64xf32>
    %164 = arith.mulf %163, %162 : vector<256x64xf32>
    %cst_69 = arith.constant 5.000000e-01 : f32
    %165 = vector.broadcast %cst_69 : f32 to vector<256x64xf32>
    %166 = arith.mulf %165, %115 : vector<256x64xf32>
    %167 = arith.addf %164, %166 : vector<256x64xf32>
    %c2 = arith.constant 2 : index
    %c0_70 = arith.constant 0 : index
    %c0_71 = arith.constant 0 : index
    %168 = vector.load %arg4[%c2, %c0_70, %c0_71] : memref<3x1x64xf32, #tpu.memory_space<vmem>>, vector<1x1x64xf32>
    %169 = vector.shape_cast %168 : vector<1x1x64xf32> to vector<1x64xf32>
    %c2_72 = arith.constant 2 : index
    %c0_73 = arith.constant 0 : index
    %c0_74 = arith.constant 0 : index
    %170 = vector.load %arg5[%c2_72, %c0_73, %c0_74] : memref<3x1x64xf32, #tpu.memory_space<vmem>>, vector<1x1x64xf32>
    %171 = vector.shape_cast %170 : vector<1x1x64xf32> to vector<1x64xf32>
    %cst_75 = arith.constant dense<0.000000e+00> : vector<256xf32>
    %172 = vector.multi_reduction <add>, %167, %cst_75 [1] : vector<256x64xf32> to vector<256xf32>
    %173 = vector.shape_cast %172 : vector<256xf32> to vector<256x1xf32>
    %cst_76 = arith.constant 6.400000e+01 : f32
    %174 = vector.broadcast %cst_76 : f32 to vector<256x1xf32>
    %175 = arith.divf %173, %174 : vector<256x1xf32>
    %176 = vector.broadcast %175 : vector<256x1xf32> to vector<256x64xf32>
    %177 = arith.subf %167, %176 : vector<256x64xf32>
    %178 = arith.mulf %177, %177 : vector<256x64xf32>
    %cst_77 = arith.constant dense<0.000000e+00> : vector<256xf32>
    %179 = vector.multi_reduction <add>, %178, %cst_77 [1] : vector<256x64xf32> to vector<256xf32>
    %180 = vector.shape_cast %179 : vector<256xf32> to vector<256x1xf32>
    %cst_78 = arith.constant 6.400000e+01 : f32
    %181 = vector.broadcast %cst_78 : f32 to vector<256x1xf32>
    %182 = arith.divf %180, %181 : vector<256x1xf32>
    %183 = vector.broadcast %175 : vector<256x1xf32> to vector<256x64xf32>
    %184 = arith.subf %167, %183 : vector<256x64xf32>
    %cst_79 = arith.constant 9.99999974E-6 : f32
    %185 = vector.broadcast %cst_79 : f32 to vector<256x1xf32>
    %186 = arith.addf %182, %185 : vector<256x1xf32>
    %187 = math.rsqrt %186 : vector<256x1xf32>
    %188 = vector.broadcast %187 : vector<256x1xf32> to vector<256x64xf32>
    %189 = arith.mulf %184, %188 : vector<256x64xf32>
    %190 = vector.broadcast %169 : vector<1x64xf32> to vector<256x64xf32>
    %191 = arith.mulf %189, %190 : vector<256x64xf32>
    %192 = vector.broadcast %171 : vector<1x64xf32> to vector<256x64xf32>
    %193 = arith.addf %191, %192 : vector<256x64xf32>
    %cst_80 = arith.constant 0.000000e+00 : f32
    %194 = vector.broadcast %cst_80 : f32 to vector<256x64xf32>
    %195 = arith.maximumf %193, %194 : vector<256x64xf32>
    %c0_81 = arith.constant 0 : index
    %c0_82 = arith.constant 0 : index
    %196 = vector.load %arg10[%c0_81, %c0_82] : memref<256x64xf32, #tpu.memory_space<vmem>>, vector<256x64xf32>
    tpu.vector_store %arg10[%c0_81, %c0_82], %195 {strides = array<i32>} : memref<256x64xf32, #tpu.memory_space<vmem>>, vector<256x64xf32>,
    return
  }
  func.func @transform_0(%arg0: i32) -> (i32, i32) {
    %c0_i32 = arith.constant 0 : i32
    %c0_i32_0 = arith.constant 0 : i32
    %c0_i32_1 = arith.constant 0 : i32
    return %c0_i32, %c0_i32_0 : i32, i32
  }
  func.func @transform_1(%arg0: i32) -> (i32, i32) {
    %c0_i32 = arith.constant 0 : i32
    %c0_i32_0 = arith.constant 0 : i32
    %c0_i32_1 = arith.constant 0 : i32
    return %c0_i32, %c0_i32_0 : i32, i32
  }
  func.func @transform_2(%arg0: i32) -> (i32, i32) {
    %c0_i32 = arith.constant 0 : i32
    %c0_i32_0 = arith.constant 0 : i32
    %c0_i32_1 = arith.constant 0 : i32
    return %c0_i32, %c0_i32_0 : i32, i32
  }
  func.func @transform_3(%arg0: i32) -> (i32, i32, i32) {
    %c0_i32 = arith.constant 0 : i32
    %c0_i32_0 = arith.constant 0 : i32
    %c0_i32_1 = arith.constant 0 : i32
    %c0_i32_2 = arith.constant 0 : i32
    return %c0_i32, %c0_i32_0, %c0_i32_1 : i32, i32, i32
  }
  func.func @transform_4(%arg0: i32) -> (i32, i32, i32) {
    %c0_i32 = arith.constant 0 : i32
    %c0_i32_0 = arith.constant 0 : i32
    %c0_i32_1 = arith.constant 0 : i32
    %c0_i32_2 = arith.constant 0 : i32
    return %c0_i32, %c0_i32_0, %c0_i32_1 : i32, i32, i32
  }
  func.func @transform_5(%arg0: i32) -> (i32, i32, i32) {
    %c0_i32 = arith.constant 0 : i32
    %c0_i32_0 = arith.constant 0 : i32
    %c0_i32_1 = arith.constant 0 : i32
    %c0_i32_2 = arith.constant 0 : i32
    return %c0_i32, %c0_i32_0, %c0_i32_1 : i32, i32, i32
  }
  func.func @transform_6(%arg0: i32) -> (i32, i32, i32) {
    %c0_i32 = arith.constant 0 : i32
    %c0_i32_0 = arith.constant 0 : i32
    %c0_i32_1 = arith.constant 0 : i32
    %c0_i32_2 = arith.constant 0 : i32
    return %c0_i32, %c0_i32_0, %c0_i32_1 : i32, i32, i32
  }
  func.func @transform_7(%arg0: i32) -> (i32, i32) {
    %c0_i32 = arith.constant 0 : i32
    %c0_i32_0 = arith.constant 0 : i32
    %c0_i32_1 = arith.constant 0 : i32
    return %c0_i32, %c0_i32_0 : i32, i32
  }
  func.func @transform_8(%arg0: i32) -> (i32, i32) {
    %c0_i32 = arith.constant 0 : i32
    %c0_i32_0 = arith.constant 0 : i32
    %c0_i32_1 = arith.constant 0 : i32
    return %c0_i32, %c0_i32_0 : i32, i32
  }
  func.func @transform_9(%arg0: i32) -> (i32, i32) {
    %c0_i32 = arith.constant 0 : i32
    %c0_i32_0 = arith.constant 0 : i32
    %c0_i32_1 = arith.constant 0 : i32
    return %c0_i32, %c0_i32_0 : i32, i32
  }
}

</mosaic_0001>

<llo_original>
// kernel: _forward_resident.1
$region0: #{_forward_resident.1}
  #allocation0 [shape = 'u32[]', space=smem, size = 0x4, offset = 0x4, fixed_abs, tag = 'smem constant byte address 0x4 - core index']
  #allocation1 [shape = 'u32[72,128]{1,0:T(1,128)}', space=vmem, size = 0x9000, scoped, tag = 'internal scratch']
  %s0 = inlined_call_operand.vmem [shape: f32[256,32], index: 0, kind: input, shape index: {}]
  %s1 = inlined_call_operand.vmem [shape: f32[32,64], index: 1, kind: input, shape index: {}]
  %s2 = inlined_call_operand.vmem [shape: f32[1,64], index: 2, kind: input, shape index: {}]
  %s3 = inlined_call_operand.vmem [shape: f32[3,1,64], index: 3, kind: input, shape index: {}]
  %s4 = inlined_call_operand.vmem [shape: f32[3,1,64], index: 4, kind: input, shape index: {}]
  %s5 = inlined_call_operand.hbm [shape: f32[2,64,384], index: 5, kind: input, shape index: {}]
  %s6 = inlined_call_operand.vmem [shape: f32[2,1,384], index: 6, kind: input, shape index: {}]
  %s7 = inlined_call_operand.vmem [shape: f32[128,128], index: 7, kind: input, shape index: {}]
  %s8 = inlined_call_operand.vmem [shape: f32[128,64], index: 8, kind: input, shape index: {}]
  %s9 = inlined_call_operand.vmem [shape: f32[256,64], index: 9, kind: output, shape index: {}]
  %s10 = sld [smem:[#allocation0]]
  $region50: #{_forward_resident.1} parent=0
    _
  %s12 = ssub.s32 1, %s10
  %s13 = scalar_select 0, %s12, %s10
  $region1: #{_forward_resident.1} parent=0
    #allocation2 [shape = 'u8[196608]{0}', space=vmem, size = 0x30000, scoped, tag = 'input window, operand 5, single buffered']
    #allocation3 [shape = 's32[1]{0}', space=sflag, size = 0x4, scoped, tag = 'scoped memory for _forward_resident.1']
    %14 = vsyncpa [#allocation3], 0
    // Predicated region
    $region2: #{_forward_resident.1} parent=1 // pred_check
      _
    $region3: #{_forward_resident.1} parent=1 // pred_check_branch
      %16 = sbr.rel (0) target = $region5
    $region4: #{_forward_resident.1} parent=1 // pred_region
      _
    $region5: #{_forward_resident.1} parent=1 // pred_fallthru
      _
    // Predicated region
    $region6: #{_forward_resident.1} parent=1 // pred_check
      _
    $region7: #{_forward_resident.1} parent=1 // pred_check_branch
      %18 = sbr.rel (0) target = $region9
    $region8: #{_forward_resident.1} parent=1 // pred_region
      _
    $region9: #{_forward_resident.1} parent=1 // pred_fallthru
      _
    // Predicated region
    $region10: #{_forward_resident.1} parent=1 // pred_check
      _
    $region11: #{_forward_resident.1} parent=1 // pred_check_branch
      %20 = sbr.rel (0) target = $region13
    $region12: #{_forward_resident.1} parent=1 // pred_region
      _
    $region13: #{_forward_resident.1} parent=1 // pred_fallthru
      _
    // Predicated region
    $region14: #{_forward_resident.1} parent=1 // pred_check
      _
    $region15: #{_forward_resident.1} parent=1 // pred_check_branch
      %22 = sbr.rel (0) target = $region17
    $region16: #{_forward_resident.1} parent=1 // pred_region
      _
    $region17: #{_forward_resident.1} parent=1 // pred_fallthru
      _
    // Predicated region
    $region18: #{_forward_resident.1} parent=1 // pred_check
      _
    $region19: #{_forward_resident.1} parent=1 // pred_check_branch
      %24 = sbr.rel (0) target = $region21
    $region20: #{_forward_resident.1} parent=1 // pred_region
      _
    $region21: #{_forward_resident.1} parent=1 // pred_fallthru
      _
    // Predicated region
    $region22: #{_forward_resident.1} parent=1 // pred_check
      _
    $region23: #{_forward_resident.1} parent=1 // pred_check_branch
      %26 = sbr.rel (0) target = $region25
    $region24: #{_forward_resident.1} parent=1 // pred_region
      %28 = vsyncadd [#allocation3], 0
      %s29 = sshll.u32 %s5, 4
      %s30 = int_to_ptr.hbm [resolvable:$true] %s29
      %s31 = sshll.u32 [#allocation2], 4
      %s32 = int_to_ptr.vmem [resolvable:$true] %s31
      %37 = dma.hbm_to_vmem [thread:$0]  %s30, 6144, %s32, [#allocation3], 384, 384, 24
    $region25: #{_forward_resident.1} parent=1 // pred_fallthru
      _
    // Predicated region
    $region26: #{_forward_resident.1} parent=1 // pred_check
      _
    $region27: #{_forward_resident.1} parent=1 // pred_check_branch
      %39 = sbr.rel (0) target = $region29
    $region28: #{_forward_resident.1} parent=1 // pred_region
      _
    $region29: #{_forward_resident.1} parent=1 // pred_fallthru
      _
    // Predicated region
    $region30: #{_forward_resident.1} parent=1 // pred_check
      _
    $region31: #{_forward_resident.1} parent=1 // pred_check_branch
      %41 = sbr.rel (0) target = $region33
    $region32: #{_forward_resident.1} parent=1 // pred_region
      _
    $region33: #{_forward_resident.1} parent=1 // pred_fallthru
      _
    // Predicated region
    $region34: #{_forward_resident.1} parent=1 // pred_check
      _
    $region35: #{_forward_resident.1} parent=1 // pred_check_branch
      %43 = sbr.rel (0) target = $region37
    $region36: #{_forward_resident.1} parent=1 // pred_region
      _
    $region37: #{_forward_resident.1} parent=1 // pred_fallthru
      _
    // Predicated region
    $region38: #{_forward_resident.1} parent=1 // pred_check
      _
    $region39: #{_forward_resident.1} parent=1 // pred_check_branch
      %45 = sbr.rel (0) target = $region41
    $region40: #{_forward_resident.1} parent=1 // pred_region
      %47 = dma.done [#allocation3], 6144
    $region41: #{_forward_resident.1} parent=1 // pred_fallthru
      _
    %v48 = vld [vmem:[%s0] sm:$0xff]
    %v49 = vld [vmem:[%s0 + $0x8] sm:$0xff]
    %v50 = vld [vmem:[%s0 + $0x10] sm:$0xff]
    %v51 = vld [vmem:[%s0 + $0x18] sm:$0xff]
    %v52 = vld [vmem:[%s0 + $0x20] sm:$0xff]
    %v53 = vld [vmem:[%s0 + $0x28] sm:$0xff]
    %v54 = vld [vmem:[%s0 + $0x30] sm:$0xff]
    %v55 = vld [vmem:[%s0 + $0x38] sm:$0xff]
    %v56 = vld [vmem:[%s0 + $0x40] sm:$0xff]
    %v57 = vld [vmem:[%s0 + $0x48] sm:$0xff]
    %v58 = vld [vmem:[%s0 + $0x50] sm:$0xff]
    %v59 = vld [vmem:[%s0 + $0x58] sm:$0xff]
    %v60 = vld [vmem:[%s0 + $0x60] sm:$0xff]
    %v61 = vld [vmem:[%s0 + $0x68] sm:$0xff]
    %v62 = vld [vmem:[%s0 + $0x70] sm:$0xff]
    %v63 = vld [vmem:[%s0 + $0x78] sm:$0xff]
    %v64 = vld [vmem:[%s0 + $0x80] sm:$0xff]
    %v65 = vld [vmem:[%s0 + $0x88] sm:$0xff]
    %v66 = vld [vmem:[%s0 + $0x90] sm:$0xff]
    %v67 = vld [vmem:[%s0 + $0x98] sm:$0xff]
    %v68 = vld [vmem:[%s0 + $0xa0] sm:$0xff]
    %v69 = vld [vmem:[%s0 + $0xa8] sm:$0xff]
    %v70 = vld [vmem:[%s0 + $0xb0] sm:$0xff]
    %v71 = vld [vmem:[%s0 + $0xb8] sm:$0xff]
    %v72 = vld [vmem:[%s0 + $0xc0] sm:$0xff]
    %v73 = vld [vmem:[%s0 + $0xc8] sm:$0xff]
    %v74 = vld [vmem:[%s0 + $0xd0] sm:$0xff]
    %v75 = vld [vmem:[%s0 + $0xd8] sm:$0xff]
    %v76 = vld [vmem:[%s0 + $0xe0] sm:$0xff]
    %v77 = vld [vmem:[%s0 + $0xe8] sm:$0xff]
    %v78 = vld [vmem:[%s0 + $0xf0] sm:$0xff]
    %v79 = vld [vmem:[%s0 + $0xf8] sm:$0xff]
    %v80 = vld [vmem:[%s1] sm:$0xff]
    %v81 = vld [vmem:[%s1 + $0x8] sm:$0xff]
    %v82 = vld [vmem:[%s1 + $0x10] sm:$0xff]
    %v83 = vld [vmem:[%s1 + $0x18] sm:$0xff]
    %v84 = vld [vmem:[%s2] sm:$0x1]
    %v86 = vperm.slane %v84, 0
    %vm88 = vcmask 261120
    %v90 = vsel %vm88, %v48, 0
    %v93 = vsel %vm88, %v49, 0
    %v96 = vsel %vm88, %v50, 0
    %v99 = vsel %vm88, %v51, 0
    %v102 = vsel %vm88, %v52, 0
    %v105 = vsel %vm88, %v53, 0
    %v108 = vsel %vm88, %v54, 0
    %v111 = vsel %vm88, %v55, 0
    %v114 = vsel %vm88, %v56, 0
    %v117 = vsel %vm88, %v57, 0
    %v120 = vsel %vm88, %v58, 0
    %v123 = vsel %vm88, %v59, 0
    %v126 = vsel %vm88, %v60, 0
    %v129 = vsel %vm88, %v61, 0
    %v132 = vsel %vm88, %v62, 0
    %v135 = vsel %vm88, %v63, 0
    %v138 = vsel %vm88, %v64, 0
    %v141 = vsel %vm88, %v65, 0
    %v144 = vsel %vm88, %v66, 0
    %v147 = vsel %vm88, %v67, 0
    %v150 = vsel %vm88, %v68, 0
    %v153 = vsel %vm88, %v69, 0
    %v156 = vsel %vm88, %v70, 0
    %v159 = vsel %vm88, %v71, 0
    %v162 = vsel %vm88, %v72, 0
    %v165 = vsel %vm88, %v73, 0
    %v168 = vsel %vm88, %v74, 0
    %v171 = vsel %vm88, %v75, 0
    %v174 = vsel %vm88, %v76, 0
    %v177 = vsel %vm88, %v77, 0
    %v180 = vsel %vm88, %v78, 0
    %v183 = vsel %vm88, %v79, 0
    %185 = vmatpush.msra.mxu0 0.0
    %186 = vmatpush.msra.mxu0 0.0
    %187 = vmatpush.msra.mxu0 0.0
    %188 = vmatpush.msra.mxu0 0.0
    %189 = vmatpush.msra.mxu0 0.0
    %190 = vmatpush.msra.mxu0 0.0
    %191 = vmatpush.msra.mxu0 0.0
    %192 = vmatpush.msra.mxu0 0.0
    %193 = vmatpush.msra.mxu0 0.0
    %194 = vmatpush.msra.mxu0 0.0
    %195 = vmatpush.msra.mxu0 0.0
    %196 = vmatpush.msra.mxu0 0.0
    %197 = vmatpush.msra.mxu0 %v83
    %198 = vmatpush.msra.mxu0 %v82
    %199 = vmatpush.msra.mxu0 %v81
    %200 = vmatpush.msra.mxu0 %v80
    %201 = vmatmul.f32.gmra.mxu0 %v90
    %v202 = vpop.f32.mrf.mxu0
    %v203 = vadd.f32 %v86, %v202
    %204 = vmatmul.f32.gmra.mxu0 %v93
    %v205 = vpop.f32.mrf.mxu0
    %v206 = vadd.f32 %v86, %v205
    %207 = vmatmul.f32.gmra.mxu0 %v96
    %v208 = vpop.f32.mrf.mxu0
    %v209 = vadd.f32 %v86, %v208
    %210 = vmatmul.f32.gmra.mxu0 %v99
    %v211 = vpop.f32.mrf.mxu0
    %v212 = vadd.f32 %v86, %v211
    %213 = vmatmul.f32.gmra.mxu0 %v102
    %v214 = vpop.f32.mrf.mxu0
    %v215 = vadd.f32 %v86, %v214
    %216 = vmatmul.f32.gmra.mxu0 %v105
    %v217 = vpop.f32.mrf.mxu0
    %v218 = vadd.f32 %v86, %v217
    %219 = vmatmul.f32.gmra.mxu0 %v108
    %v220 = vpop.f32.mrf.mxu0
    %v221 = vadd.f32 %v86, %v220
    %222 = vmatmul.f32.gmra.mxu0 %v111
    %v223 = vpop.f32.mrf.mxu0
    %v224 = vadd.f32 %v86, %v223
    %225 = vmatmul.f32.gmra.mxu0 %v114
    %v226 = vpop.f32.mrf.mxu0
    %v227 = vadd.f32 %v86, %v226
    %228 = vmatmul.f32.gmra.mxu0 %v117
    %v229 = vpop.f32.mrf.mxu0
    %v230 = vadd.f32 %v86, %v229
    %231 = vmatmul.f32.gmra.mxu0 %v120
    %v232 = vpop.f32.mrf.mxu0
    %v233 = vadd.f32 %v86, %v232
    %234 = vmatmul.f32.gmra.mxu0 %v123
    %v235 = vpop.f32.mrf.mxu0
    %v236 = vadd.f32 %v86, %v235
    %237 = vmatmul.f32.gmra.mxu0 %v126
    %v238 = vpop.f32.mrf.mxu0
    %v239 = vadd.f32 %v86, %v238
    %240 = vmatmul.f32.gmra.mxu0 %v129
    %v241 = vpop.f32.mrf.mxu0
    %v242 = vadd.f32 %v86, %v241
    %243 = vmatmul.f32.gmra.mxu0 %v132
    %v244 = vpop.f32.mrf.mxu0
    %v245 = vadd.f32 %v86, %v244
    %246 = vmatmul.f32.gmra.mxu0 %v135
    %v247 = vpop.f32.mrf.mxu0
    %v248 = vadd.f32 %v86, %v247
    %249 = vmatmul.f32.gmra.mxu0 %v138
    %v250 = vpop.f32.mrf.mxu0
    %v251 = vadd.f32 %v86, %v250
    %252 = vmatmul.f32.gmra.mxu0 %v141
    %v253 = vpop.f32.mrf.mxu0
    %v254 = vadd.f32 %v86, %v253
    %255 = vmatmul.f32.gmra.mxu0 %v144
    %v256 = vpop.f32.mrf.mxu0
    %v257 = vadd.f32 %v86, %v256
    %258 = vmatmul.f32.gmra.mxu0 %v147
    %v259 = vpop.f32.mrf.mxu0
    %v260 = vadd.f32 %v86, %v259
    %261 = vmatmul.f32.gmra.mxu0 %v150
    %v262 = vpop.f32.mrf.mxu0
    %v263 = vadd.f32 %v86, %v262
    %264 = vmatmul.f32.gmra.mxu0 %v153
    %v265 = vpop.f32.mrf.mxu0
    %v266 = vadd.f32 %v86, %v265
    %267 = vmatmul.f32.gmra.mxu0 %v156
    %v268 = vpop.f32.mrf.mxu0
    %v269 = vadd.f32 %v86, %v268
    %270 = vmatmul.f32.gmra.mxu0 %v159
    %v271 = vpop.f32.mrf.mxu0
    %v272 = vadd.f32 %v86, %v271
    %273 = vmatmul.f32.gmra.mxu0 %v162
    %v274 = vpop.f32.mrf.mxu0
    %v275 = vadd.f32 %v86, %v274
    %276 = vmatmul.f32.gmra.mxu0 %v165
    %v277 = vpop.f32.mrf.mxu0
    %v278 = vadd.f32 %v86, %v277
    %279 = vmatmul.f32.gmra.mxu0 %v168
    %v280 = vpop.f32.mrf.mxu0
    %v281 = vadd.f32 %v86, %v280
    %282 = vmatmul.f32.gmra.mxu0 %v171
    %v283 = vpop.f32.mrf.mxu0
    %v284 = vadd.f32 %v86, %v283
    %285 = vmatmul.f32.gmra.mxu0 %v174
    %v286 = vpop.f32.mrf.mxu0
    %v287 = vadd.f32 %v86, %v286
    %288 = vmatmul.f32.gmra.mxu0 %v177
    %v289 = vpop.f32.mrf.mxu0
    %v290 = vadd.f32 %v86, %v289
    %291 = vmatmul.f32.gmra.mxu0 %v180
    %v292 = vpop.f32.mrf.mxu0
    %v293 = vadd.f32 %v86, %v292
    %294 = vmatmul.f32.gmra.mxu0 %v183
    %v295 = vpop.f32.mrf.mxu0
    %v296 = vadd.f32 %v86, %v295
    %297 = vdwg.mxu0
    %v298 = vld [vmem:[%s3] sm:$0x1]
    %v299 = vld [vmem:[%s4] sm:$0x1]
    %vm300 = vcmask 523264
    %v301 = vsel %vm300, %v203, 0.0
    %302 = vadd.xlane.f32.xlu0 %v301
    %v303 = vpop.xlane.xlu0 %302
    %v304 = vsel %vm300, %v206, 0.0
    %305 = vadd.xlane.f32.xlu0 %v304
    %v306 = vpop.xlane.xlu0 %305
    %v307 = vsel %vm300, %v209, 0.0
    %308 = vadd.xlane.f32.xlu0 %v307
    %v309 = vpop.xlane.xlu0 %308
    %v310 = vsel %vm300, %v212, 0.0
    %311 = vadd.xlane.f32.xlu0 %v310
    %v312 = vpop.xlane.xlu0 %311
    %v313 = vsel %vm300, %v215, 0.0
    %314 = vadd.xlane.f32.xlu0 %v313
    %v315 = vpop.xlane.xlu0 %314
    %v316 = vsel %vm300, %v218, 0.0
    %317 = vadd.xlane.f32.xlu0 %v316
    %v318 = vpop.xlane.xlu0 %317
    %v319 = vsel %vm300, %v221, 0.0
    %320 = vadd.xlane.f32.xlu0 %v319
    %v321 = vpop.xlane.xlu0 %320
    %v322 = vsel %vm300, %v224, 0.0
    %323 = vadd.xlane.f32.xlu0 %v322
    %v324 = vpop.xlane.xlu0 %323
    %v325 = vsel %vm300, %v227, 0.0
    %326 = vadd.xlane.f32.xlu0 %v325
    %v327 = vpop.xlane.xlu0 %326
    %v328 = vsel %vm300, %v230, 0.0
    %329 = vadd.xlane.f32.xlu0 %v328
    %v330 = vpop.xlane.xlu0 %329
    %v331 = vsel %vm300, %v233, 0.0
    %332 = vadd.xlane.f32.xlu0 %v331
    %v333 = vpop.xlane.xlu0 %332
    %v334 = vsel %vm300, %v236, 0.0
    %335 = vadd.xlane.f32.xlu0 %v334
    %v336 = vpop.xlane.xlu0 %335
    %v337 = vsel %vm300, %v239, 0.0
    %338 = vadd.xlane.f32.xlu0 %v337
    %v339 = vpop.xlane.xlu0 %338
    %v340 = vsel %vm300, %v242, 0.0
    %341 = vadd.xlane.f32.xlu0 %v340
    %v342 = vpop.xlane.xlu0 %341
    %v343 = vsel %vm300, %v245, 0.0
    %344 = vadd.xlane.f32.xlu0 %v343
    %v345 = vpop.xlane.xlu0 %344
    %v346 = vsel %vm300, %v248, 0.0
    %347 = vadd.xlane.f32.xlu0 %v346
    %v348 = vpop.xlane.xlu0 %347
    %v349 = vsel %vm300, %v251, 0.0
    %350 = vadd.xlane.f32.xlu0 %v349
    %v351 = vpop.xlane.xlu0 %350
    %v352 = vsel %vm300, %v254, 0.0
    %353 = vadd.xlane.f32.xlu0 %v352
    %v354 = vpop.xlane.xlu0 %353
    %v355 = vsel %vm300, %v257, 0.0
    %356 = vadd.xlane.f32.xlu0 %v355
    %v357 = vpop.xlane.xlu0 %356
    %v358 = vsel %vm300, %v260, 0.0
    %359 = vadd.xlane.f32.xlu0 %v358
    %v360 = vpop.xlane.xlu0 %359
    %v361 = vsel %vm300, %v263, 0.0
    %362 = vadd.xlane.f32.xlu0 %v361
    %v363 = vpop.xlane.xlu0 %362
    %v364 = vsel %vm300, %v266, 0.0
    %365 = vadd.xlane.f32.xlu0 %v364
    %v366 = vpop.xlane.xlu0 %365
    %v367 = vsel %vm300, %v269, 0.0
    %368 = vadd.xlane.f32.xlu0 %v367
    %v369 = vpop.xlane.xlu0 %368
    %v370 = vsel %vm300, %v272, 0.0
    %371 = vadd.xlane.f32.xlu0 %v370
    %v372 = vpop.xlane.xlu0 %371
    %v373 = vsel %vm300, %v275, 0.0
    %374 = vadd.xlane.f32.xlu0 %v373
    %v375 = vpop.xlane.xlu0 %374
    %v376 = vsel %vm300, %v278, 0.0
    %377 = vadd.xlane.f32.xlu0 %v376
    %v378 = vpop.xlane.xlu0 %377
    %v379 = vsel %vm300, %v281, 0.0
    %380 = vadd.xlane.f32.xlu0 %v379
    %v381 = vpop.xlane.xlu0 %380
    %v382 = vsel %vm300, %v284, 0.0
    %383 = vadd.xlane.f32.xlu0 %v382
    %v384 = vpop.xlane.xlu0 %383
    %v385 = vsel %vm300, %v287, 0.0
    %386 = vadd.xlane.f32.xlu0 %v385
    %v387 = vpop.xlane.xlu0 %386
    %v388 = vsel %vm300, %v290, 0.0
    %389 = vadd.xlane.f32.xlu0 %v388
    %v390 = vpop.xlane.xlu0 %389
    %v391 = vsel %vm300, %v293, 0.0
    %392 = vadd.xlane.f32.xlu0 %v391
    %v393 = vpop.xlane.xlu0 %392
    %v394 = vsel %vm300, %v296, 0.0
    %395 = vadd.xlane.f32.xlu0 %v394
    %v396 = vpop.xlane.xlu0 %395
    %v397 = vrcp.pop 64.0
    %v398 = vmul.f32 64.0, %v397
    %v399 = vsub.f32 1.0, %v398
    %v400 = vmul.f32 %v397, %v399
    %v401 = vadd.f32 %v397, %v400
    %vm402 = vweird.f32 %v397
    %v403 = vsel %vm402, %v397, %v401
    %v404 = vmul.f32 %v303, %v403
    %v405 = vmul.f32 %v306, %v403
    %v406 = vmul.f32 %v309, %v403
    %v407 = vmul.f32 %v312, %v403
    %v408 = vmul.f32 %v315, %v403
    %v409 = vmul.f32 %v318, %v403
    %v410 = vmul.f32 %v321, %v403
    %v411 = vmul.f32 %v324, %v403
    %v412 = vmul.f32 %v327, %v403
    %v413 = vmul.f32 %v330, %v403
    %v414 = vmul.f32 %v333, %v403
    %v415 = vmul.f32 %v336, %v403
    %v416 = vmul.f32 %v339, %v403
    %v417 = vmul.f32 %v342, %v403
    %v418 = vmul.f32 %v345, %v403
    %v419 = vmul.f32 %v348, %v403
    %v420 = vmul.f32 %v351, %v403
    %v421 = vmul.f32 %v354, %v403
    %v422 = vmul.f32 %v357, %v403
    %v423 = vmul.f32 %v360, %v403
    %v424 = vmul.f32 %v363, %v403
    %v425 = vmul.f32 %v366, %v403
    %v426 = vmul.f32 %v369, %v403
    %v427 = vmul.f32 %v372, %v403
    %v428 = vmul.f32 %v375, %v403
    %v429 = vmul.f32 %v378, %v403
    %v430 = vmul.f32 %v381, %v403
    %v431 = vmul.f32 %v384, %v403
    %v432 = vmul.f32 %v387, %v403
    %v433 = vmul.f32 %v390, %v403
    %v434 = vmul.f32 %v393, %v403
    %v435 = vmul.f32 %v396, %v403
    %v436 = vsub.f32 %v203, %v404
    %v437 = vsub.f32 %v206, %v405
    %v438 = vsub.f32 %v209, %v406
    %v439 = vsub.f32 %v212, %v407
    %v440 = vsub.f32 %v215, %v408
    %v441 = vsub.f32 %v218, %v409
    %v442 = vsub.f32 %v221, %v410
    %v443 = vsub.f32 %v224, %v411
    %v444 = vsub.f32 %v227, %v412
    %v445 = vsub.f32 %v230, %v413
    %v446 = vsub.f32 %v233, %v414
    %v447 = vsub.f32 %v236, %v415
    %v448 = vsub.f32 %v239, %v416
    %v449 = vsub.f32 %v242, %v417
    %v450 = vsub.f32 %v245, %v418
    %v451 = vsub.f32 %v248, %v419
    %v452 = vsub.f32 %v251, %v420
    %v453 = vsub.f32 %v254, %v421
    %v454 = vsub.f32 %v257, %v422
    %v455 = vsub.f32 %v260, %v423
    %v456 = vsub.f32 %v263, %v424
    %v457 = vsub.f32 %v266, %v425
    %v458 = vsub.f32 %v269, %v426
    %v459 = vsub.f32 %v272, %v427
    %v460 = vsub.f32 %v275, %v428
    %v461 = vsub.f32 %v278, %v429
    %v462 = vsub.f32 %v281, %v430
    %v463 = vsub.f32 %v284, %v431
    %v464 = vsub.f32 %v287, %v432
    %v465 = vsub.f32 %v290, %v433
    %v466 = vsub.f32 %v293, %v434
    %v467 = vsub.f32 %v296, %v435
    %v468 = vmul.f32 %v436, %v436
    %v469 = vmul.f32 %v437, %v437
    %v470 = vmul.f32 %v438, %v438
    %v471 = vmul.f32 %v439, %v439
    %v472 = vmul.f32 %v440, %v440
    %v473 = vmul.f32 %v441, %v441
    %v474 = vmul.f32 %v442, %v442
    %v475 = vmul.f32 %v443, %v443
    %v476 = vmul.f32 %v444, %v444
    %v477 = vmul.f32 %v445, %v445
    %v478 = vmul.f32 %v446, %v446
    %v479 = vmul.f32 %v447, %v447
    %v480 = vmul.f32 %v448, %v448
    %v481 = vmul.f32 %v449, %v449
    %v482 = vmul.f32 %v450, %v450
    %v483 = vmul.f32 %v451, %v451
    %v484 = vmul.f32 %v452, %v452
    %v485 = vmul.f32 %v453, %v453
    %v486 = vmul.f32 %v454, %v454
    %v487 = vmul.f32 %v455, %v455
    %v488 = vmul.f32 %v456, %v456
    %v489 = vmul.f32 %v457, %v457
    %v490 = vmul.f32 %v458, %v458
    %v491 = vmul.f32 %v459, %v459
    %v492 = vmul.f32 %v460, %v460
    %v493 = vmul.f32 %v461, %v461
    %v494 = vmul.f32 %v462, %v462
    %v495 = vmul.f32 %v463, %v463
    %v496 = vmul.f32 %v464, %v464
    %v497 = vmul.f32 %v465, %v465
    %v498 = vmul.f32 %v466, %v466
    %v499 = vmul.f32 %v467, %v467
    %v500 = vsel %vm300, %v468, 0.0
    %501 = vadd.xlane.f32.xlu0 %v500
    %v502 = vpop.xlane.xlu0 %501
    %v503 = vsel %vm300, %v469, 0.0
    %504 = vadd.xlane.f32.xlu0 %v503
    %v505 = vpop.xlane.xlu0 %504
    %v506 = vsel %vm300, %v470, 0.0
    %507 = vadd.xlane.f32.xlu0 %v506
    %v508 = vpop.xlane.xlu0 %507
    %v509 = vsel %vm300, %v471, 0.0
    %510 = vadd.xlane.f32.xlu0 %v509
    %v511 = vpop.xlane.xlu0 %510
    %v512 = vsel %vm300, %v472, 0.0
    %513 = vadd.xlane.f32.xlu0 %v512
    %v514 = vpop.xlane.xlu0 %513
    %v515 = vsel %vm300, %v473, 0.0
    %516 = vadd.xlane.f32.xlu0 %v515
    %v517 = vpop.xlane.xlu0 %516
    %v518 = vsel %vm300, %v474, 0.0
    %519 = vadd.xlane.f32.xlu0 %v518
    %v520 = vpop.xlane.xlu0 %519
    %v521 = vsel %vm300, %v475, 0.0
    %522 = vadd.xlane.f32.xlu0 %v521
    %v523 = vpop.xlane.xlu0 %522
    %v524 = vsel %vm300, %v476, 0.0
    %525 = vadd.xlane.f32.xlu0 %v524
    %v526 = vpop.xlane.xlu0 %525
    %v527 = vsel %vm300, %v477, 0.0
    %528 = vadd.xlane.f32.xlu0 %v527
    %v529 = vpop.xlane.xlu0 %528
    %v530 = vsel %vm300, %v478, 0.0
    %531 = vadd.xlane.f32.xlu0 %v530
    %v532 = vpop.xlane.xlu0 %531
    %v533 = vsel %vm300, %v479, 0.0
    %534 = vadd.xlane.f32.xlu0 %v533
    %v535 = vpop.xlane.xlu0 %534
    %v536 = vsel %vm300, %v480, 0.0
    %537 = vadd.xlane.f32.xlu0 %v536
    %v538 = vpop.xlane.xlu0 %537
    %v539 = vsel %vm300, %v481, 0.0
    %540 = vadd.xlane.f32.xlu0 %v539
    %v541 = vpop.xlane.xlu0 %540
    %v542 = vsel %vm300, %v482, 0.0
    %543 = vadd.xlane.f32.xlu0 %v542
    %v544 = vpop.xlane.xlu0 %543
    %v545 = vsel %vm300, %v483, 0.0
    %546 = vadd.xlane.f32.xlu0 %v545
    %v547 = vpop.xlane.xlu0 %546
    %v548 = vsel %vm300, %v484, 0.0
    %549 = vadd.xlane.f32.xlu0 %v548
    %v550 = vpop.xlane.xlu0 %549
    %v551 = vsel %vm300, %v485, 0.0
    %552 = vadd.xlane.f32.xlu0 %v551
    %v553 = vpop.xlane.xlu0 %552
    %v554 = vsel %vm300, %v486, 0.0
    %555 = vadd.xlane.f32.xlu0 %v554
    %v556 = vpop.xlane.xlu0 %555
    %v557 = vsel %vm300, %v487, 0.0
    %558 = vadd.xlane.f32.xlu0 %v557
    %v559 = vpop.xlane.xlu0 %558
    %v560 = vsel %vm300, %v488, 0.0
    %561 = vadd.xlane.f32.xlu0 %v560
    %v562 = vpop.xlane.xlu0 %561
    %v563 = vsel %vm300, %v489, 0.0
    %564 = vadd.xlane.f32.xlu0 %v563
    %v565 = vpop.xlane.xlu0 %564
    %v566 = vsel %vm300, %v490, 0.0
    %567 = vadd.xlane.f32.xlu0 %v566
    %v568 = vpop.xlane.xlu0 %567
    %v569 = vsel %vm300, %v491, 0.0
    %570 = vadd.xlane.f32.xlu0 %v569
    %v571 = vpop.xlane.xlu0 %570
    %v572 = vsel %vm300, %v492, 0.0
    %573 = vadd.xlane.f32.xlu0 %v572
    %v574 = vpop.xlane.xlu0 %573
    %v575 = vsel %vm300, %v493, 0.0
    %576 = vadd.xlane.f32.xlu0 %v575
    %v577 = vpop.xlane.xlu0 %576
    %v578 = vsel %vm300, %v494, 0.0
    %579 = vadd.xlane.f32.xlu0 %v578
    %v580 = vpop.xlane.xlu0 %579
    %v581 = vsel %vm300, %v495, 0.0
    %582 = vadd.xlane.f32.xlu0 %v581
    %v583 = vpop.xlane.xlu0 %582
    %v584 = vsel %vm300, %v496, 0.0
    %585 = vadd.xlane.f32.xlu0 %v584
    %v586 = vpop.xlane.xlu0 %585
    %v587 = vsel %vm300, %v497, 0.0
    %588 = vadd.xlane.f32.xlu0 %v587
    %v589 = vpop.xlane.xlu0 %588
    %v590 = vsel %vm300, %v498, 0.0
    %591 = vadd.xlane.f32.xlu0 %v590
    %v592 = vpop.xlane.xlu0 %591
    %v593 = vsel %vm300, %v499, 0.0
    %594 = vadd.xlane.f32.xlu0 %v593
    %v595 = vpop.xlane.xlu0 %594
    %v596 = vmul.f32 %v502, %v403
    %v597 = vmul.f32 %v505, %v403
    %v598 = vmul.f32 %v508, %v403
    %v599 = vmul.f32 %v511, %v403
    %v600 = vmul.f32 %v514, %v403
    %v601 = vmul.f32 %v517, %v403
    %v602 = vmul.f32 %v520, %v403
    %v603 = vmul.f32 %v523, %v403
    %v604 = vmul.f32 %v526, %v403
    %v605 = vmul.f32 %v529, %v403
    %v606 = vmul.f32 %v532, %v403
    %v607 = vmul.f32 %v535, %v403
    %v608 = vmul.f32 %v538, %v403
    %v609 = vmul.f32 %v541, %v403
    %v610 = vmul.f32 %v544, %v403
    %v611 = vmul.f32 %v547, %v403
    %v612 = vmul.f32 %v550, %v403
    %v613 = vmul.f32 %v553, %v403
    %v614 = vmul.f32 %v556, %v403
    %v615 = vmul.f32 %v559, %v403
    %v616 = vmul.f32 %v562, %v403
    %v617 = vmul.f32 %v565, %v403
    %v618 = vmul.f32 %v568, %v403
    %v619 = vmul.f32 %v571, %v403
    %v620 = vmul.f32 %v574, %v403
    %v621 = vmul.f32 %v577, %v403
    %v622 = vmul.f32 %v580, %v403
    %v623 = vmul.f32 %v583, %v403
    %v624 = vmul.f32 %v586, %v403
    %v625 = vmul.f32 %v589, %v403
    %v626 = vmul.f32 %v592, %v403
    %v627 = vmul.f32 %v595, %v403
    %v628 = vadd.f32 %v596, 1e-05
    %v629 = vadd.f32 %v597, 1e-05
    %v630 = vadd.f32 %v598, 1e-05
    %v631 = vadd.f32 %v599, 1e-05
    %v632 = vadd.f32 %v600, 1e-05
    %v633 = vadd.f32 %v601, 1e-05
    %v634 = vadd.f32 %v602, 1e-05
    %v635 = vadd.f32 %v603, 1e-05
    %v636 = vadd.f32 %v604, 1e-05
    %v637 = vadd.f32 %v605, 1e-05
    %v638 = vadd.f32 %v606, 1e-05
    %v639 = vadd.f32 %v607, 1e-05
    %v640 = vadd.f32 %v608, 1e-05
    %v641 = vadd.f32 %v609, 1e-05
    %v642 = vadd.f32 %v610, 1e-05
    %v643 = vadd.f32 %v611, 1e-05
    %v644 = vadd.f32 %v612, 1e-05
    %v645 = vadd.f32 %v613, 1e-05
    %v646 = vadd.f32 %v614, 1e-05
    %v647 = vadd.f32 %v615, 1e-05
    %v648 = vadd.f32 %v616, 1e-05
    %v649 = vadd.f32 %v617, 1e-05
    %v650 = vadd.f32 %v618, 1e-05
    %v651 = vadd.f32 %v619, 1e-05
    %v652 = vadd.f32 %v620, 1e-05
    %v653 = vadd.f32 %v621, 1e-05
    %v654 = vadd.f32 %v622, 1e-05
    %v655 = vadd.f32 %v623, 1e-05
    %v656 = vadd.f32 %v624, 1e-05
    %v657 = vadd.f32 %v625, 1e-05
    %v658 = vadd.f32 %v626, 1e-05
    %v659 = vadd.f32 %v627, 1e-05
    %v660 = vrsqrt.pop %v628
    %v661 = vmul.f32 %v660, %v628
    %v662 = vmul.f32 %v661, %v660
    %v663 = vmul.f32 0.5, %v662
    %v664 = vsub.f32 1.5, %v663
    %v665 = vmul.f32 %v660, %v664
    %vm666 = vweird.f32 %v628
    %vm667 = vweird.f32 %v660
    %vm668 = vmor %vm666, %vm667
    %v669 = vsel %vm668, %v660, %v665
    %v670 = vrsqrt.pop %v629
    %v671 = vmul.f32 %v670, %v629
    %v672 = vmul.f32 %v671, %v670
    %v673 = vmul.f32 0.5, %v672
    %v674 = vsub.f32 1.5, %v673
    %v675 = vmul.f32 %v670, %v674
    %vm676 = vweird.f32 %v629
    %vm677 = vweird.f32 %v670
    %vm678 = vmor %vm676, %vm677
    %v679 = vsel %vm678, %v670, %v675
    %v680 = vrsqrt.pop %v630
    %v681 = vmul.f32 %v680, %v630
    %v682 = vmul.f32 %v681, %v680
    %v683 = vmul.f32 0.5, %v682
    %v684 = vsub.f32 1.5, %v683
    %v685 = vmul.f32 %v680, %v684
    %vm686 = vweird.f32 %v630
    %vm687 = vweird.f32 %v680
    %vm688 = vmor %vm686, %vm687
    %v689 = vsel %vm688, %v680, %v685
    %v690 = vrsqrt.pop %v631
    %v691 = vmul.f32 %v690, %v631
    %v692 = vmul.f32 %v691, %v690
    %v693 = vmul.f32 0.5, %v692
    %v694 = vsub.f32 1.5, %v693
    %v695 = vmul.f32 %v690, %v694
    %vm696 = vweird.f32 %v631
    %vm697 = vweird.f32 %v690
    %vm698 = vmor %vm696, %vm697
    %v699 = vsel %vm698, %v690, %v695
    %v700 = vrsqrt.pop %v632
    %v701 = vmul.f32 %v700, %v632
    %v702 = vmul.f32 %v701, %v700
    %v703 = vmul.f32 0.5, %v702
    %v704 = vsub.f32 1.5, %v703
    %v705 = vmul.f32 %v700, %v704
    %vm706 = vweird.f32 %v632
    %vm707 = vweird.f32 %v700
    %vm708 = vmor %vm706, %vm707
    %v709 = vsel %vm708, %v700, %v705
    %v710 = vrsqrt.pop %v633
    %v711 = vmul.f32 %v710, %v633
    %v712 = vmul.f32 %v711, %v710
    %v713 = vmul.f32 0.5, %v712
    %v714 = vsub.f32 1.5, %v713
    %v715 = vmul.f32 %v710, %v714
    %vm716 = vweird.f32 %v633
    %vm717 = vweird.f32 %v710
    %vm718 = vmor %vm716, %vm717
    %v719 = vsel %vm718, %v710, %v715
    %v720 = vrsqrt.pop %v634
    %v721 = vmul.f32 %v720, %v634
    %v722 = vmul.f32 %v721, %v720
    %v723 = vmul.f32 0.5, %v722
    %v724 = vsub.f32 1.5, %v723
    %v725 = vmul.f32 %v720, %v724
    %vm726 = vweird.f32 %v634
    %vm727 = vweird.f32 %v720
    %vm728 = vmor %vm726, %vm727
    %v729 = vsel %vm728, %v720, %v725
    %v730 = vrsqrt.pop %v635
    %v731 = vmul.f32 %v730, %v635
    %v732 = vmul.f32 %v731, %v730
    %v733 = vmul.f32 0.5, %v732
    %v734 = vsub.f32 1.5, %v733
    %v735 = vmul.f32 %v730, %v734
    %vm736 = vweird.f32 %v635
    %vm737 = vweird.f32 %v730
    %vm738 = vmor %vm736, %vm737
    %v739 = vsel %vm738, %v730, %v735
    %v740 = vrsqrt.pop %v636
    %v741 = vmul.f32 %v740, %v636
    %v742 = vmul.f32 %v741, %v740
    %v743 = vmul.f32 0.5, %v742
    %v744 = vsub.f32 1.5, %v743
    %v745 = vmul.f32 %v740, %v744
    %vm746 = vweird.f32 %v636
    %vm747 = vweird.f32 %v740
    %vm748 = vmor %vm746, %vm747
    %v749 = vsel %vm748, %v740, %v745
    %v750 = vrsqrt.pop %v637
    %v751 = vmul.f32 %v750, %v637
    %v752 = vmul.f32 %v751, %v750
    %v753 = vmul.f32 0.5, %v752
    %v754 = vsub.f32 1.5, %v753
    %v755 = vmul.f32 %v750, %v754
    %vm756 = vweird.f32 %v637
    %vm757 = vweird.f32 %v750
    %vm758 = vmor %vm756, %vm757
    %v759 = vsel %vm758, %v750, %v755
    %v760 = vrsqrt.pop %v638
    %v761 = vmul.f32 %v760, %v638
    %v762 = vmul.f32 %v761, %v760
    %v763 = vmul.f32 0.5, %v762
    %v764 = vsub.f32 1.5, %v763
    %v765 = vmul.f32 %v760, %v764
    %vm766 = vweird.f32 %v638
    %vm767 = vweird.f32 %v760
    %vm768 = vmor %vm766, %vm767
    %v769 = vsel %vm768, %v760, %v765
    %v770 = vrsqrt.pop %v639
    %v771 = vmul.f32 %v770, %v639
    %v772 = vmul.f32 %v771, %v770
    %v773 = vmul.f32 0.5, %v772
    %v774 = vsub.f32 1.5, %v773
    %v775 = vmul.f32 %v770, %v774
    %vm776 = vweird.f32 %v639
    %vm777 = vweird.f32 %v770
    %vm778 = vmor %vm776, %vm777
    %v779 = vsel %vm778, %v770, %v775
    %v780 = vrsqrt.pop %v640
    %v781 = vmul.f32 %v780, %v640
    %v782 = vmul.f32 %v781, %v780
    %v783 = vmul.f32 0.5, %v782
    %v784 = vsub.f32 1.5, %v783
    %v785 = vmul.f32 %v780, %v784
    %vm786 = vweird.f32 %v640
    %vm787 = vweird.f32 %v780
    %vm788 = vmor %vm786, %vm787
    %v789 = vsel %vm788, %v780, %v785
    %v790 = vrsqrt.pop %v641
    %v791 = vmul.f32 %v790, %v641
    %v792 = vmul.f32 %v791, %v790
    %v793 = vmul.f32 0.5, %v792
    %v794 = vsub.f32 1.5, %v793
    %v795 = vmul.f32 %v790, %v794
    %vm796 = vweird.f32 %v641
    %vm797 = vweird.f32 %v790
    %vm798 = vmor %vm796, %vm797
    %v799 = vsel %vm798, %v790, %v795
    %v800 = vrsqrt.pop %v642
    %v801 = vmul.f32 %v800, %v642
    %v802 = vmul.f32 %v801, %v800
    %v803 = vmul.f32 0.5, %v802
    %v804 = vsub.f32 1.5, %v803
    %v805 = vmul.f32 %v800, %v804
    %vm806 = vweird.f32 %v642
    %vm807 = vweird.f32 %v800
    %vm808 = vmor %vm806, %vm807
    %v809 = vsel %vm808, %v800, %v805
    %v810 = vrsqrt.pop %v643
    %v811 = vmul.f32 %v810, %v643
    %v812 = vmul.f32 %v811, %v810
    %v813 = vmul.f32 0.5, %v812
    %v814 = vsub.f32 1.5, %v813
    %v815 = vmul.f32 %v810, %v814
    %vm816 = vweird.f32 %v643
    %vm817 = vweird.f32 %v810
    %vm818 = vmor %vm816, %vm817
    %v819 = vsel %vm818, %v810, %v815
    %v820 = vrsqrt.pop %v644
    %v821 = vmul.f32 %v820, %v644
    %v822 = vmul.f32 %v821, %v820
    %v823 = vmul.f32 0.5, %v822
    %v824 = vsub.f32 1.5, %v823
    %v825 = vmul.f32 %v820, %v824
    %vm826 = vweird.f32 %v644
    %vm827 = vweird.f32 %v820
    %vm828 = vmor %vm826, %vm827
    %v829 = vsel %vm828, %v820, %v825
    %v830 = vrsqrt.pop %v645
    %v831 = vmul.f32 %v830, %v645
    %v832 = vmul.f32 %v831, %v830
    %v833 = vmul.f32 0.5, %v832
    %v834 = vsub.f32 1.5, %v833
    %v835 = vmul.f32 %v830, %v834
    %vm836 = vweird.f32 %v645
    %vm837 = vweird.f32 %v830
    %vm838 = vmor %vm836, %vm837
    %v839 = vsel %vm838, %v830, %v835
    %v840 = vrsqrt.pop %v646
    %v841 = vmul.f32 %v840, %v646
    %v842 = vmul.f32 %v841, %v840
    %v843 = vmul.f32 0.5, %v842
    %v844 = vsub.f32 1.5, %v843
    %v845 = vmul.f32 %v840, %v844
    %vm846 = vweird.f32 %v646
    %vm847 = vweird.f32 %v840
    %vm848 = vmor %vm846, %vm847
    %v849 = vsel %vm848, %v840, %v845
    %v850 = vrsqrt.pop %v647
    %v851 = vmul.f32 %v850, %v647
    %v852 = vmul.f32 %v851, %v850
    %v853 = vmul.f32 0.5, %v852
    %v854 = vsub.f32 1.5, %v853
    %v855 = vmul.f32 %v850, %v854
    %vm856 = vweird.f32 %v647
    %vm857 = vweird.f32 %v850
    %vm858 = vmor %vm856, %vm857
    %v859 = vsel %vm858, %v850, %v855
    %v860 = vrsqrt.pop %v648
    %v861 = vmul.f32 %v860, %v648
    %v862 = vmul.f32 %v861, %v860
    %v863 = vmul.f32 0.5, %v862
    %v864 = vsub.f32 1.5, %v863
    %v865 = vmul.f32 %v860, %v864
    %vm866 = vweird.f32 %v648
    %vm867 = vweird.f32 %v860
    %vm868 = vmor %vm866, %vm867
    %v869 = vsel %vm868, %v860, %v865
    %v870 = vrsqrt.pop %v649
    %v871 = vmul.f32 %v870, %v649
    %v872 = vmul.f32 %v871, %v870
    %v873 = vmul.f32 0.5, %v872
    %v874 = vsub.f32 1.5, %v873
    %v875 = vmul.f32 %v870, %v874
    %vm876 = vweird.f32 %v649
    %vm877 = vweird.f32 %v870
    %vm878 = vmor %vm876, %vm877
    %v879 = vsel %vm878, %v870, %v875
    %v880 = vrsqrt.pop %v650
    %v881 = vmul.f32 %v880, %v650
    %v882 = vmul.f32 %v881, %v880
    %v883 = vmul.f32 0.5, %v882
    %v884 = vsub.f32 1.5, %v883
    %v885 = vmul.f32 %v880, %v884
    %vm886 = vweird.f32 %v650
    %vm887 = vweird.f32 %v880
    %vm888 = vmor %vm886, %vm887
    %v889 = vsel %vm888, %v880, %v885
    %v890 = vrsqrt.pop %v651
    %v891 = vmul.f32 %v890, %v651
    %v892 = vmul.f32 %v891, %v890
    %v893 = vmul.f32 0.5, %v892
    %v894 = vsub.f32 1.5, %v893
    %v895 = vmul.f32 %v890, %v894
    %vm896 = vweird.f32 %v651
    %vm897 = vweird.f32 %v890
    %vm898 = vmor %vm896, %vm897
    %v899 = vsel %vm898, %v890, %v895
    %v900 = vrsqrt.pop %v652
    %v901 = vmul.f32 %v900, %v652
    %v902 = vmul.f32 %v901, %v900
    %v903 = vmul.f32 0.5, %v902
    %v904 = vsub.f32 1.5, %v903
    %v905 = vmul.f32 %v900, %v904
    %vm906 = vweird.f32 %v652
    %vm907 = vweird.f32 %v900
    %vm908 = vmor %vm906, %vm907
    %v909 = vsel %vm908, %v900, %v905
    %v910 = vrsqrt.pop %v653
    %v911 = vmul.f32 %v910, %v653
    %v912 = vmul.f32 %v911, %v910
    %v913 = vmul.f32 0.5, %v912
    %v914 = vsub.f32 1.5, %v913
    %v915 = vmul.f32 %v910, %v914
    %vm916 = vweird.f32 %v653
    %vm917 = vweird.f32 %v910
    %vm918 = vmor %vm916, %vm917
    %v919 = vsel %vm918, %v910, %v915
    %v920 = vrsqrt.pop %v654
    %v921 = vmul.f32 %v920, %v654
    %v922 = vmul.f32 %v921, %v920
    %v923 = vmul.f32 0.5, %v922
    %v924 = vsub.f32 1.5, %v923
    %v925 = vmul.f32 %v920, %v924
    %vm926 = vweird.f32 %v654
    %vm927 = vweird.f32 %v920
    %vm928 = vmor %vm926, %vm927
    %v929 = vsel %vm928, %v920, %v925
    %v930 = vrsqrt.pop %v655
    %v931 = vmul.f32 %v930, %v655
    %v932 = vmul.f32 %v931, %v930
    %v933 = vmul.f32 0.5, %v932
    %v934 = vsub.f32 1.5, %v933
    %v935 = vmul.f32 %v930, %v934
    %vm936 = vweird.f32 %v655
    %vm937 = vweird.f32 %v930
    %vm938 = vmor %vm936, %vm937
    %v939 = vsel %vm938, %v930, %v935
    %v940 = vrsqrt.pop %v656
    %v941 = vmul.f32 %v940, %v656
    %v942 = vmul.f32 %v941, %v940
    %v943 = vmul.f32 0.5, %v942
    %v944 = vsub.f32 1.5, %v943
    %v945 = vmul.f32 %v940, %v944
    %vm946 = vweird.f32 %v656
    %vm947 = vweird.f32 %v940
    %vm948 = vmor %vm946, %vm947
    %v949 = vsel %vm948, %v940, %v945
    %v950 = vrsqrt.pop %v657
    %v951 = vmul.f32 %v950, %v657
    %v952 = vmul.f32 %v951, %v950
    %v953 = vmul.f32 0.5, %v952
    %v954 = vsub.f32 1.5, %v953
    %v955 = vmul.f32 %v950, %v954
    %vm956 = vweird.f32 %v657
    %vm957 = vweird.f32 %v950
    %vm958 = vmor %vm956, %vm957
    %v959 = vsel %vm958, %v950, %v955
    %v960 = vrsqrt.pop %v658
    %v961 = vmul.f32 %v960, %v658
    %v962 = vmul.f32 %v961, %v960
    %v963 = vmul.f32 0.5, %v962
    %v964 = vsub.f32 1.5, %v963
    %v965 = vmul.f32 %v960, %v964
    %vm966 = vweird.f32 %v658
    %vm967 = vweird.f32 %v960
    %vm968 = vmor %vm966, %vm967
    %v969 = vsel %vm968, %v960, %v965
    %v970 = vrsqrt.pop %v659
    %v971 = vmul.f32 %v970, %v659
    %v972 = vmul.f32 %v971, %v970
    %v973 = vmul.f32 0.5, %v972
    %v974 = vsub.f32 1.5, %v973
    %v975 = vmul.f32 %v970, %v974
    %vm976 = vweird.f32 %v659
    %vm977 = vweird.f32 %v970
    %vm978 = vmor %vm976, %vm977
    %v979 = vsel %vm978, %v970, %v975
    %v980 = vmul.f32 %v436, %v669
    %v981 = vmul.f32 %v437, %v679
    %v982 = vmul.f32 %v438, %v689
    %v983 = vmul.f32 %v439, %v699
    %v984 = vmul.f32 %v440, %v709
    %v985 = vmul.f32 %v441, %v719
    %v986 = vmul.f32 %v442, %v729
    %v987 = vmul.f32 %v443, %v739
    %v988 = vmul.f32 %v444, %v749
    %v989 = vmul.f32 %v445, %v759
    %v990 = vmul.f32 %v446, %v769
    %v991 = vmul.f32 %v447, %v779
    %v992 = vmul.f32 %v448, %v789
    %v993 = vmul.f32 %v449, %v799
    %v994 = vmul.f32 %v450, %v809
    %v995 = vmul.f32 %v451, %v819
    %v996 = vmul.f32 %v452, %v829
    %v997 = vmul.f32 %v453, %v839
    %v998 = vmul.f32 %v454, %v849
    %v999 = vmul.f32 %v455, %v859
    %v1000 = vmul.f32 %v456, %v869
    %v1001 = vmul.f32 %v457, %v879
    %v1002 = vmul.f32 %v458, %v889
    %v1003 = vmul.f32 %v459, %v899
    %v1004 = vmul.f32 %v460, %v909
    %v1005 = vmul.f32 %v461, %v919
    %v1006 = vmul.f32 %v462, %v929
    %v1007 = vmul.f32 %v463, %v939
    %v1008 = vmul.f32 %v464, %v949
    %v1009 = vmul.f32 %v465, %v959
    %v1010 = vmul.f32 %v466, %v969
    %v1011 = vmul.f32 %v467, %v979
    %v1013 = vperm.slane %v298, 0
    %v1015 = vmul.f32 %v980, %v1013
    %v1016 = vmul.f32 %v981, %v1013
    %v1017 = vmul.f32 %v982, %v1013
    %v1018 = vmul.f32 %v983, %v1013
    %v1019 = vmul.f32 %v984, %v1013
    %v1020 = vmul.f32 %v985, %v1013
    %v1021 = vmul.f32 %v986, %v1013
    %v1022 = vmul.f32 %v987, %v1013
    %v1023 = vmul.f32 %v988, %v1013
    %v1024 = vmul.f32 %v989, %v1013
    %v1025 = vmul.f32 %v990, %v1013
    %v1026 = vmul.f32 %v991, %v1013
    %v1027 = vmul.f32 %v992, %v1013
    %v1028 = vmul.f32 %v993, %v1013
    %v1029 = vmul.f32 %v994, %v1013
    %v1030 = vmul.f32 %v995, %v1013
    %v1031 = vmul.f32 %v996, %v1013
    %v1032 = vmul.f32 %v997, %v1013
    %v1033 = vmul.f32 %v998, %v1013
    %v1034 = vmul.f32 %v999, %v1013
    %v1035 = vmul.f32 %v1000, %v1013
    %v1036 = vmul.f32 %v1001, %v1013
    %v1037 = vmul.f32 %v1002, %v1013
    %v1038 = vmul.f32 %v1003, %v1013
    %v1039 = vmul.f32 %v1004, %v1013
    %v1040 = vmul.f32 %v1005, %v1013
    %v1041 = vmul.f32 %v1006, %v1013
    %v1042 = vmul.f32 %v1007, %v1013
    %v1043 = vmul.f32 %v1008, %v1013
    %v1044 = vmul.f32 %v1009, %v1013
    %v1045 = vmul.f32 %v1010, %v1013
    %v1046 = vmul.f32 %v1011, %v1013
    %v1048 = vperm.slane %v299, 0
    %v1050 = vadd.f32 %v1015, %v1048
    %v1051 = vadd.f32 %v1016, %v1048
    %v1052 = vadd.f32 %v1017, %v1048
    %v1053 = vadd.f32 %v1018, %v1048
    %v1054 = vadd.f32 %v1019, %v1048
    %v1055 = vadd.f32 %v1020, %v1048
    %v1056 = vadd.f32 %v1021, %v1048
    %v1057 = vadd.f32 %v1022, %v1048
    %v1058 = vadd.f32 %v1023, %v1048
    %v1059 = vadd.f32 %v1024, %v1048
    %v1060 = vadd.f32 %v1025, %v1048
    %v1061 = vadd.f32 %v1026, %v1048
    %v1062 = vadd.f32 %v1027, %v1048
    %v1063 = vadd.f32 %v1028, %v1048
    %v1064 = vadd.f32 %v1029, %v1048
    %v1065 = vadd.f32 %v1030, %v1048
    %v1066 = vadd.f32 %v1031, %v1048
    %v1067 = vadd.f32 %v1032, %v1048
    %v1068 = vadd.f32 %v1033, %v1048
    %v1069 = vadd.f32 %v1034, %v1048
    %v1070 = vadd.f32 %v1035, %v1048
    %v1071 = vadd.f32 %v1036, %v1048
    %v1072 = vadd.f32 %v1037, %v1048
    %v1073 = vadd.f32 %v1038, %v1048
    %v1074 = vadd.f32 %v1039, %v1048
    %v1075 = vadd.f32 %v1040, %v1048
    %v1076 = vadd.f32 %v1041, %v1048
    %v1077 = vadd.f32 %v1042, %v1048
    %v1078 = vadd.f32 %v1043, %v1048
    %v1079 = vadd.f32 %v1044, %v1048
    %v1080 = vadd.f32 %v1045, %v1048
    %v1081 = vadd.f32 %v1046, %v1048
    %v1082 = vmax.f32 %v1050, 0.0
    %v1083 = vmax.f32 %v1051, 0.0
    %v1084 = vmax.f32 %v1052, 0.0
    %v1085 = vmax.f32 %v1053, 0.0
    %v1086 = vmax.f32 %v1054, 0.0
    %v1087 = vmax.f32 %v1055, 0.0
    %v1088 = vmax.f32 %v1056, 0.0
    %v1089 = vmax.f32 %v1057, 0.0
    %v1090 = vmax.f32 %v1058, 0.0
    %v1091 = vmax.f32 %v1059, 0.0
    %v1092 = vmax.f32 %v1060, 0.0
    %v1093 = vmax.f32 %v1061, 0.0
    %v1094 = vmax.f32 %v1062, 0.0
    %v1095 = vmax.f32 %v1063, 0.0
    %v1096 = vmax.f32 %v1064, 0.0
    %v1097 = vmax.f32 %v1065, 0.0
    %v1098 = vmax.f32 %v1066, 0.0
    %v1099 = vmax.f32 %v1067, 0.0
    %v1100 = vmax.f32 %v1068, 0.0
    %v1101 = vmax.f32 %v1069, 0.0
    %v1102 = vmax.f32 %v1070, 0.0
    %v1103 = vmax.f32 %v1071, 0.0
    %v1104 = vmax.f32 %v1072, 0.0
    %v1105 = vmax.f32 %v1073, 0.0
    %v1106 = vmax.f32 %v1074, 0.0
    %v1107 = vmax.f32 %v1075, 0.0
    %v1108 = vmax.f32 %v1076, 0.0
    %v1109 = vmax.f32 %v1077, 0.0
    %v1110 = vmax.f32 %v1078, 0.0
    %v1111 = vmax.f32 %v1079, 0.0
    %v1112 = vmax.f32 %v1080, 0.0
    %v1113 = vmax.f32 %v1081, 0.0
    %v1114 = vld [vmem:[%s7] sm:$0xff]
    %v1115 = vld [vmem:[%s7 + $0x8] sm:$0xff]
    %v1116 = vld [vmem:[%s7 + $0x10] sm:$0xff]
    %v1117 = vld [vmem:[%s7 + $0x18] sm:$0xff]
    %v1118 = vld [vmem:[%s7 + $0x20] sm:$0xff]
    %v1119 = vld [vmem:[%s7 + $0x28] sm:$0xff]
    %v1120 = vld [vmem:[%s7 + $0x30] sm:$0xff]
    %v1121 = vld [vmem:[%s7 + $0x38] sm:$0xff]
    %v1122 = vld [vmem:[%s7 + $0x40] sm:$0xff]
    %v1123 = vld [vmem:[%s7 + $0x48] sm:$0xff]
    %v1124 = vld [vmem:[%s7 + $0x50] sm:$0xff]
    %v1125 = vld [vmem:[%s7 + $0x58] sm:$0xff]
    %v1126 = vld [vmem:[%s7 + $0x60] sm:$0xff]
    %v1127 = vld [vmem:[%s7 + $0x68] sm:$0xff]
    %v1128 = vld [vmem:[%s7 + $0x70] sm:$0xff]
    %v1129 = vld [vmem:[%s7 + $0x78] sm:$0xff]
    %v1130 = vld [vmem:[%s8] sm:$0xff]
    %v1131 = vld [vmem:[%s8 + $0x8] sm:$0xff]
    %v1132 = vld [vmem:[%s8 + $0x10] sm:$0xff]
    %v1133 = vld [vmem:[%s8 + $0x18] sm:$0xff]
    %v1134 = vld [vmem:[%s8 + $0x20] sm:$0xff]
    %v1135 = vld [vmem:[%s8 + $0x28] sm:$0xff]
    %v1136 = vld [vmem:[%s8 + $0x30] sm:$0xff]
    %v1137 = vld [vmem:[%s8 + $0x38] sm:$0xff]
    %v1138 = vld [vmem:[%s8 + $0x40] sm:$0xff]
    %v1139 = vld [vmem:[%s8 + $0x48] sm:$0xff]
    %v1140 = vld [vmem:[%s8 + $0x50] sm:$0xff]
    %v1141 = vld [vmem:[%s8 + $0x58] sm:$0xff]
    %v1142 = vld [vmem:[%s8 + $0x60] sm:$0xff]
    %v1143 = vld [vmem:[%s8 + $0x68] sm:$0xff]
    %v1144 = vld [vmem:[%s8 + $0x70] sm:$0xff]
    %v1145 = vld [vmem:[%s8 + $0x78] sm:$0xff]
    %v1146 = vld [vmem:[#allocation2] sm:$0xff]
    %v1147 = vld [vmem:[#allocation2 + $0x8] sm:$0xff]
    %v1148 = vld [vmem:[#allocation2 + $0x10] sm:$0xff]
    %v1149 = vld [vmem:[#allocation2 + $0x18] sm:$0xff]
    %v1150 = vld [vmem:[#allocation2 + $0x20] sm:$0xff]
    %v1151 = vld [vmem:[#allocation2 + $0x28] sm:$0xff]
    %v1152 = vld [vmem:[#allocation2 + $0x30] sm:$0xff]
    %v1153 = vld [vmem:[#allocation2 + $0x38] sm:$0xff]
    %v1154 = vld [vmem:[#allocation2 + $0x40] sm:$0xff]
    %v1155 = vld [vmem:[#allocation2 + $0x48] sm:$0xff]
    %v1156 = vld [vmem:[#allocation2 + $0x50] sm:$0xff]
    %v1157 = vld [vmem:[#allocation2 + $0x58] sm:$0xff]
    %v1158 = vld [vmem:[#allocation2 + $0x60] sm:$0xff]
    %v1159 = vld [vmem:[#allocation2 + $0x68] sm:$0xff]
    %v1160 = vld [vmem:[#allocation2 + $0x70] sm:$0xff]
    %v1161 = vld [vmem:[#allocation2 + $0x78] sm:$0xff]
    %v1162 = vld [vmem:[#allocation2 + $0x80] sm:$0xff]
    %v1163 = vld [vmem:[#allocation2 + $0x88] sm:$0xff]
    %v1164 = vld [vmem:[#allocation2 + $0x90] sm:$0xff]
    %v1165 = vld [vmem:[#allocation2 + $0x98] sm:$0xff]
    %v1166 = vld [vmem:[#allocation2 + $0xa0] sm:$0xff]
    %v1167 = vld [vmem:[#allocation2 + $0xa8] sm:$0xff]
    %v1168 = vld [vmem:[#allocation2 + $0xb0] sm:$0xff]
    %v1169 = vld [vmem:[#allocation2 + $0xb8] sm:$0xff]
    %v1170 = vld [vmem:[%s6] sm:$0x7]
    %v1172 = vperm.slane %v1170, 0
    %v1173 = vperm.slane %v1170, 1
    %v1174 = vperm.slane %v1170, 2
    %v1179 = vsel %vm300, %v1082, 0
    %v1182 = vsel %vm300, %v1083, 0
    %v1185 = vsel %vm300, %v1084, 0
    %v1188 = vsel %vm300, %v1085, 0
    %v1191 = vsel %vm300, %v1086, 0
    %v1194 = vsel %vm300, %v1087, 0
    %v1197 = vsel %vm300, %v1088, 0
    %v1200 = vsel %vm300, %v1089, 0
    %v1203 = vsel %vm300, %v1090, 0
    %v1206 = vsel %vm300, %v1091, 0
    %v1209 = vsel %vm300, %v1092, 0
    %v1212 = vsel %vm300, %v1093, 0
    %v1215 = vsel %vm300, %v1094, 0
    %v1218 = vsel %vm300, %v1095, 0
    %v1221 = vsel %vm300, %v1096, 0
    %v1224 = vsel %vm300, %v1097, 0
    %v1227 = vsel %vm300, %v1098, 0
    %v1230 = vsel %vm300, %v1099, 0
    %v1233 = vsel %vm300, %v1100, 0
    %v1236 = vsel %vm300, %v1101, 0
    %v1239 = vsel %vm300, %v1102, 0
    %v1242 = vsel %vm300, %v1103, 0
    %v1245 = vsel %vm300, %v1104, 0
    %v1248 = vsel %vm300, %v1105, 0
    %v1251 = vsel %vm300, %v1106, 0
    %v1254 = vsel %vm300, %v1107, 0
    %v1257 = vsel %vm300, %v1108, 0
    %v1260 = vsel %vm300, %v1109, 0
    %v1263 = vsel %vm300, %v1110, 0
    %v1266 = vsel %vm300, %v1111, 0
    %v1269 = vsel %vm300, %v1112, 0
    %v1272 = vsel %vm300, %v1113, 0
    %1274 = vmatpush.msra.mxu0 0.0
    %1275 = vmatpush.msra.mxu0 0.0
    %1276 = vmatpush.msra.mxu0 0.0
    %1277 = vmatpush.msra.mxu0 0.0
    %1278 = vmatpush.msra.mxu0 0.0
    %1279 = vmatpush.msra.mxu0 0.0
    %1280 = vmatpush.msra.mxu0 0.0
    %1281 = vmatpush.msra.mxu0 0.0
    %1282 = vmatpush.msra.mxu0 %v1167
    %1283 = vmatpush.msra.mxu0 %v1164
    %1284 = vmatpush.msra.mxu0 %v1161
    %1285 = vmatpush.msra.mxu0 %v1158
    %1286 = vmatpush.msra.mxu0 %v1155
    %1287 = vmatpush.msra.mxu0 %v1152
    %1288 = vmatpush.msra.mxu0 %v1149
    %1289 = vmatpush.msra.mxu0 %v1146
    %1290 = vmatmul.f32.gmra.mxu0 %v1179
    %v1291 = vpop.f32.mrf.mxu0
    %v1292 = vadd.f32 %v1172, %v1291
    %1293 = vmatmul.f32.gmra.mxu0 %v1182
    %v1294 = vpop.f32.mrf.mxu0
    %v1295 = vadd.f32 %v1172, %v1294
    %1296 = vmatmul.f32.gmra.mxu0 %v1185
    %v1297 = vpop.f32.mrf.mxu0
    %v1298 = vadd.f32 %v1172, %v1297
    %1299 = vmatmul.f32.gmra.mxu0 %v1188
    %v1300 = vpop.f32.mrf.mxu0
    %v1301 = vadd.f32 %v1172, %v1300
    %1302 = vmatmul.f32.gmra.mxu0 %v1191
    %v1303 = vpop.f32.mrf.mxu0
    %v1304 = vadd.f32 %v1172, %v1303
    %1305 = vmatmul.f32.gmra.mxu0 %v1194
    %v1306 = vpop.f32.mrf.mxu0
    %v1307 = vadd.f32 %v1172, %v1306
    %1308 = vmatmul.f32.gmra.mxu0 %v1197
    %v1309 = vpop.f32.mrf.mxu0
    %v1310 = vadd.f32 %v1172, %v1309
    %1311 = vmatmul.f32.gmra.mxu0 %v1200
    %v1312 = vpop.f32.mrf.mxu0
    %v1313 = vadd.f32 %v1172, %v1312
    %1314 = vmatmul.f32.gmra.mxu0 %v1203
    %v1315 = vpop.f32.mrf.mxu0
    %v1316 = vadd.f32 %v1172, %v1315
    %1317 = vmatmul.f32.gmra.mxu0 %v1206
    %v1318 = vpop.f32.mrf.mxu0
    %v1319 = vadd.f32 %v1172, %v1318
    %1320 = vmatmul.f32.gmra.mxu0 %v1209
    %v1321 = vpop.f32.mrf.mxu0
    %v1322 = vadd.f32 %v1172, %v1321
    %1323 = vmatmul.f32.gmra.mxu0 %v1212
    %v1324 = vpop.f32.mrf.mxu0
    %v1325 = vadd.f32 %v1172, %v1324
    %1326 = vmatmul.f32.gmra.mxu0 %v1215
    %v1327 = vpop.f32.mrf.mxu0
    %v1328 = vadd.f32 %v1172, %v1327
    %1329 = vmatmul.f32.gmra.mxu0 %v1218
    %v1330 = vpop.f32.mrf.mxu0
    %v1331 = vadd.f32 %v1172, %v1330
    %1332 = vmatmul.f32.gmra.mxu0 %v1221
    %v1333 = vpop.f32.mrf.mxu0
    %v1334 = vadd.f32 %v1172, %v1333
    %1335 = vmatmul.f32.gmra.mxu0 %v1224
    %v1336 = vpop.f32.mrf.mxu0
    %v1337 = vadd.f32 %v1172, %v1336
    %1338 = vmatmul.f32.gmra.mxu0 %v1227
    %v1339 = vpop.f32.mrf.mxu0
    %v1340 = vadd.f32 %v1172, %v1339
    %1341 = vmatmul.f32.gmra.mxu0 %v1230
    %v1342 = vpop.f32.mrf.mxu0
    %v1343 = vadd.f32 %v1172, %v1342
    %1344 = vmatmul.f32.gmra.mxu0 %v1233
    %v1345 = vpop.f32.mrf.mxu0
    %v1346 = vadd.f32 %v1172, %v1345
    %1347 = vmatmul.f32.gmra.mxu0 %v1236
    %v1348 = vpop.f32.mrf.mxu0
    %v1349 = vadd.f32 %v1172, %v1348
    %1350 = vmatmul.f32.gmra.mxu0 %v1239
    %v1351 = vpop.f32.mrf.mxu0
    %v1352 = vadd.f32 %v1172, %v1351
    %1353 = vmatmul.f32.gmra.mxu0 %v1242
    %v1354 = vpop.f32.mrf.mxu0
    %v1355 = vadd.f32 %v1172, %v1354
    %1356 = vmatmul.f32.gmra.mxu0 %v1245
    %v1357 = vpop.f32.mrf.mxu0
    %v1358 = vadd.f32 %v1172, %v1357
    %1359 = vmatmul.f32.gmra.mxu0 %v1248
    %v1360 = vpop.f32.mrf.mxu0
    %v1361 = vadd.f32 %v1172, %v1360
    %1362 = vmatmul.f32.gmra.mxu0 %v1251
    %v1363 = vpop.f32.mrf.mxu0
    %v1364 = vadd.f32 %v1172, %v1363
    %1365 = vmatmul.f32.gmra.mxu0 %v1254
    %v1366 = vpop.f32.mrf.mxu0
    %v1367 = vadd.f32 %v1172, %v1366
    %1368 = vmatmul.f32.gmra.mxu0 %v1257
    %v1369 = vpop.f32.mrf.mxu0
    %v1370 = vadd.f32 %v1172, %v1369
    %1371 = vmatmul.f32.gmra.mxu0 %v1260
    %v1372 = vpop.f32.mrf.mxu0
    %v1373 = vadd.f32 %v1172, %v1372
    %1374 = vmatmul.f32.gmra.mxu0 %v1263
    %v1375 = vpop.f32.mrf.mxu0
    %v1376 = vadd.f32 %v1172, %v1375
    %1377 = vmatmul.f32.gmra.mxu0 %v1266
    %v1378 = vpop.f32.mrf.mxu0
    %v1379 = vadd.f32 %v1172, %v1378
    %1380 = vmatmul.f32.gmra.mxu0 %v1269
    %v1381 = vpop.f32.mrf.mxu0
    %v1382 = vadd.f32 %v1172, %v1381
    %1383 = vmatmul.f32.gmra.mxu0 %v1272
    %v1384 = vpop.f32.mrf.mxu0
    %v1385 = vadd.f32 %v1172, %v1384
    %1386 = vdwg.mxu0
    %1387 = vmatpush.msra.mxu0 0.0
    %1388 = vmatpush.msra.mxu0 0.0
    %1389 = vmatpush.msra.mxu0 0.0
    %1390 = vmatpush.msra.mxu0 0.0
    %1391 = vmatpush.msra.mxu0 0.0
    %1392 = vmatpush.msra.mxu0 0.0
    %1393 = vmatpush.msra.mxu0 0.0
    %1394 = vmatpush.msra.mxu0 0.0
    %1395 = vmatpush.msra.mxu0 %v1168
    %1396 = vmatpush.msra.mxu0 %v1165
    %1397 = vmatpush.msra.mxu0 %v1162
    %1398 = vmatpush.msra.mxu0 %v1159
    %1399 = vmatpush.msra.mxu0 %v1156
    %1400 = vmatpush.msra.mxu0 %v1153
    %1401 = vmatpush.msra.mxu0 %v1150
    %1402 = vmatpush.msra.mxu0 %v1147
    %1403 = vmatmul.f32.gmra.mxu0 %v1179
    %v1404 = vpop.f32.mrf.mxu0
    %v1405 = vadd.f32 %v1173, %v1404
    %1406 = vmatmul.f32.gmra.mxu0 %v1182
    %v1407 = vpop.f32.mrf.mxu0
    %v1408 = vadd.f32 %v1173, %v1407
    %1409 = vmatmul.f32.gmra.mxu0 %v1185
    %v1410 = vpop.f32.mrf.mxu0
    %v1411 = vadd.f32 %v1173, %v1410
    %1412 = vmatmul.f32.gmra.mxu0 %v1188
    %v1413 = vpop.f32.mrf.mxu0
    %v1414 = vadd.f32 %v1173, %v1413
    %1415 = vmatmul.f32.gmra.mxu0 %v1191
    %v1416 = vpop.f32.mrf.mxu0
    %v1417 = vadd.f32 %v1173, %v1416
    %1418 = vmatmul.f32.gmra.mxu0 %v1194
    %v1419 = vpop.f32.mrf.mxu0
    %v1420 = vadd.f32 %v1173, %v1419
    %1421 = vmatmul.f32.gmra.mxu0 %v1197
    %v1422 = vpop.f32.mrf.mxu0
    %v1423 = vadd.f32 %v1173, %v1422
    %1424 = vmatmul.f32.gmra.mxu0 %v1200
    %v1425 = vpop.f32.mrf.mxu0
    %v1426 = vadd.f32 %v1173, %v1425
    %1427 = vmatmul.f32.gmra.mxu0 %v1203
    %v1428 = vpop.f32.mrf.mxu0
    %v1429 = vadd.f32 %v1173, %v1428
    %1430 = vmatmul.f32.gmra.mxu0 %v1206
    %v1431 = vpop.f32.mrf.mxu0
    %v1432 = vadd.f32 %v1173, %v1431
    %1433 = vmatmul.f32.gmra.mxu0 %v1209
    %v1434 = vpop.f32.mrf.mxu0
    %v1435 = vadd.f32 %v1173, %v1434
    %1436 = vmatmul.f32.gmra.mxu0 %v1212
    %v1437 = vpop.f32.mrf.mxu0
    %v1438 = vadd.f32 %v1173, %v1437
    %1439 = vmatmul.f32.gmra.mxu0 %v1215
    %v1440 = vpop.f32.mrf.mxu0
    %v1441 = vadd.f32 %v1173, %v1440
    %1442 = vmatmul.f32.gmra.mxu0 %v1218
    %v1443 = vpop.f32.mrf.mxu0
    %v1444 = vadd.f32 %v1173, %v1443
    %1445 = vmatmul.f32.gmra.mxu0 %v1221
    %v1446 = vpop.f32.mrf.mxu0
    %v1447 = vadd.f32 %v1173, %v1446
    %1448 = vmatmul.f32.gmra.mxu0 %v1224
    %v1449 = vpop.f32.mrf.mxu0
    %v1450 = vadd.f32 %v1173, %v1449
    %1451 = vmatmul.f32.gmra.mxu0 %v1227
    %v1452 = vpop.f32.mrf.mxu0
    %v1453 = vadd.f32 %v1173, %v1452
    %1454 = vmatmul.f32.gmra.mxu0 %v1230
    %v1455 = vpop.f32.mrf.mxu0
    %v1456 = vadd.f32 %v1173, %v1455
    %1457 = vmatmul.f32.gmra.mxu0 %v1233
    %v1458 = vpop.f32.mrf.mxu0
    %v1459 = vadd.f32 %v1173, %v1458
    %1460 = vmatmul.f32.gmra.mxu0 %v1236
    %v1461 = vpop.f32.mrf.mxu0
    %v1462 = vadd.f32 %v1173, %v1461
    %1463 = vmatmul.f32.gmra.mxu0 %v1239
    %v1464 = vpop.f32.mrf.mxu0
    %v1465 = vadd.f32 %v1173, %v1464
    %1466 = vmatmul.f32.gmra.mxu0 %v1242
    %v1467 = vpop.f32.mrf.mxu0
    %v1468 = vadd.f32 %v1173, %v1467
    %1469 = vmatmul.f32.gmra.mxu0 %v1245
    %v1470 = vpop.f32.mrf.mxu0
    %v1471 = vadd.f32 %v1173, %v1470
    %1472 = vmatmul.f32.gmra.mxu0 %v1248
    %v1473 = vpop.f32.mrf.mxu0
    %v1474 = vadd.f32 %v1173, %v1473
    %1475 = vmatmul.f32.gmra.mxu0 %v1251
    %v1476 = vpop.f32.mrf.mxu0
    %v1477 = vadd.f32 %v1173, %v1476
    %1478 = vmatmul.f32.gmra.mxu0 %v1254
    %v1479 = vpop.f32.mrf.mxu0
    %v1480 = vadd.f32 %v1173, %v1479
    %1481 = vmatmul.f32.gmra.mxu0 %v1257
    %v1482 = vpop.f32.mrf.mxu0
    %v1483 = vadd.f32 %v1173, %v1482
    %1484 = vmatmul.f32.gmra.mxu0 %v1260
    %v1485 = vpop.f32.mrf.mxu0
    %v1486 = vadd.f32 %v1173, %v1485
    %1487 = vmatmul.f32.gmra.mxu0 %v1263
    %v1488 = vpop.f32.mrf.mxu0
    %v1489 = vadd.f32 %v1173, %v1488
    %1490 = vmatmul.f32.gmra.mxu0 %v1266
    %v1491 = vpop.f32.mrf.mxu0
    %v1492 = vadd.f32 %v1173, %v1491
    %1493 = vmatmul.f32.gmra.mxu0 %v1269
    %v1494 = vpop.f32.mrf.mxu0
    %v1495 = vadd.f32 %v1173, %v1494
    %1496 = vmatmul.f32.gmra.mxu0 %v1272
    %v1497 = vpop.f32.mrf.mxu0
    %v1498 = vadd.f32 %v1173, %v1497
    %1499 = vdwg.mxu0
    %1500 = vmatpush.msra.mxu0 0.0
    %1501 = vmatpush.msra.mxu0 0.0
    %1502 = vmatpush.msra.mxu0 0.0
    %1503 = vmatpush.msra.mxu0 0.0
    %1504 = vmatpush.msra.mxu0 0.0
    %1505 = vmatpush.msra.mxu0 0.0
    %1506 = vmatpush.msra.mxu0 0.0
    %1507 = vmatpush.msra.mxu0 0.0
    %1508 = vmatpush.msra.mxu0 %v1169
    %1509 = vmatpush.msra.mxu0 %v1166
    %1510 = vmatpush.msra.mxu0 %v1163
    %1511 = vmatpush.msra.mxu0 %v1160
    %1512 = vmatpush.msra.mxu0 %v1157
    %1513 = vmatpush.msra.mxu0 %v1154
    %1514 = vmatpush.msra.mxu0 %v1151
    %1515 = vmatpush.msra.mxu0 %v1148
    %1516 = vmatmul.f32.gmra.mxu0 %v1179
    %v1517 = vpop.f32.mrf.mxu0
    %v1518 = vadd.f32 %v1174, %v1517
    %1519 = vmatmul.f32.gmra.mxu0 %v1182
    %v1520 = vpop.f32.mrf.mxu0
    %v1521 = vadd.f32 %v1174, %v1520
    %1522 = vmatmul.f32.gmra.mxu0 %v1185
    %v1523 = vpop.f32.mrf.mxu0
    %v1524 = vadd.f32 %v1174, %v1523
    %1525 = vmatmul.f32.gmra.mxu0 %v1188
    %v1526 = vpop.f32.mrf.mxu0
    %v1527 = vadd.f32 %v1174, %v1526
    %1528 = vmatmul.f32.gmra.mxu0 %v1191
    %v1529 = vpop.f32.mrf.mxu0
    %v1530 = vadd.f32 %v1174, %v1529
    %1531 = vmatmul.f32.gmra.mxu0 %v1194
    %v1532 = vpop.f32.mrf.mxu0
    %v1533 = vadd.f32 %v1174, %v1532
    %1534 = vmatmul.f32.gmra.mxu0 %v1197
    %v1535 = vpop.f32.mrf.mxu0
    %v1536 = vadd.f32 %v1174, %v1535
    %1537 = vmatmul.f32.gmra.mxu0 %v1200
    %v1538 = vpop.f32.mrf.mxu0
    %v1539 = vadd.f32 %v1174, %v1538
    %1540 = vmatmul.f32.gmra.mxu0 %v1203
    %v1541 = vpop.f32.mrf.mxu0
    %v1542 = vadd.f32 %v1174, %v1541
    %1543 = vmatmul.f32.gmra.mxu0 %v1206
    %v1544 = vpop.f32.mrf.mxu0
    %v1545 = vadd.f32 %v1174, %v1544
    %1546 = vmatmul.f32.gmra.mxu0 %v1209
    %v1547 = vpop.f32.mrf.mxu0
    %v1548 = vadd.f32 %v1174, %v1547
    %1549 = vmatmul.f32.gmra.mxu0 %v1212
    %v1550 = vpop.f32.mrf.mxu0
    %v1551 = vadd.f32 %v1174, %v1550
    %1552 = vmatmul.f32.gmra.mxu0 %v1215
    %v1553 = vpop.f32.mrf.mxu0
    %v1554 = vadd.f32 %v1174, %v1553
    %1555 = vmatmul.f32.gmra.mxu0 %v1218
    %v1556 = vpop.f32.mrf.mxu0
    %v1557 = vadd.f32 %v1174, %v1556
    %1558 = vmatmul.f32.gmra.mxu0 %v1221
    %v1559 = vpop.f32.mrf.mxu0
    %v1560 = vadd.f32 %v1174, %v1559
    %1561 = vmatmul.f32.gmra.mxu0 %v1224
    %v1562 = vpop.f32.mrf.mxu0
    %v1563 = vadd.f32 %v1174, %v1562
    %1564 = vmatmul.f32.gmra.mxu0 %v1227
    %v1565 = vpop.f32.mrf.mxu0
    %v1566 = vadd.f32 %v1174, %v1565
    %1567 = vmatmul.f32.gmra.mxu0 %v1230
    %v1568 = vpop.f32.mrf.mxu0
    %v1569 = vadd.f32 %v1174, %v1568
    %1570 = vmatmul.f32.gmra.mxu0 %v1233
    %v1571 = vpop.f32.mrf.mxu0
    %v1572 = vadd.f32 %v1174, %v1571
    %1573 = vmatmul.f32.gmra.mxu0 %v1236
    %v1574 = vpop.f32.mrf.mxu0
    %v1575 = vadd.f32 %v1174, %v1574
    %1576 = vmatmul.f32.gmra.mxu0 %v1239
    %v1577 = vpop.f32.mrf.mxu0
    %v1578 = vadd.f32 %v1174, %v1577
    %1579 = vmatmul.f32.gmra.mxu0 %v1242
    %v1580 = vpop.f32.mrf.mxu0
    %v1581 = vadd.f32 %v1174, %v1580
    %1582 = vmatmul.f32.gmra.mxu0 %v1245
    %v1583 = vpop.f32.mrf.mxu0
    %v1584 = vadd.f32 %v1174, %v1583
    %1585 = vmatmul.f32.gmra.mxu0 %v1248
    %v1586 = vpop.f32.mrf.mxu0
    %v1587 = vadd.f32 %v1174, %v1586
    %1588 = vmatmul.f32.gmra.mxu0 %v1251
    %v1589 = vpop.f32.mrf.mxu0
    %v1590 = vadd.f32 %v1174, %v1589
    %1591 = vmatmul.f32.gmra.mxu0 %v1254
    %v1592 = vpop.f32.mrf.mxu0
    %v1593 = vadd.f32 %v1174, %v1592
    %1594 = vmatmul.f32.gmra.mxu0 %v1257
    %v1595 = vpop.f32.mrf.mxu0
    %v1596 = vadd.f32 %v1174, %v1595
    %1597 = vmatmul.f32.gmra.mxu0 %v1260
    %v1598 = vpop.f32.mrf.mxu0
    %v1599 = vadd.f32 %v1174, %v1598
    %1600 = vmatmul.f32.gmra.mxu0 %v1263
    %v1601 = vpop.f32.mrf.mxu0
    %v1602 = vadd.f32 %v1174, %v1601
    %1603 = vmatmul.f32.gmra.mxu0 %v1266
    %v1604 = vpop.f32.mrf.mxu0
    %v1605 = vadd.f32 %v1174, %v1604
    %1606 = vmatmul.f32.gmra.mxu0 %v1269
    %v1607 = vpop.f32.mrf.mxu0
    %v1608 = vadd.f32 %v1174, %v1607
    %1609 = vmatmul.f32.gmra.mxu0 %v1272
    %v1610 = vpop.f32.mrf.mxu0
    %v1611 = vadd.f32 %v1174, %v1610
    %1612 = vdwg.mxu0
    %v1613 = vmul.f32 %v1292, %v1292
    %v1614 = vmul.f32 %v1295, %v1295
    %v1615 = vmul.f32 %v1298, %v1298
    %v1616 = vmul.f32 %v1301, %v1301
    %v1617 = vmul.f32 %v1304, %v1304
    %v1618 = vmul.f32 %v1307, %v1307
    %v1619 = vmul.f32 %v1310, %v1310
    %v1620 = vmul.f32 %v1313, %v1313
    %v1621 = vmul.f32 %v1316, %v1316
    %v1622 = vmul.f32 %v1319, %v1319
    %v1623 = vmul.f32 %v1322, %v1322
    %v1624 = vmul.f32 %v1325, %v1325
    %v1625 = vmul.f32 %v1328, %v1328
    %v1626 = vmul.f32 %v1331, %v1331
    %v1627 = vmul.f32 %v1334, %v1334
    %v1628 = vmul.f32 %v1337, %v1337
    %v1629 = vmul.f32 %v1340, %v1340
    %v1630 = vmul.f32 %v1343, %v1343
    %v1631 = vmul.f32 %v1346, %v1346
    %v1632 = vmul.f32 %v1349, %v1349
    %v1633 = vmul.f32 %v1352, %v1352
    %v1634 = vmul.f32 %v1355, %v1355
    %v1635 = vmul.f32 %v1358, %v1358
    %v1636 = vmul.f32 %v1361, %v1361
    %v1637 = vmul.f32 %v1364, %v1364
    %v1638 = vmul.f32 %v1367, %v1367
    %v1639 = vmul.f32 %v1370, %v1370
    %v1640 = vmul.f32 %v1373, %v1373
    %v1641 = vmul.f32 %v1376, %v1376
    %v1642 = vmul.f32 %v1379, %v1379
    %v1643 = vmul.f32 %v1382, %v1382
    %v1644 = vmul.f32 %v1385, %v1385
    %v1645 = vadd.f32 %v1613, %v1614
    %v1646 = vadd.f32 %v1645, %v1615
    %v1647 = vadd.f32 %v1646, %v1616
    %v1648 = vadd.f32 %v1647, %v1617
    %v1649 = vadd.f32 %v1648, %v1618
    %v1650 = vadd.f32 %v1649, %v1619
    %v1651 = vadd.f32 %v1650, %v1620
    %v1652 = vadd.f32 %v1651, %v1621
    %v1653 = vadd.f32 %v1652, %v1622
    %v1654 = vadd.f32 %v1653, %v1623
    %v1655 = vadd.f32 %v1654, %v1624
    %v1656 = vadd.f32 %v1655, %v1625
    %v1657 = vadd.f32 %v1656, %v1626
    %v1658 = vadd.f32 %v1657, %v1627
    %v1659 = vadd.f32 %v1658, %v1628
    %v1660 = vadd.f32 %v1659, %v1629
    %v1661 = vadd.f32 %v1660, %v1630
    %v1662 = vadd.f32 %v1661, %v1631
    %v1663 = vadd.f32 %v1662, %v1632
    %v1664 = vadd.f32 %v1663, %v1633
    %v1665 = vadd.f32 %v1664, %v1634
    %v1666 = vadd.f32 %v1665, %v1635
    %v1667 = vadd.f32 %v1666, %v1636
    %v1668 = vadd.f32 %v1667, %v1637
    %v1669 = vadd.f32 %v1668, %v1638
    %v1670 = vadd.f32 %v1669, %v1639
    %v1671 = vadd.f32 %v1670, %v1640
    %v1672 = vadd.f32 %v1671, %v1641
    %v1673 = vadd.f32 %v1672, %v1642
    %v1674 = vadd.f32 %v1673, %v1643
    %v1675 = vadd.f32 %v1674, %v1644
    %1676 = vadd.xlane.f32.xlu0 %v1675
    %v1677 = vpop.xlane.xlu0 %1676
    %v1678 = vrot.slane %v1677, 4
    %v1679 = vadd.f32 %v1677, %v1678
    %v1680 = vrot.slane %v1679, 2
    %v1681 = vadd.f32 %v1679, %v1680
    %v1682 = vrot.slane %v1681, 1
    %v1683 = vadd.f32 %v1681, %v1682
    %s1684 = vtos %v1683
    %v1685 = vstv %s1684
    %v1686 = vrsqrt.pop %v1685
    %v1687 = vmul.f32 %v1686, %v1685
    %v1688 = vmul.f32 %v1687, %v1686
    %v1689 = vmul.f32 0.5, %v1688
    %v1690 = vsub.f32 1.5, %v1689
    %v1691 = vmul.f32 %v1686, %v1690
    %vm1692 = vweird.f32 %v1685
    %vm1693 = vweird.f32 %v1686
    %vm1694 = vmor %vm1692, %vm1693
    %v1695 = vsel %vm1694, %v1686, %v1691
    %s1696 = vtos %v1695
    %v1697 = vmul.f32 %v1405, %v1405
    %v1698 = vmul.f32 %v1408, %v1408
    %v1699 = vmul.f32 %v1411, %v1411
    %v1700 = vmul.f32 %v1414, %v1414
    %v1701 = vmul.f32 %v1417, %v1417
    %v1702 = vmul.f32 %v1420, %v1420
    %v1703 = vmul.f32 %v1423, %v1423
    %v1704 = vmul.f32 %v1426, %v1426
    %v1705 = vmul.f32 %v1429, %v1429
    %v1706 = vmul.f32 %v1432, %v1432
    %v1707 = vmul.f32 %v1435, %v1435
    %v1708 = vmul.f32 %v1438, %v1438
    %v1709 = vmul.f32 %v1441, %v1441
    %v1710 = vmul.f32 %v1444, %v1444
    %v1711 = vmul.f32 %v1447, %v1447
    %v1712 = vmul.f32 %v1450, %v1450
    %v1713 = vmul.f32 %v1453, %v1453
    %v1714 = vmul.f32 %v1456, %v1456
    %v1715 = vmul.f32 %v1459, %v1459
    %v1716 = vmul.f32 %v1462, %v1462
    %v1717 = vmul.f32 %v1465, %v1465
    %v1718 = vmul.f32 %v1468, %v1468
    %v1719 = vmul.f32 %v1471, %v1471
    %v1720 = vmul.f32 %v1474, %v1474
    %v1721 = vmul.f32 %v1477, %v1477
    %v1722 = vmul.f32 %v1480, %v1480
    %v1723 = vmul.f32 %v1483, %v1483
    %v1724 = vmul.f32 %v1486, %v1486
    %v1725 = vmul.f32 %v1489, %v1489
    %v1726 = vmul.f32 %v1492, %v1492
    %v1727 = vmul.f32 %v1495, %v1495
    %v1728 = vmul.f32 %v1498, %v1498
    %v1729 = vadd.f32 %v1697, %v1698
    %v1730 = vadd.f32 %v1729, %v1699
    %v1731 = vadd.f32 %v1730, %v1700
    %v1732 = vadd.f32 %v1731, %v1701
    %v1733 = vadd.f32 %v1732, %v1702
    %v1734 = vadd.f32 %v1733, %v1703
    %v1735 = vadd.f32 %v1734, %v1704
    %v1736 = vadd.f32 %v1735, %v1705
    %v1737 = vadd.f32 %v1736, %v1706
    %v1738 = vadd.f32 %v1737, %v1707
    %v1739 = vadd.f32 %v1738, %v1708
    %v1740 = vadd.f32 %v1739, %v1709
    %v1741 = vadd.f32 %v1740, %v1710
    %v1742 = vadd.f32 %v1741, %v1711
    %v1743 = vadd.f32 %v1742, %v1712
    %v1744 = vadd.f32 %v1743, %v1713
    %v1745 = vadd.f32 %v1744, %v1714
    %v1746 = vadd.f32 %v1745, %v1715
    %v1747 = vadd.f32 %v1746, %v1716
    %v1748 = vadd.f32 %v1747, %v1717
    %v1749 = vadd.f32 %v1748, %v1718
    %v1750 = vadd.f32 %v1749, %v1719
    %v1751 = vadd.f32 %v1750, %v1720
    %v1752 = vadd.f32 %v1751, %v1721
    %v1753 = vadd.f32 %v1752, %v1722
    %v1754 = vadd.f32 %v1753, %v1723
    %v1755 = vadd.f32 %v1754, %v1724
    %v1756 = vadd.f32 %v1755, %v1725
    %v1757 = vadd.f32 %v1756, %v1726
    %v1758 = vadd.f32 %v1757, %v1727
    %v1759 = vadd.f32 %v1758, %v1728
    %1760 = vadd.xlane.f32.xlu0 %v1759
    %v1761 = vpop.xlane.xlu0 %1760
    %v1762 = vrot.slane %v1761, 4
    %v1763 = vadd.f32 %v1761, %v1762
    %v1764 = vrot.slane %v1763, 2
    %v1765 = vadd.f32 %v1763, %v1764
    %v1766 = vrot.slane %v1765, 1
    %v1767 = vadd.f32 %v1765, %v1766
    %s1768 = vtos %v1767
    %v1769 = vstv %s1768
    %v1770 = vrsqrt.pop %v1769
    %v1771 = vmul.f32 %v1770, %v1769
    %v1772 = vmul.f32 %v1771, %v1770
    %v1773 = vmul.f32 0.5, %v1772
    %v1774 = vsub.f32 1.5, %v1773
    %v1775 = vmul.f32 %v1770, %v1774
    %vm1776 = vweird.f32 %v1769
    %vm1777 = vweird.f32 %v1770
    %vm1778 = vmor %vm1776, %vm1777
    %v1779 = vsel %vm1778, %v1770, %v1775
    %s1780 = vtos %v1779
    %s1781 = smul.f32 %s1696, %s1780
    %1782 = vxpose.xlu0.b32.start [1/16] %v1405, 128
    %1783 = vxpose.xlu0.b32.cont [2/16] %v1408, 128
    %1784 = vxpose.xlu0.b32.cont [3/16] %v1411, 128
    %1785 = vxpose.xlu0.b32.cont [4/16] %v1414, 128
    %1786 = vxpose.xlu0.b32.cont [5/16] %v1417, 128
    %1787 = vxpose.xlu0.b32.cont [6/16] %v1420, 128
    %1788 = vxpose.xlu0.b32.cont [7/16] %v1423, 128
    %1789 = vxpose.xlu0.b32.cont [8/16] %v1426, 128
    %1790 = vxpose.xlu0.b32.cont [9/16] %v1429, 128
    %1791 = vxpose.xlu0.b32.cont [10/16] %v1432, 128
    %1792 = vxpose.xlu0.b32.cont [11/16] %v1435, 128
    %1793 = vxpose.xlu0.b32.cont [12/16] %v1438, 128
    %1794 = vxpose.xlu0.b32.cont [13/16] %v1441, 128
    %1795 = vxpose.xlu0.b32.cont [14/16] %v1444, 128
    %1796 = vxpose.xlu0.b32.cont [15/16] %v1447, 128
    %1797 = vxpose.xlu0.b32.end [16/16] %v1450, 128
    %v1798 = vpop.trf.xlu0
    %v1799 = vpop.trf.xlu0
    %v1800 = vpop.trf.xlu0
    %v1801 = vpop.trf.xlu0
    %v1802 = vpop.trf.xlu0
    %v1803 = vpop.trf.xlu0
    %v1804 = vpop.trf.xlu0
    %v1805 = vpop.trf.xlu0
    %v1806 = vpop.trf.xlu0
    %v1807 = vpop.trf.xlu0
    %v1808 = vpop.trf.xlu0
    %v1809 = vpop.trf.xlu0
    %v1810 = vpop.trf.xlu0
    %v1811 = vpop.trf.xlu0
    %v1812 = vpop.trf.xlu0
    %v1813 = vpop.trf.xlu0
    %1814 = vxpose.xlu0.b32.start [1/16] %v1453, 128
    %1815 = vxpose.xlu0.b32.cont [2/16] %v1456, 128
    %1816 = vxpose.xlu0.b32.cont [3/16] %v1459, 128
    %1817 = vxpose.xlu0.b32.cont [4/16] %v1462, 128
    %1818 = vxpose.xlu0.b32.cont [5/16] %v1465, 128
    %1819 = vxpose.xlu0.b32.cont [6/16] %v1468, 128
    %1820 = vxpose.xlu0.b32.cont [7/16] %v1471, 128
    %1821 = vxpose.xlu0.b32.cont [8/16] %v1474, 128
    %1822 = vxpose.xlu0.b32.cont [9/16] %v1477, 128
    %1823 = vxpose.xlu0.b32.cont [10/16] %v1480, 128
    %1824 = vxpose.xlu0.b32.cont [11/16] %v1483, 128
    %1825 = vxpose.xlu0.b32.cont [12/16] %v1486, 128
    %1826 = vxpose.xlu0.b32.cont [13/16] %v1489, 128
    %1827 = vxpose.xlu0.b32.cont [14/16] %v1492, 128
    %1828 = vxpose.xlu0.b32.cont [15/16] %v1495, 128
    %1829 = vxpose.xlu0.b32.end [16/16] %v1498, 128
    %v1830 = vpop.trf.xlu0
    %v1831 = vpop.trf.xlu0
    %v1832 = vpop.trf.xlu0
    %v1833 = vpop.trf.xlu0
    %v1834 = vpop.trf.xlu0
    %v1835 = vpop.trf.xlu0
    %v1836 = vpop.trf.xlu0
    %v1837 = vpop.trf.xlu0
    %v1838 = vpop.trf.xlu0
    %v1839 = vpop.trf.xlu0
    %v1840 = vpop.trf.xlu0
    %v1841 = vpop.trf.xlu0
    %v1842 = vpop.trf.xlu0
    %v1843 = vpop.trf.xlu0
    %v1844 = vpop.trf.xlu0
    %v1845 = vpop.trf.xlu0
    %1846 = vmatpush.msra.mxu0 %v1563
    %1847 = vmatpush.msra.mxu0 %v1560
    %1848 = vmatpush.msra.mxu0 %v1557
    %1849 = vmatpush.msra.mxu0 %v1554
    %1850 = vmatpush.msra.mxu0 %v1551
    %1851 = vmatpush.msra.mxu0 %v1548
    %1852 = vmatpush.msra.mxu0 %v1545
    %1853 = vmatpush.msra.mxu0 %v1542
    %1854 = vmatpush.msra.mxu0 %v1539
    %1855 = vmatpush.msra.mxu0 %v1536
    %1856 = vmatpush.msra.mxu0 %v1533
    %1857 = vmatpush.msra.mxu0 %v1530
    %1858 = vmatpush.msra.mxu0 %v1527
    %1859 = vmatpush.msra.mxu0 %v1524
    %1860 = vmatpush.msra.mxu0 %v1521
    %1861 = vmatpush.msra.mxu0 %v1518
    %1862 = vmatmul.f32.gmra.mxu0 %v1798
    %v1863 = vpop.f32.mrf.mxu0
    %v1864 = vadd.f32 0.0, %v1863
    %1865 = vmatmul.f32.gmra.mxu0 %v1799
    %v1866 = vpop.f32.mrf.mxu0
    %v1867 = vadd.f32 0.0, %v1866
    %1868 = vmatmul.f32.gmra.mxu0 %v1800
    %v1869 = vpop.f32.mrf.mxu0
    %v1870 = vadd.f32 0.0, %v1869
    %1871 = vmatmul.f32.gmra.mxu0 %v1801
    %v1872 = vpop.f32.mrf.mxu0
    %v1873 = vadd.f32 0.0, %v1872
    %1874 = vmatmul.f32.gmra.mxu0 %v1802
    %v1875 = vpop.f32.mrf.mxu0
    %v1876 = vadd.f32 0.0, %v1875
    %1877 = vmatmul.f32.gmra.mxu0 %v1803
    %v1878 = vpop.f32.mrf.mxu0
    %v1879 = vadd.f32 0.0, %v1878
    %1880 = vmatmul.f32.gmra.mxu0 %v1804
    %v1881 = vpop.f32.mrf.mxu0
    %v1882 = vadd.f32 0.0, %v1881
    %1883 = vmatmul.f32.gmra.mxu0 %v1805
    %v1884 = vpop.f32.mrf.mxu0
    %v1885 = vadd.f32 0.0, %v1884
    %1886 = vmatmul.f32.gmra.mxu0 %v1806
    %v1887 = vpop.f32.mrf.mxu0
    %v1888 = vadd.f32 0.0, %v1887
    %1889 = vmatmul.f32.gmra.mxu0 %v1807
    %v1890 = vpop.f32.mrf.mxu0
    %v1891 = vadd.f32 0.0, %v1890
    %1892 = vmatmul.f32.gmra.mxu0 %v1808
    %v1893 = vpop.f32.mrf.mxu0
    %v1894 = vadd.f32 0.0, %v1893
    %1895 = vmatmul.f32.gmra.mxu0 %v1809
    %v1896 = vpop.f32.mrf.mxu0
    %v1897 = vadd.f32 0.0, %v1896
    %1898 = vmatmul.f32.gmra.mxu0 %v1810
    %v1899 = vpop.f32.mrf.mxu0
    %v1900 = vadd.f32 0.0, %v1899
    %1901 = vmatmul.f32.gmra.mxu0 %v1811
    %v1902 = vpop.f32.mrf.mxu0
    %v1903 = vadd.f32 0.0, %v1902
    %1904 = vmatmul.f32.gmra.mxu0 %v1812
    %v1905 = vpop.f32.mrf.mxu0
    %v1906 = vadd.f32 0.0, %v1905
    %1907 = vmatmul.f32.gmra.mxu0 %v1813
    %v1908 = vpop.f32.mrf.mxu0
    %v1909 = vadd.f32 0.0, %v1908
    %1910 = vdwg.mxu0
    %1911 = vmatpush.msra.mxu0 %v1611
    %1912 = vmatpush.msra.mxu0 %v1608
    %1913 = vmatpush.msra.mxu0 %v1605
    %1914 = vmatpush.msra.mxu0 %v1602
    %1915 = vmatpush.msra.mxu0 %v1599
    %1916 = vmatpush.msra.mxu0 %v1596
    %1917 = vmatpush.msra.mxu0 %v1593
    %1918 = vmatpush.msra.mxu0 %v1590
    %1919 = vmatpush.msra.mxu0 %v1587
    %1920 = vmatpush.msra.mxu0 %v1584
    %1921 = vmatpush.msra.mxu0 %v1581
    %1922 = vmatpush.msra.mxu0 %v1578
    %1923 = vmatpush.msra.mxu0 %v1575
    %1924 = vmatpush.msra.mxu0 %v1572
    %1925 = vmatpush.msra.mxu0 %v1569
    %1926 = vmatpush.msra.mxu0 %v1566
    %1927 = vmatmul.f32.gmra.mxu0 %v1830
    %v1928 = vpop.f32.mrf.mxu0
    %v1929 = vadd.f32 %v1864, %v1928
    %1930 = vmatmul.f32.gmra.mxu0 %v1831
    %v1931 = vpop.f32.mrf.mxu0
    %v1932 = vadd.f32 %v1867, %v1931
    %1933 = vmatmul.f32.gmra.mxu0 %v1832
    %v1934 = vpop.f32.mrf.mxu0
    %v1935 = vadd.f32 %v1870, %v1934
    %1936 = vmatmul.f32.gmra.mxu0 %v1833
    %v1937 = vpop.f32.mrf.mxu0
    %v1938 = vadd.f32 %v1873, %v1937
    %1939 = vmatmul.f32.gmra.mxu0 %v1834
    %v1940 = vpop.f32.mrf.mxu0
    %v1941 = vadd.f32 %v1876, %v1940
    %1942 = vmatmul.f32.gmra.mxu0 %v1835
    %v1943 = vpop.f32.mrf.mxu0
    %v1944 = vadd.f32 %v1879, %v1943
    %1945 = vmatmul.f32.gmra.mxu0 %v1836
    %v1946 = vpop.f32.mrf.mxu0
    %v1947 = vadd.f32 %v1882, %v1946
    %1948 = vmatmul.f32.gmra.mxu0 %v1837
    %v1949 = vpop.f32.mrf.mxu0
    %v1950 = vadd.f32 %v1885, %v1949
    %1951 = vmatmul.f32.gmra.mxu0 %v1838
    %v1952 = vpop.f32.mrf.mxu0
    %v1953 = vadd.f32 %v1888, %v1952
    %1954 = vmatmul.f32.gmra.mxu0 %v1839
    %v1955 = vpop.f32.mrf.mxu0
    %v1956 = vadd.f32 %v1891, %v1955
    %1957 = vmatmul.f32.gmra.mxu0 %v1840
    %v1958 = vpop.f32.mrf.mxu0
    %v1959 = vadd.f32 %v1894, %v1958
    %1960 = vmatmul.f32.gmra.mxu0 %v1841
    %v1961 = vpop.f32.mrf.mxu0
    %v1962 = vadd.f32 %v1897, %v1961
    %1963 = vmatmul.f32.gmra.mxu0 %v1842
    %v1964 = vpop.f32.mrf.mxu0
    %v1965 = vadd.f32 %v1900, %v1964
    %1966 = vmatmul.f32.gmra.mxu0 %v1843
    %v1967 = vpop.f32.mrf.mxu0
    %v1968 = vadd.f32 %v1903, %v1967
    %1969 = vmatmul.f32.gmra.mxu0 %v1844
    %v1970 = vpop.f32.mrf.mxu0
    %v1971 = vadd.f32 %v1906, %v1970
    %1972 = vmatmul.f32.gmra.mxu0 %v1845
    %v1973 = vpop.f32.mrf.mxu0
    %v1974 = vadd.f32 %v1909, %v1973
    %1975 = vdwg.mxu0
    %v1976 = vadd.f32 %v1405, %v1408
    %v1977 = vadd.f32 %v1976, %v1411
    %v1978 = vadd.f32 %v1977, %v1414
    %v1979 = vadd.f32 %v1978, %v1417
    %v1980 = vadd.f32 %v1979, %v1420
    %v1981 = vadd.f32 %v1980, %v1423
    %v1982 = vadd.f32 %v1981, %v1426
    %v1983 = vadd.f32 %v1982, %v1429
    %v1984 = vadd.f32 %v1983, %v1432
    %v1985 = vadd.f32 %v1984, %v1435
    %v1986 = vadd.f32 %v1985, %v1438
    %v1987 = vadd.f32 %v1986, %v1441
    %v1988 = vadd.f32 %v1987, %v1444
    %v1989 = vadd.f32 %v1988, %v1447
    %v1990 = vadd.f32 %v1989, %v1450
    %v1991 = vadd.f32 %v1990, %v1453
    %v1992 = vadd.f32 %v1991, %v1456
    %v1993 = vadd.f32 %v1992, %v1459
    %v1994 = vadd.f32 %v1993, %v1462
    %v1995 = vadd.f32 %v1994, %v1465
    %v1996 = vadd.f32 %v1995, %v1468
    %v1997 = vadd.f32 %v1996, %v1471
    %v1998 = vadd.f32 %v1997, %v1474
    %v1999 = vadd.f32 %v1998, %v1477
    %v2000 = vadd.f32 %v1999, %v1480
    %v2001 = vadd.f32 %v2000, %v1483
    %v2002 = vadd.f32 %v2001, %v1486
    %v2003 = vadd.f32 %v2002, %v1489
    %v2004 = vadd.f32 %v2003, %v1492
    %v2005 = vadd.f32 %v2004, %v1495
    %v2006 = vadd.f32 %v2005, %v1498
    %v2007 = vrot.slane %v2006, 4
    %v2008 = vadd.f32 %v2006, %v2007
    %v2009 = vrot.slane %v2008, 2
    %v2010 = vadd.f32 %v2008, %v2009
    %v2011 = vrot.slane %v2010, 1
    %v2012 = vadd.f32 %v2010, %v2011
    %v2013 = vmul.f32 %v1929, %v1114
    %v2014 = vmul.f32 %v1932, %v1115
    %v2015 = vmul.f32 %v1935, %v1116
    %v2016 = vmul.f32 %v1938, %v1117
    %v2017 = vmul.f32 %v1941, %v1118
    %v2018 = vmul.f32 %v1944, %v1119
    %v2019 = vmul.f32 %v1947, %v1120
    %v2020 = vmul.f32 %v1950, %v1121
    %v2021 = vmul.f32 %v1953, %v1122
    %v2022 = vmul.f32 %v1956, %v1123
    %v2023 = vmul.f32 %v1959, %v1124
    %v2024 = vmul.f32 %v1962, %v1125
    %v2025 = vmul.f32 %v1965, %v1126
    %v2026 = vmul.f32 %v1968, %v1127
    %v2027 = vmul.f32 %v1971, %v1128
    %v2028 = vmul.f32 %v1974, %v1129
    %2029 = vmatpush.msra.mxu0 %v2028
    %2030 = vmatpush.msra.mxu0 %v2027
    %2031 = vmatpush.msra.mxu0 %v2026
    %2032 = vmatpush.msra.mxu0 %v2025
    %2033 = vmatpush.msra.mxu0 %v2024
    %2034 = vmatpush.msra.mxu0 %v2023
    %2035 = vmatpush.msra.mxu0 %v2022
    %2036 = vmatpush.msra.mxu0 %v2021
    %2037 = vmatpush.msra.mxu0 %v2020
    %2038 = vmatpush.msra.mxu0 %v2019
    %2039 = vmatpush.msra.mxu0 %v2018
    %2040 = vmatpush.msra.mxu0 %v2017
    %2041 = vmatpush.msra.mxu0 %v2016
    %2042 = vmatpush.msra.mxu0 %v2015
    %2043 = vmatpush.msra.mxu0 %v2014
    %2044 = vmatpush.msra.mxu0 %v2013
    %2045 = vmatmul.f32.gmra.mxu0 %v1292
    %v2046 = vpop.f32.mrf.mxu0
    %v2047 = vadd.f32 0.0, %v2046
    %2048 = vmatmul.f32.gmra.mxu0 %v1295
    %v2049 = vpop.f32.mrf.mxu0
    %v2050 = vadd.f32 0.0, %v2049
    %2051 = vmatmul.f32.gmra.mxu0 %v1298
    %v2052 = vpop.f32.mrf.mxu0
    %v2053 = vadd.f32 0.0, %v2052
    %2054 = vmatmul.f32.gmra.mxu0 %v1301
    %v2055 = vpop.f32.mrf.mxu0
    %v2056 = vadd.f32 0.0, %v2055
    %2057 = vmatmul.f32.gmra.mxu0 %v1304
    %v2058 = vpop.f32.mrf.mxu0
    %v2059 = vadd.f32 0.0, %v2058
    %2060 = vmatmul.f32.gmra.mxu0 %v1307
    %v2061 = vpop.f32.mrf.mxu0
    %v2062 = vadd.f32 0.0, %v2061
    %2063 = vmatmul.f32.gmra.mxu0 %v1310
    %v2064 = vpop.f32.mrf.mxu0
    %v2065 = vadd.f32 0.0, %v2064
    %2066 = vmatmul.f32.gmra.mxu0 %v1313
    %v2067 = vpop.f32.mrf.mxu0
    %v2068 = vadd.f32 0.0, %v2067
    %2069 = vmatmul.f32.gmra.mxu0 %v1316
    %v2070 = vpop.f32.mrf.mxu0
    %v2071 = vadd.f32 0.0, %v2070
    %2072 = vmatmul.f32.gmra.mxu0 %v1319
    %v2073 = vpop.f32.mrf.mxu0
    %v2074 = vadd.f32 0.0, %v2073
    %2075 = vmatmul.f32.gmra.mxu0 %v1322
    %v2076 = vpop.f32.mrf.mxu0
    %v2077 = vadd.f32 0.0, %v2076
    %2078 = vmatmul.f32.gmra.mxu0 %v1325
    %v2079 = vpop.f32.mrf.mxu0
    %v2080 = vadd.f32 0.0, %v2079
    %2081 = vmatmul.f32.gmra.mxu0 %v1328
    %v2082 = vpop.f32.mrf.mxu0
    %v2083 = vadd.f32 0.0, %v2082
    %2084 = vmatmul.f32.gmra.mxu0 %v1331
    %v2085 = vpop.f32.mrf.mxu0
    %v2086 = vadd.f32 0.0, %v2085
    %2087 = vmatmul.f32.gmra.mxu0 %v1334
    %v2088 = vpop.f32.mrf.mxu0
    %v2089 = vadd.f32 0.0, %v2088
    %2090 = vmatmul.f32.gmra.mxu0 %v1337
    %v2091 = vpop.f32.mrf.mxu0
    %v2092 = vadd.f32 0.0, %v2091
    %2093 = vmatmul.f32.gmra.mxu0 %v1340
    %v2094 = vpop.f32.mrf.mxu0
    %v2095 = vadd.f32 0.0, %v2094
    %2096 = vmatmul.f32.gmra.mxu0 %v1343
    %v2097 = vpop.f32.mrf.mxu0
    %v2098 = vadd.f32 0.0, %v2097
    %2099 = vmatmul.f32.gmra.mxu0 %v1346
    %v2100 = vpop.f32.mrf.mxu0
    %v2101 = vadd.f32 0.0, %v2100
    %2102 = vmatmul.f32.gmra.mxu0 %v1349
    %v2103 = vpop.f32.mrf.mxu0
    %v2104 = vadd.f32 0.0, %v2103
    %2105 = vmatmul.f32.gmra.mxu0 %v1352
    %v2106 = vpop.f32.mrf.mxu0
    %v2107 = vadd.f32 0.0, %v2106
    %2108 = vmatmul.f32.gmra.mxu0 %v1355
    %v2109 = vpop.f32.mrf.mxu0
    %v2110 = vadd.f32 0.0, %v2109
    %2111 = vmatmul.f32.gmra.mxu0 %v1358
    %v2112 = vpop.f32.mrf.mxu0
    %v2113 = vadd.f32 0.0, %v2112
    %2114 = vmatmul.f32.gmra.mxu0 %v1361
    %v2115 = vpop.f32.mrf.mxu0
    %v2116 = vadd.f32 0.0, %v2115
    %2117 = vmatmul.f32.gmra.mxu0 %v1364
    %v2118 = vpop.f32.mrf.mxu0
    %v2119 = vadd.f32 0.0, %v2118
    %2120 = vmatmul.f32.gmra.mxu0 %v1367
    %v2121 = vpop.f32.mrf.mxu0
    %v2122 = vadd.f32 0.0, %v2121
    %2123 = vmatmul.f32.gmra.mxu0 %v1370
    %v2124 = vpop.f32.mrf.mxu0
    %v2125 = vadd.f32 0.0, %v2124
    %2126 = vmatmul.f32.gmra.mxu0 %v1373
    %v2127 = vpop.f32.mrf.mxu0
    %v2128 = vadd.f32 0.0, %v2127
    %2129 = vmatmul.f32.gmra.mxu0 %v1376
    %v2130 = vpop.f32.mrf.mxu0
    %v2131 = vadd.f32 0.0, %v2130
    %2132 = vmatmul.f32.gmra.mxu0 %v1379
    %v2133 = vpop.f32.mrf.mxu0
    %v2134 = vadd.f32 0.0, %v2133
    %2135 = vmatmul.f32.gmra.mxu0 %v1382
    %v2136 = vpop.f32.mrf.mxu0
    %v2137 = vadd.f32 0.0, %v2136
    %2138 = vmatmul.f32.gmra.mxu0 %v1385
    %v2139 = vpop.f32.mrf.mxu0
    %v2140 = vadd.f32 0.0, %v2139
    %2141 = vdwg.mxu0
    %v2142 = vstv %s1781
    %v2143 = vmul.f32 %v2142, %v2047
    %v2144 = vmul.f32 %v2142, %v2050
    %v2145 = vmul.f32 %v2142, %v2053
    %v2146 = vmul.f32 %v2142, %v2056
    %v2147 = vmul.f32 %v2142, %v2059
    %v2148 = vmul.f32 %v2142, %v2062
    %v2149 = vmul.f32 %v2142, %v2065
    %v2150 = vmul.f32 %v2142, %v2068
    %v2151 = vmul.f32 %v2142, %v2071
    %v2152 = vmul.f32 %v2142, %v2074
    %v2153 = vmul.f32 %v2142, %v2077
    %v2154 = vmul.f32 %v2142, %v2080
    %v2155 = vmul.f32 %v2142, %v2083
    %v2156 = vmul.f32 %v2142, %v2086
    %v2157 = vmul.f32 %v2142, %v2089
    %v2158 = vmul.f32 %v2142, %v2092
    %v2159 = vmul.f32 %v2142, %v2095
    %v2160 = vmul.f32 %v2142, %v2098
    %v2161 = vmul.f32 %v2142, %v2101
    %v2162 = vmul.f32 %v2142, %v2104
    %v2163 = vmul.f32 %v2142, %v2107
    %v2164 = vmul.f32 %v2142, %v2110
    %v2165 = vmul.f32 %v2142, %v2113
    %v2166 = vmul.f32 %v2142, %v2116
    %v2167 = vmul.f32 %v2142, %v2119
    %v2168 = vmul.f32 %v2142, %v2122
    %v2169 = vmul.f32 %v2142, %v2125
    %v2170 = vmul.f32 %v2142, %v2128
    %v2171 = vmul.f32 %v2142, %v2131
    %v2172 = vmul.f32 %v2142, %v2134
    %v2173 = vmul.f32 %v2142, %v2137
    %v2174 = vmul.f32 %v2142, %v2140
    %v2175 = vmul.f32 %v1518, 256.0
    %v2176 = vmul.f32 %v1521, 256.0
    %v2177 = vmul.f32 %v1524, 256.0
    %v2178 = vmul.f32 %v1527, 256.0
    %v2179 = vmul.f32 %v1530, 256.0
    %v2180 = vmul.f32 %v1533, 256.0
    %v2181 = vmul.f32 %v1536, 256.0
    %v2182 = vmul.f32 %v1539, 256.0
    %v2183 = vmul.f32 %v1542, 256.0
    %v2184 = vmul.f32 %v1545, 256.0
    %v2185 = vmul.f32 %v1548, 256.0
    %v2186 = vmul.f32 %v1551, 256.0
    %v2187 = vmul.f32 %v1554, 256.0
    %v2188 = vmul.f32 %v1557, 256.0
    %v2189 = vmul.f32 %v1560, 256.0
    %v2190 = vmul.f32 %v1563, 256.0
    %v2191 = vmul.f32 %v1566, 256.0
    %v2192 = vmul.f32 %v1569, 256.0
    %v2193 = vmul.f32 %v1572, 256.0
    %v2194 = vmul.f32 %v1575, 256.0
    %v2195 = vmul.f32 %v1578, 256.0
    %v2196 = vmul.f32 %v1581, 256.0
    %v2197 = vmul.f32 %v1584, 256.0
    %v2198 = vmul.f32 %v1587, 256.0
    %v2199 = vmul.f32 %v1590, 256.0
    %v2200 = vmul.f32 %v1593, 256.0
    %v2201 = vmul.f32 %v1596, 256.0
    %v2202 = vmul.f32 %v1599, 256.0
    %v2203 = vmul.f32 %v1602, 256.0
    %v2204 = vmul.f32 %v1605, 256.0
    %v2205 = vmul.f32 %v1608, 256.0
    %v2206 = vmul.f32 %v1611, 256.0
    %v2207 = vadd.f32 %v2143, %v2175
    %v2208 = vadd.f32 %v2144, %v2176
    %v2209 = vadd.f32 %v2145, %v2177
    %v2210 = vadd.f32 %v2146, %v2178
    %v2211 = vadd.f32 %v2147, %v2179
    %v2212 = vadd.f32 %v2148, %v2180
    %v2213 = vadd.f32 %v2149, %v2181
    %v2214 = vadd.f32 %v2150, %v2182
    %v2215 = vadd.f32 %v2151, %v2183
    %v2216 = vadd.f32 %v2152, %v2184
    %v2217 = vadd.f32 %v2153, %v2185
    %v2218 = vadd.f32 %v2154, %v2186
    %v2219 = vadd.f32 %v2155, %v2187
    %v2220 = vadd.f32 %v2156, %v2188
    %v2221 = vadd.f32 %v2157, %v2189
    %v2222 = vadd.f32 %v2158, %v2190
    %v2223 = vadd.f32 %v2159, %v2191
    %v2224 = vadd.f32 %v2160, %v2192
    %v2225 = vadd.f32 %v2161, %v2193
    %v2226 = vadd.f32 %v2162, %v2194
    %v2227 = vadd.f32 %v2163, %v2195
    %v2228 = vadd.f32 %v2164, %v2196
    %v2229 = vadd.f32 %v2165, %v2197
    %v2230 = vadd.f32 %v2166, %v2198
    %v2231 = vadd.f32 %v2167, %v2199
    %v2232 = vadd.f32 %v2168, %v2200
    %v2233 = vadd.f32 %v2169, %v2201
    %v2234 = vadd.f32 %v2170, %v2202
    %v2235 = vadd.f32 %v2171, %v2203
    %v2236 = vadd.f32 %v2172, %v2204
    %v2237 = vadd.f32 %v2173, %v2205
    %v2238 = vadd.f32 %v2174, %v2206
    %v2239 = vmul.f32 %v1292, %v2012
    %v2240 = vmul.f32 %v1295, %v2012
    %v2241 = vmul.f32 %v1298, %v2012
    %v2242 = vmul.f32 %v1301, %v2012
    %v2243 = vmul.f32 %v1304, %v2012
    %v2244 = vmul.f32 %v1307, %v2012
    %v2245 = vmul.f32 %v1310, %v2012
    %v2246 = vmul.f32 %v1313, %v2012
    %v2247 = vmul.f32 %v1316, %v2012
    %v2248 = vmul.f32 %v1319, %v2012
    %v2249 = vmul.f32 %v1322, %v2012
    %v2250 = vmul.f32 %v1325, %v2012
    %v2251 = vmul.f32 %v1328, %v2012
    %v2252 = vmul.f32 %v1331, %v2012
    %v2253 = vmul.f32 %v1334, %v2012
    %v2254 = vmul.f32 %v1337, %v2012
    %v2255 = vmul.f32 %v1340, %v2012
    %v2256 = vmul.f32 %v1343, %v2012
    %v2257 = vmul.f32 %v1346, %v2012
    %v2258 = vmul.f32 %v1349, %v2012
    %v2259 = vmul.f32 %v1352, %v2012
    %v2260 = vmul.f32 %v1355, %v2012
    %v2261 = vmul.f32 %v1358, %v2012
    %v2262 = vmul.f32 %v1361, %v2012
    %v2263 = vmul.f32 %v1364, %v2012
    %v2264 = vmul.f32 %v1367, %v2012
    %v2265 = vmul.f32 %v1370, %v2012
    %v2266 = vmul.f32 %v1373, %v2012
    %v2267 = vmul.f32 %v1376, %v2012
    %v2268 = vmul.f32 %v1379, %v2012
    %v2269 = vmul.f32 %v1382, %v2012
    %v2270 = vmul.f32 %v1385, %v2012
    %2271 = vmatpush.msra.mxu0 %v1129
    %2272 = vmatpush.msra.mxu0 %v1128
    %2273 = vmatpush.msra.mxu0 %v1127
    %2274 = vmatpush.msra.mxu0 %v1126
    %2275 = vmatpush.msra.mxu0 %v1125
    %2276 = vmatpush.msra.mxu0 %v1124
    %2277 = vmatpush.msra.mxu0 %v1123
    %2278 = vmatpush.msra.mxu0 %v1122
    %2279 = vmatpush.msra.mxu0 %v1121
    %2280 = vmatpush.msra.mxu0 %v1120
    %2281 = vmatpush.msra.mxu0 %v1119
    %2282 = vmatpush.msra.mxu0 %v1118
    %2283 = vmatpush.msra.mxu0 %v1117
    %2284 = vmatpush.msra.mxu0 %v1116
    %2285 = vmatpush.msra.mxu0 %v1115
    %2286 = vmatpush.msra.mxu0 %v1114
    %2287 = vmatmul.f32.gmra.mxu0 %v2239
    %v2288 = vpop.f32.mrf.mxu0
    %v2289 = vadd.f32 0.0, %v2288
    %2290 = vmatmul.f32.gmra.mxu0 %v2240
    %v2291 = vpop.f32.mrf.mxu0
    %v2292 = vadd.f32 0.0, %v2291
    %2293 = vmatmul.f32.gmra.mxu0 %v2241
    %v2294 = vpop.f32.mrf.mxu0
    %v2295 = vadd.f32 0.0, %v2294
    %2296 = vmatmul.f32.gmra.mxu0 %v2242
    %v2297 = vpop.f32.mrf.mxu0
    %v2298 = vadd.f32 0.0, %v2297
    %2299 = vmatmul.f32.gmra.mxu0 %v2243
    %v2300 = vpop.f32.mrf.mxu0
    %v2301 = vadd.f32 0.0, %v2300
    %2302 = vmatmul.f32.gmra.mxu0 %v2244
    %v2303 = vpop.f32.mrf.mxu0
    %v2304 = vadd.f32 0.0, %v2303
    %2305 = vmatmul.f32.gmra.mxu0 %v2245
    %v2306 = vpop.f32.mrf.mxu0
    %v2307 = vadd.f32 0.0, %v2306
    %2308 = vmatmul.f32.gmra.mxu0 %v2246
    %v2309 = vpop.f32.mrf.mxu0
    %v2310 = vadd.f32 0.0, %v2309
    %2311 = vmatmul.f32.gmra.mxu0 %v2247
    %v2312 = vpop.f32.mrf.mxu0
    %v2313 = vadd.f32 0.0, %v2312
    %2314 = vmatmul.f32.gmra.mxu0 %v2248
    %v2315 = vpop.f32.mrf.mxu0
    %v2316 = vadd.f32 0.0, %v2315
    %2317 = vmatmul.f32.gmra.mxu0 %v2249
    %v2318 = vpop.f32.mrf.mxu0
    %v2319 = vadd.f32 0.0, %v2318
    %2320 = vmatmul.f32.gmra.mxu0 %v2250
    %v2321 = vpop.f32.mrf.mxu0
    %v2322 = vadd.f32 0.0, %v2321
    %2323 = vmatmul.f32.gmra.mxu0 %v2251
    %v2324 = vpop.f32.mrf.mxu0
    %v2325 = vadd.f32 0.0, %v2324
    %2326 = vmatmul.f32.gmra.mxu0 %v2252
    %v2327 = vpop.f32.mrf.mxu0
    %v2328 = vadd.f32 0.0, %v2327
    %2329 = vmatmul.f32.gmra.mxu0 %v2253
    %v2330 = vpop.f32.mrf.mxu0
    %v2331 = vadd.f32 0.0, %v2330
    %2332 = vmatmul.f32.gmra.mxu0 %v2254
    %v2333 = vpop.f32.mrf.mxu0
    %v2334 = vadd.f32 0.0, %v2333
    %2335 = vmatmul.f32.gmra.mxu0 %v2255
    %v2336 = vpop.f32.mrf.mxu0
    %v2337 = vadd.f32 0.0, %v2336
    %2338 = vmatmul.f32.gmra.mxu0 %v2256
    %v2339 = vpop.f32.mrf.mxu0
    %v2340 = vadd.f32 0.0, %v2339
    %2341 = vmatmul.f32.gmra.mxu0 %v2257
    %v2342 = vpop.f32.mrf.mxu0
    %v2343 = vadd.f32 0.0, %v2342
    %2344 = vmatmul.f32.gmra.mxu0 %v2258
    %v2345 = vpop.f32.mrf.mxu0
    %v2346 = vadd.f32 0.0, %v2345
    %2347 = vmatmul.f32.gmra.mxu0 %v2259
    %v2348 = vpop.f32.mrf.mxu0
    %v2349 = vadd.f32 0.0, %v2348
    %2350 = vmatmul.f32.gmra.mxu0 %v2260
    %v2351 = vpop.f32.mrf.mxu0
    %v2352 = vadd.f32 0.0, %v2351
    %2353 = vmatmul.f32.gmra.mxu0 %v2261
    %v2354 = vpop.f32.mrf.mxu0
    %v2355 = vadd.f32 0.0, %v2354
    %2356 = vmatmul.f32.gmra.mxu0 %v2262
    %v2357 = vpop.f32.mrf.mxu0
    %v2358 = vadd.f32 0.0, %v2357
    %2359 = vmatmul.f32.gmra.mxu0 %v2263
    %v2360 = vpop.f32.mrf.mxu0
    %v2361 = vadd.f32 0.0, %v2360
    %2362 = vmatmul.f32.gmra.mxu0 %v2264
    %v2363 = vpop.f32.mrf.mxu0
    %v2364 = vadd.f32 0.0, %v2363
    %2365 = vmatmul.f32.gmra.mxu0 %v2265
    %v2366 = vpop.f32.mrf.mxu0
    %v2367 = vadd.f32 0.0, %v2366
    %2368 = vmatmul.f32.gmra.mxu0 %v2266
    %v2369 = vpop.f32.mrf.mxu0
    %v2370 = vadd.f32 0.0, %v2369
    %2371 = vmatmul.f32.gmra.mxu0 %v2267
    %v2372 = vpop.f32.mrf.mxu0
    %v2373 = vadd.f32 0.0, %v2372
    %2374 = vmatmul.f32.gmra.mxu0 %v2268
    %v2375 = vpop.f32.mrf.mxu0
    %v2376 = vadd.f32 0.0, %v2375
    %2377 = vmatmul.f32.gmra.mxu0 %v2269
    %v2378 = vpop.f32.mrf.mxu0
    %v2379 = vadd.f32 0.0, %v2378
    %2380 = vmatmul.f32.gmra.mxu0 %v2270
    %v2381 = vpop.f32.mrf.mxu0
    %v2382 = vadd.f32 0.0, %v2381
    %2383 = vdwg.mxu0
    %v2384 = vmul.f32 %v2142, %v2289
    %v2385 = vmul.f32 %v2142, %v2292
    %v2386 = vmul.f32 %v2142, %v2295
    %v2387 = vmul.f32 %v2142, %v2298
    %v2388 = vmul.f32 %v2142, %v2301
    %v2389 = vmul.f32 %v2142, %v2304
    %v2390 = vmul.f32 %v2142, %v2307
    %v2391 = vmul.f32 %v2142, %v2310
    %v2392 = vmul.f32 %v2142, %v2313
    %v2393 = vmul.f32 %v2142, %v2316
    %v2394 = vmul.f32 %v2142, %v2319
    %v2395 = vmul.f32 %v2142, %v2322
    %v2396 = vmul.f32 %v2142, %v2325
    %v2397 = vmul.f32 %v2142, %v2328
    %v2398 = vmul.f32 %v2142, %v2331
    %v2399 = vmul.f32 %v2142, %v2334
    %v2400 = vmul.f32 %v2142, %v2337
    %v2401 = vmul.f32 %v2142, %v2340
    %v2402 = vmul.f32 %v2142, %v2343
    %v2403 = vmul.f32 %v2142, %v2346
    %v2404 = vmul.f32 %v2142, %v2349
    %v2405 = vmul.f32 %v2142, %v2352
    %v2406 = vmul.f32 %v2142, %v2355
    %v2407 = vmul.f32 %v2142, %v2358
    %v2408 = vmul.f32 %v2142, %v2361
    %v2409 = vmul.f32 %v2142, %v2364
    %v2410 = vmul.f32 %v2142, %v2367
    %v2411 = vmul.f32 %v2142, %v2370
    %v2412 = vmul.f32 %v2142, %v2373
    %v2413 = vmul.f32 %v2142, %v2376
    %v2414 = vmul.f32 %v2142, %v2379
    %v2415 = vmul.f32 %v2142, %v2382
    %v2416 = vadd.f32 %v2384, 256.0
    %v2417 = vadd.f32 %v2385, 256.0
    %v2418 = vadd.f32 %v2386, 256.0
    %v2419 = vadd.f32 %v2387, 256.0
    %v2420 = vadd.f32 %v2388, 256.0
    %v2421 = vadd.f32 %v2389, 256.0
    %v2422 = vadd.f32 %v2390, 256.0
    %v2423 = vadd.f32 %v2391, 256.0
    %v2424 = vadd.f32 %v2392, 256.0
    %v2425 = vadd.f32 %v2393, 256.0
    %v2426 = vadd.f32 %v2394, 256.0
    %v2427 = vadd.f32 %v2395, 256.0
    %v2428 = vadd.f32 %v2396, 256.0
    %v2429 = vadd.f32 %v2397, 256.0
    %v2430 = vadd.f32 %v2398, 256.0
    %v2431 = vadd.f32 %v2399, 256.0
    %v2432 = vadd.f32 %v2400, 256.0
    %v2433 = vadd.f32 %v2401, 256.0
    %v2434 = vadd.f32 %v2402, 256.0
    %v2435 = vadd.f32 %v2403, 256.0
    %v2436 = vadd.f32 %v2404, 256.0
    %v2437 = vadd.f32 %v2405, 256.0
    %v2438 = vadd.f32 %v2406, 256.0
    %v2439 = vadd.f32 %v2407, 256.0
    %v2440 = vadd.f32 %v2408, 256.0
    %v2441 = vadd.f32 %v2409, 256.0
    %v2442 = vadd.f32 %v2410, 256.0
    %v2443 = vadd.f32 %v2411, 256.0
    %v2444 = vadd.f32 %v2412, 256.0
    %v2445 = vadd.f32 %v2413, 256.0
    %v2446 = vadd.f32 %v2414, 256.0
    %v2447 = vadd.f32 %v2415, 256.0
    %v2448 = vrcp.pop %v2416
    %v2449 = vrcp.pop %v2417
    %v2450 = vrcp.pop %v2418
    %v2451 = vrcp.pop %v2419
    %v2452 = vrcp.pop %v2420
    %v2453 = vrcp.pop %v2421
    %v2454 = vrcp.pop %v2422
    %v2455 = vrcp.pop %v2423
    %v2456 = vrcp.pop %v2424
    %v2457 = vrcp.pop %v2425
    %v2458 = vrcp.pop %v2426
    %v2459 = vrcp.pop %v2427
    %v2460 = vrcp.pop %v2428
    %v2461 = vrcp.pop %v2429
    %v2462 = vrcp.pop %v2430
    %v2463 = vrcp.pop %v2431
    %v2464 = vrcp.pop %v2432
    %v2465 = vrcp.pop %v2433
    %v2466 = vrcp.pop %v2434
    %v2467 = vrcp.pop %v2435
    %v2468 = vrcp.pop %v2436
    %v2469 = vrcp.pop %v2437
    %v2470 = vrcp.pop %v2438
    %v2471 = vrcp.pop %v2439
    %v2472 = vrcp.pop %v2440
    %v2473 = vrcp.pop %v2441
    %v2474 = vrcp.pop %v2442
    %v2475 = vrcp.pop %v2443
    %v2476 = vrcp.pop %v2444
    %v2477 = vrcp.pop %v2445
    %v2478 = vrcp.pop %v2446
    %v2479 = vrcp.pop %v2447
    %v2480 = vmul.f32 %v2416, %v2448
    %v2481 = vmul.f32 %v2417, %v2449
    %v2482 = vmul.f32 %v2418, %v2450
    %v2483 = vmul.f32 %v2419, %v2451
    %v2484 = vmul.f32 %v2420, %v2452
    %v2485 = vmul.f32 %v2421, %v2453
    %v2486 = vmul.f32 %v2422, %v2454
    %v2487 = vmul.f32 %v2423, %v2455
    %v2488 = vmul.f32 %v2424, %v2456
    %v2489 = vmul.f32 %v2425, %v2457
    %v2490 = vmul.f32 %v2426, %v2458
    %v2491 = vmul.f32 %v2427, %v2459
    %v2492 = vmul.f32 %v2428, %v2460
    %v2493 = vmul.f32 %v2429, %v2461
    %v2494 = vmul.f32 %v2430, %v2462
    %v2495 = vmul.f32 %v2431, %v2463
    %v2496 = vmul.f32 %v2432, %v2464
    %v2497 = vmul.f32 %v2433, %v2465
    %v2498 = vmul.f32 %v2434, %v2466
    %v2499 = vmul.f32 %v2435, %v2467
    %v2500 = vmul.f32 %v2436, %v2468
    %v2501 = vmul.f32 %v2437, %v2469
    %v2502 = vmul.f32 %v2438, %v2470
    %v2503 = vmul.f32 %v2439, %v2471
    %v2504 = vmul.f32 %v2440, %v2472
    %v2505 = vmul.f32 %v2441, %v2473
    %v2506 = vmul.f32 %v2442, %v2474
    %v2507 = vmul.f32 %v2443, %v2475
    %v2508 = vmul.f32 %v2444, %v2476
    %v2509 = vmul.f32 %v2445, %v2477
    %v2510 = vmul.f32 %v2446, %v2478
    %v2511 = vmul.f32 %v2447, %v2479
    %v2512 = vsub.f32 2.0, %v2480
    %v2513 = vsub.f32 2.0, %v2481
    %v2514 = vsub.f32 2.0, %v2482
    %v2515 = vsub.f32 2.0, %v2483
    %v2516 = vsub.f32 2.0, %v2484
    %v2517 = vsub.f32 2.0, %v2485
    %v2518 = vsub.f32 2.0, %v2486
    %v2519 = vsub.f32 2.0, %v2487
    %v2520 = vsub.f32 2.0, %v2488
    %v2521 = vsub.f32 2.0, %v2489
    %v2522 = vsub.f32 2.0, %v2490
    %v2523 = vsub.f32 2.0, %v2491
    %v2524 = vsub.f32 2.0, %v2492
    %v2525 = vsub.f32 2.0, %v2493
    %v2526 = vsub.f32 2.0, %v2494
    %v2527 = vsub.f32 2.0, %v2495
    %v2528 = vsub.f32 2.0, %v2496
    %v2529 = vsub.f32 2.0, %v2497
    %v2530 = vsub.f32 2.0, %v2498
    %v2531 = vsub.f32 2.0, %v2499
    %v2532 = vsub.f32 2.0, %v2500
    %v2533 = vsub.f32 2.0, %v2501
    %v2534 = vsub.f32 2.0, %v2502
    %v2535 = vsub.f32 2.0, %v2503
    %v2536 = vsub.f32 2.0, %v2504
    %v2537 = vsub.f32 2.0, %v2505
    %v2538 = vsub.f32 2.0, %v2506
    %v2539 = vsub.f32 2.0, %v2507
    %v2540 = vsub.f32 2.0, %v2508
    %v2541 = vsub.f32 2.0, %v2509
    %v2542 = vsub.f32 2.0, %v2510
    %v2543 = vsub.f32 2.0, %v2511
    %v2544 = vmul.f32 %v2448, %v2512
    %v2545 = vmul.f32 %v2449, %v2513
    %v2546 = vmul.f32 %v2450, %v2514
    %v2547 = vmul.f32 %v2451, %v2515
    %v2548 = vmul.f32 %v2452, %v2516
    %v2549 = vmul.f32 %v2453, %v2517
    %v2550 = vmul.f32 %v2454, %v2518
    %v2551 = vmul.f32 %v2455, %v2519
    %v2552 = vmul.f32 %v2456, %v2520
    %v2553 = vmul.f32 %v2457, %v2521
    %v2554 = vmul.f32 %v2458, %v2522
    %v2555 = vmul.f32 %v2459, %v2523
    %v2556 = vmul.f32 %v2460, %v2524
    %v2557 = vmul.f32 %v2461, %v2525
    %v2558 = vmul.f32 %v2462, %v2526
    %v2559 = vmul.f32 %v2463, %v2527
    %v2560 = vmul.f32 %v2464, %v2528
    %v2561 = vmul.f32 %v2465, %v2529
    %v2562 = vmul.f32 %v2466, %v2530
    %v2563 = vmul.f32 %v2467, %v2531
    %v2564 = vmul.f32 %v2468, %v2532
    %v2565 = vmul.f32 %v2469, %v2533
    %v2566 = vmul.f32 %v2470, %v2534
    %v2567 = vmul.f32 %v2471, %v2535
    %v2568 = vmul.f32 %v2472, %v2536
    %v2569 = vmul.f32 %v2473, %v2537
    %v2570 = vmul.f32 %v2474, %v2538
    %v2571 = vmul.f32 %v2475, %v2539
    %v2572 = vmul.f32 %v2476, %v2540
    %v2573 = vmul.f32 %v2477, %v2541
    %v2574 = vmul.f32 %v2478, %v2542
    %v2575 = vmul.f32 %v2479, %v2543
    %v2576 = vmul.f32 %v2207, %v2544
    %v2577 = vmul.f32 %v2208, %v2545
    %v2578 = vmul.f32 %v2209, %v2546
    %v2579 = vmul.f32 %v2210, %v2547
    %v2580 = vmul.f32 %v2211, %v2548
    %v2581 = vmul.f32 %v2212, %v2549
    %v2582 = vmul.f32 %v2213, %v2550
    %v2583 = vmul.f32 %v2214, %v2551
    %v2584 = vmul.f32 %v2215, %v2552
    %v2585 = vmul.f32 %v2216, %v2553
    %v2586 = vmul.f32 %v2217, %v2554
    %v2587 = vmul.f32 %v2218, %v2555
    %v2588 = vmul.f32 %v2219, %v2556
    %v2589 = vmul.f32 %v2220, %v2557
    %v2590 = vmul.f32 %v2221, %v2558
    %v2591 = vmul.f32 %v2222, %v2559
    %v2592 = vmul.f32 %v2223, %v2560
    %v2593 = vmul.f32 %v2224, %v2561
    %v2594 = vmul.f32 %v2225, %v2562
    %v2595 = vmul.f32 %v2226, %v2563
    %v2596 = vmul.f32 %v2227, %v2564
    %v2597 = vmul.f32 %v2228, %v2565
    %v2598 = vmul.f32 %v2229, %v2566
    %v2599 = vmul.f32 %v2230, %v2567
    %v2600 = vmul.f32 %v2231, %v2568
    %v2601 = vmul.f32 %v2232, %v2569
    %v2602 = vmul.f32 %v2233, %v2570
    %v2603 = vmul.f32 %v2234, %v2571
    %v2604 = vmul.f32 %v2235, %v2572
    %v2605 = vmul.f32 %v2236, %v2573
    %v2606 = vmul.f32 %v2237, %v2574
    %v2607 = vmul.f32 %v2238, %v2575
    %2608 = vmatpush.msra.mxu0 %v1145
    %2609 = vmatpush.msra.mxu0 %v1144
    %2610 = vmatpush.msra.mxu0 %v1143
    %2611 = vmatpush.msra.mxu0 %v1142
    %2612 = vmatpush.msra.mxu0 %v1141
    %2613 = vmatpush.msra.mxu0 %v1140
    %2614 = vmatpush.msra.mxu0 %v1139
    %2615 = vmatpush.msra.mxu0 %v1138
    %2616 = vmatpush.msra.mxu0 %v1137
    %2617 = vmatpush.msra.mxu0 %v1136
    %2618 = vmatpush.msra.mxu0 %v1135
    %2619 = vmatpush.msra.mxu0 %v1134
    %2620 = vmatpush.msra.mxu0 %v1133
    %2621 = vmatpush.msra.mxu0 %v1132
    %2622 = vmatpush.msra.mxu0 %v1131
    %2623 = vmatpush.msra.mxu0 %v1130
    %2624 = vmatmul.f32.gmra.mxu0 %v2576
    %v2625 = vpop.f32.mrf.mxu0
    %v2626 = vadd.f32 0.0, %v2625
    %2627 = vmatmul.f32.gmra.mxu0 %v2577
    %v2628 = vpop.f32.mrf.mxu0
    %v2629 = vadd.f32 0.0, %v2628
    %2630 = vmatmul.f32.gmra.mxu0 %v2578
    %v2631 = vpop.f32.mrf.mxu0
    %v2632 = vadd.f32 0.0, %v2631
    %2633 = vmatmul.f32.gmra.mxu0 %v2579
    %v2634 = vpop.f32.mrf.mxu0
    %v2635 = vadd.f32 0.0, %v2634
    %2636 = vmatmul.f32.gmra.mxu0 %v2580
    %v2637 = vpop.f32.mrf.mxu0
    %v2638 = vadd.f32 0.0, %v2637
    %2639 = vmatmul.f32.gmra.mxu0 %v2581
    %v2640 = vpop.f32.mrf.mxu0
    %v2641 = vadd.f32 0.0, %v2640
    %2642 = vmatmul.f32.gmra.mxu0 %v2582
    %v2643 = vpop.f32.mrf.mxu0
    %v2644 = vadd.f32 0.0, %v2643
    %2645 = vmatmul.f32.gmra.mxu0 %v2583
    %v2646 = vpop.f32.mrf.mxu0
    %v2647 = vadd.f32 0.0, %v2646
    %2648 = vmatmul.f32.gmra.mxu0 %v2584
    %v2649 = vpop.f32.mrf.mxu0
    %v2650 = vadd.f32 0.0, %v2649
    %2651 = vmatmul.f32.gmra.mxu0 %v2585
    %v2652 = vpop.f32.mrf.mxu0
    %v2653 = vadd.f32 0.0, %v2652
    %2654 = vmatmul.f32.gmra.mxu0 %v2586
    %v2655 = vpop.f32.mrf.mxu0
    %v2656 = vadd.f32 0.0, %v2655
    %2657 = vmatmul.f32.gmra.mxu0 %v2587
    %v2658 = vpop.f32.mrf.mxu0
    %v2659 = vadd.f32 0.0, %v2658
    %2660 = vmatmul.f32.gmra.mxu0 %v2588
    %v2661 = vpop.f32.mrf.mxu0
    %v2662 = vadd.f32 0.0, %v2661
    %2663 = vmatmul.f32.gmra.mxu0 %v2589
    %v2664 = vpop.f32.mrf.mxu0
    %v2665 = vadd.f32 0.0, %v2664
    %2666 = vmatmul.f32.gmra.mxu0 %v2590
    %v2667 = vpop.f32.mrf.mxu0
    %v2668 = vadd.f32 0.0, %v2667
    %2669 = vmatmul.f32.gmra.mxu0 %v2591
    %v2670 = vpop.f32.mrf.mxu0
    %v2671 = vadd.f32 0.0, %v2670
    %2672 = vmatmul.f32.gmra.mxu0 %v2592
    %v2673 = vpop.f32.mrf.mxu0
    %v2674 = vadd.f32 0.0, %v2673
    %2675 = vmatmul.f32.gmra.mxu0 %v2593
    %v2676 = vpop.f32.mrf.mxu0
    %v2677 = vadd.f32 0.0, %v2676
    %2678 = vmatmul.f32.gmra.mxu0 %v2594
    %v2679 = vpop.f32.mrf.mxu0
    %v2680 = vadd.f32 0.0, %v2679
    %2681 = vmatmul.f32.gmra.mxu0 %v2595
    %v2682 = vpop.f32.mrf.mxu0
    %v2683 = vadd.f32 0.0, %v2682
    %2684 = vmatmul.f32.gmra.mxu0 %v2596
    %v2685 = vpop.f32.mrf.mxu0
    %v2686 = vadd.f32 0.0, %v2685
    %2687 = vmatmul.f32.gmra.mxu0 %v2597
    %v2688 = vpop.f32.mrf.mxu0
    %v2689 = vadd.f32 0.0, %v2688
    %2690 = vmatmul.f32.gmra.mxu0 %v2598
    %v2691 = vpop.f32.mrf.mxu0
    %v2692 = vadd.f32 0.0, %v2691
    %2693 = vmatmul.f32.gmra.mxu0 %v2599
    %v2694 = vpop.f32.mrf.mxu0
    %v2695 = vadd.f32 0.0, %v2694
    %2696 = vmatmul.f32.gmra.mxu0 %v2600
    %v2697 = vpop.f32.mrf.mxu0
    %v2698 = vadd.f32 0.0, %v2697
    %2699 = vmatmul.f32.gmra.mxu0 %v2601
    %v2700 = vpop.f32.mrf.mxu0
    %v2701 = vadd.f32 0.0, %v2700
    %2702 = vmatmul.f32.gmra.mxu0 %v2602
    %v2703 = vpop.f32.mrf.mxu0
    %v2704 = vadd.f32 0.0, %v2703
    %2705 = vmatmul.f32.gmra.mxu0 %v2603
    %v2706 = vpop.f32.mrf.mxu0
    %v2707 = vadd.f32 0.0, %v2706
    %2708 = vmatmul.f32.gmra.mxu0 %v2604
    %v2709 = vpop.f32.mrf.mxu0
    %v2710 = vadd.f32 0.0, %v2709
    %2711 = vmatmul.f32.gmra.mxu0 %v2605
    %v2712 = vpop.f32.mrf.mxu0
    %v2713 = vadd.f32 0.0, %v2712
    %2714 = vmatmul.f32.gmra.mxu0 %v2606
    %v2715 = vpop.f32.mrf.mxu0
    %v2716 = vadd.f32 0.0, %v2715
    %2717 = vmatmul.f32.gmra.mxu0 %v2607
    %v2718 = vpop.f32.mrf.mxu0
    %v2719 = vadd.f32 0.0, %v2718
    %2720 = vdwg.mxu0
    %v2721 = vmul.f32 %v2626, 0.5
    %v2722 = vmul.f32 %v2629, 0.5
    %v2723 = vmul.f32 %v2632, 0.5
    %v2724 = vmul.f32 %v2635, 0.5
    %v2725 = vmul.f32 %v2638, 0.5
    %v2726 = vmul.f32 %v2641, 0.5
    %v2727 = vmul.f32 %v2644, 0.5
    %v2728 = vmul.f32 %v2647, 0.5
    %v2729 = vmul.f32 %v2650, 0.5
    %v2730 = vmul.f32 %v2653, 0.5
    %v2731 = vmul.f32 %v2656, 0.5
    %v2732 = vmul.f32 %v2659, 0.5
    %v2733 = vmul.f32 %v2662, 0.5
    %v2734 = vmul.f32 %v2665, 0.5
    %v2735 = vmul.f32 %v2668, 0.5
    %v2736 = vmul.f32 %v2671, 0.5
    %v2737 = vmul.f32 %v2674, 0.5
    %v2738 = vmul.f32 %v2677, 0.5
    %v2739 = vmul.f32 %v2680, 0.5
    %v2740 = vmul.f32 %v2683, 0.5
    %v2741 = vmul.f32 %v2686, 0.5
    %v2742 = vmul.f32 %v2689, 0.5
    %v2743 = vmul.f32 %v2692, 0.5
    %v2744 = vmul.f32 %v2695, 0.5
    %v2745 = vmul.f32 %v2698, 0.5
    %v2746 = vmul.f32 %v2701, 0.5
    %v2747 = vmul.f32 %v2704, 0.5
    %v2748 = vmul.f32 %v2707, 0.5
    %v2749 = vmul.f32 %v2710, 0.5
    %v2750 = vmul.f32 %v2713, 0.5
    %v2751 = vmul.f32 %v2716, 0.5
    %v2752 = vmul.f32 %v2719, 0.5
    %v2753 = vmul.f32 %v1082, 0.5
    %v2754 = vmul.f32 %v1083, 0.5
    %v2755 = vmul.f32 %v1084, 0.5
    %v2756 = vmul.f32 %v1085, 0.5
    %v2757 = vmul.f32 %v1086, 0.5
    %v2758 = vmul.f32 %v1087, 0.5
    %v2759 = vmul.f32 %v1088, 0.5
    %v2760 = vmul.f32 %v1089, 0.5
    %v2761 = vmul.f32 %v1090, 0.5
    %v2762 = vmul.f32 %v1091, 0.5
    %v2763 = vmul.f32 %v1092, 0.5
    %v2764 = vmul.f32 %v1093, 0.5
    %v2765 = vmul.f32 %v1094, 0.5
    %v2766 = vmul.f32 %v1095, 0.5
    %v2767 = vmul.f32 %v1096, 0.5
    %v2768 = vmul.f32 %v1097, 0.5
    %v2769 = vmul.f32 %v1098, 0.5
    %v2770 = vmul.f32 %v1099, 0.5
    %v2771 = vmul.f32 %v1100, 0.5
    %v2772 = vmul.f32 %v1101, 0.5
    %v2773 = vmul.f32 %v1102, 0.5
    %v2774 = vmul.f32 %v1103, 0.5
    %v2775 = vmul.f32 %v1104, 0.5
    %v2776 = vmul.f32 %v1105, 0.5
    %v2777 = vmul.f32 %v1106, 0.5
    %v2778 = vmul.f32 %v1107, 0.5
    %v2779 = vmul.f32 %v1108, 0.5
    %v2780 = vmul.f32 %v1109, 0.5
    %v2781 = vmul.f32 %v1110, 0.5
    %v2782 = vmul.f32 %v1111, 0.5
    %v2783 = vmul.f32 %v1112, 0.5
    %v2784 = vmul.f32 %v1113, 0.5
    %v2785 = vadd.f32 %v2721, %v2753
    %v2786 = vadd.f32 %v2722, %v2754
    %v2787 = vadd.f32 %v2723, %v2755
    %v2788 = vadd.f32 %v2724, %v2756
    %v2789 = vadd.f32 %v2725, %v2757
    %v2790 = vadd.f32 %v2726, %v2758
    %v2791 = vadd.f32 %v2727, %v2759
    %v2792 = vadd.f32 %v2728, %v2760
    %v2793 = vadd.f32 %v2729, %v2761
    %v2794 = vadd.f32 %v2730, %v2762
    %v2795 = vadd.f32 %v2731, %v2763
    %v2796 = vadd.f32 %v2732, %v2764
    %v2797 = vadd.f32 %v2733, %v2765
    %v2798 = vadd.f32 %v2734, %v2766
    %v2799 = vadd.f32 %v2735, %v2767
    %v2800 = vadd.f32 %v2736, %v2768
    %v2801 = vadd.f32 %v2737, %v2769
    %v2802 = vadd.f32 %v2738, %v2770
    %v2803 = vadd.f32 %v2739, %v2771
    %v2804 = vadd.f32 %v2740, %v2772
    %v2805 = vadd.f32 %v2741, %v2773
    %v2806 = vadd.f32 %v2742, %v2774
    %v2807 = vadd.f32 %v2743, %v2775
    %v2808 = vadd.f32 %v2744, %v2776
    %v2809 = vadd.f32 %v2745, %v2777
    %v2810 = vadd.f32 %v2746, %v2778
    %v2811 = vadd.f32 %v2747, %v2779
    %v2812 = vadd.f32 %v2748, %v2780
    %v2813 = vadd.f32 %v2749, %v2781
    %v2814 = vadd.f32 %v2750, %v2782
    %v2815 = vadd.f32 %v2751, %v2783
    %v2816 = vadd.f32 %v2752, %v2784
    %s2817 = scalar_lea.vmem %s3, 1
    %v2818 = vld [vmem:[%s2817] sm:$0x1]
    %s2819 = scalar_lea.vmem %s4, 1
    %v2820 = vld [vmem:[%s2819] sm:$0x1]
    %v2821 = vsel %vm300, %v2785, 0.0
    %2822 = vadd.xlane.f32.xlu0 %v2821
    %v2823 = vpop.xlane.xlu0 %2822
    %v2824 = vsel %vm300, %v2786, 0.0
    %2825 = vadd.xlane.f32.xlu0 %v2824
    %v2826 = vpop.xlane.xlu0 %2825
    %v2827 = vsel %vm300, %v2787, 0.0
    %2828 = vadd.xlane.f32.xlu0 %v2827
    %v2829 = vpop.xlane.xlu0 %2828
    %v2830 = vsel %vm300, %v2788, 0.0
    %2831 = vadd.xlane.f32.xlu0 %v2830
    %v2832 = vpop.xlane.xlu0 %2831
    %v2833 = vsel %vm300, %v2789, 0.0
    %2834 = vadd.xlane.f32.xlu0 %v2833
    %v2835 = vpop.xlane.xlu0 %2834
    %v2836 = vsel %vm300, %v2790, 0.0
    %2837 = vadd.xlane.f32.xlu0 %v2836
    %v2838 = vpop.xlane.xlu0 %2837
    %v2839 = vsel %vm300, %v2791, 0.0
    %2840 = vadd.xlane.f32.xlu0 %v2839
    %v2841 = vpop.xlane.xlu0 %2840
    %v2842 = vsel %vm300, %v2792, 0.0
    %2843 = vadd.xlane.f32.xlu0 %v2842
    %v2844 = vpop.xlane.xlu0 %2843
    %v2845 = vsel %vm300, %v2793, 0.0
    %2846 = vadd.xlane.f32.xlu0 %v2845
    %v2847 = vpop.xlane.xlu0 %2846
    %v2848 = vsel %vm300, %v2794, 0.0
    %2849 = vadd.xlane.f32.xlu0 %v2848
    %v2850 = vpop.xlane.xlu0 %2849
    %v2851 = vsel %vm300, %v2795, 0.0
    %2852 = vadd.xlane.f32.xlu0 %v2851
    %v2853 = vpop.xlane.xlu0 %2852
    %v2854 = vsel %vm300, %v2796, 0.0
    %2855 = vadd.xlane.f32.xlu0 %v2854
    %v2856 = vpop.xlane.xlu0 %2855
    %v2857 = vsel %vm300, %v2797, 0.0
    %2858 = vadd.xlane.f32.xlu0 %v2857
    %v2859 = vpop.xlane.xlu0 %2858
    %v2860 = vsel %vm300, %v2798, 0.0
    %2861 = vadd.xlane.f32.xlu0 %v2860
    %v2862 = vpop.xlane.xlu0 %2861
    %v2863 = vsel %vm300, %v2799, 0.0
    %2864 = vadd.xlane.f32.xlu0 %v2863
    %v2865 = vpop.xlane.xlu0 %2864
    %v2866 = vsel %vm300, %v2800, 0.0
    %2867 = vadd.xlane.f32.xlu0 %v2866
    %v2868 = vpop.xlane.xlu0 %2867
    %v2869 = vsel %vm300, %v2801, 0.0
    %2870 = vadd.xlane.f32.xlu0 %v2869
    %v2871 = vpop.xlane.xlu0 %2870
    %v2872 = vsel %vm300, %v2802, 0.0
    %2873 = vadd.xlane.f32.xlu0 %v2872
    %v2874 = vpop.xlane.xlu0 %2873
    %v2875 = vsel %vm300, %v2803, 0.0
    %2876 = vadd.xlane.f32.xlu0 %v2875
    %v2877 = vpop.xlane.xlu0 %2876
    %v2878 = vsel %vm300, %v2804, 0.0
    %2879 = vadd.xlane.f32.xlu0 %v2878
    %v2880 = vpop.xlane.xlu0 %2879
    %v2881 = vsel %vm300, %v2805, 0.0
    %2882 = vadd.xlane.f32.xlu0 %v2881
    %v2883 = vpop.xlane.xlu0 %2882
    %v2884 = vsel %vm300, %v2806, 0.0
    %2885 = vadd.xlane.f32.xlu0 %v2884
    %v2886 = vpop.xlane.xlu0 %2885
    %v2887 = vsel %vm300, %v2807, 0.0
    %2888 = vadd.xlane.f32.xlu0 %v2887
    %v2889 = vpop.xlane.xlu0 %2888
    %v2890 = vsel %vm300, %v2808, 0.0
    %2891 = vadd.xlane.f32.xlu0 %v2890
    %v2892 = vpop.xlane.xlu0 %2891
    %v2893 = vsel %vm300, %v2809, 0.0
    %2894 = vadd.xlane.f32.xlu0 %v2893
    %v2895 = vpop.xlane.xlu0 %2894
    %v2896 = vsel %vm300, %v2810, 0.0
    %2897 = vadd.xlane.f32.xlu0 %v2896
    %v2898 = vpop.xlane.xlu0 %2897
    %v2899 = vsel %vm300, %v2811, 0.0
    %2900 = vadd.xlane.f32.xlu0 %v2899
    %v2901 = vpop.xlane.xlu0 %2900
    %v2902 = vsel %vm300, %v2812, 0.0
    %2903 = vadd.xlane.f32.xlu0 %v2902
    %v2904 = vpop.xlane.xlu0 %2903
    %v2905 = vsel %vm300, %v2813, 0.0
    %2906 = vadd.xlane.f32.xlu0 %v2905
    %v2907 = vpop.xlane.xlu0 %2906
    %v2908 = vsel %vm300, %v2814, 0.0
    %2909 = vadd.xlane.f32.xlu0 %v2908
    %v2910 = vpop.xlane.xlu0 %2909
    %v2911 = vsel %vm300, %v2815, 0.0
    %2912 = vadd.xlane.f32.xlu0 %v2911
    %v2913 = vpop.xlane.xlu0 %2912
    %v2914 = vsel %vm300, %v2816, 0.0
    %2915 = vadd.xlane.f32.xlu0 %v2914
    %v2916 = vpop.xlane.xlu0 %2915
    %v2917 = vmul.f32 %v2823, %v403
    %v2918 = vmul.f32 %v2826, %v403
    %v2919 = vmul.f32 %v2829, %v403
    %v2920 = vmul.f32 %v2832, %v403
    %v2921 = vmul.f32 %v2835, %v403
    %v2922 = vmul.f32 %v2838, %v403
    %v2923 = vmul.f32 %v2841, %v403
    %v2924 = vmul.f32 %v2844, %v403
    %v2925 = vmul.f32 %v2847, %v403
    %v2926 = vmul.f32 %v2850, %v403
    %v2927 = vmul.f32 %v2853, %v403
    %v2928 = vmul.f32 %v2856, %v403
    %v2929 = vmul.f32 %v2859, %v403
    %v2930 = vmul.f32 %v2862, %v403
    %v2931 = vmul.f32 %v2865, %v403
    %v2932 = vmul.f32 %v2868, %v403
    %v2933 = vmul.f32 %v2871, %v403
    %v2934 = vmul.f32 %v2874, %v403
    %v2935 = vmul.f32 %v2877, %v403
    %v2936 = vmul.f32 %v2880, %v403
    %v2937 = vmul.f32 %v2883, %v403
    %v2938 = vmul.f32 %v2886, %v403
    %v2939 = vmul.f32 %v2889, %v403
    %v2940 = vmul.f32 %v2892, %v403
    %v2941 = vmul.f32 %v2895, %v403
    %v2942 = vmul.f32 %v2898, %v403
    %v2943 = vmul.f32 %v2901, %v403
    %v2944 = vmul.f32 %v2904, %v403
    %v2945 = vmul.f32 %v2907, %v403
    %v2946 = vmul.f32 %v2910, %v403
    %v2947 = vmul.f32 %v2913, %v403
    %v2948 = vmul.f32 %v2916, %v403
    %v2949 = vsub.f32 %v2785, %v2917
    %v2950 = vsub.f32 %v2786, %v2918
    %v2951 = vsub.f32 %v2787, %v2919
    %v2952 = vsub.f32 %v2788, %v2920
    %v2953 = vsub.f32 %v2789, %v2921
    %v2954 = vsub.f32 %v2790, %v2922
    %v2955 = vsub.f32 %v2791, %v2923
    %v2956 = vsub.f32 %v2792, %v2924
    %v2957 = vsub.f32 %v2793, %v2925
    %v2958 = vsub.f32 %v2794, %v2926
    %v2959 = vsub.f32 %v2795, %v2927
    %v2960 = vsub.f32 %v2796, %v2928
    %v2961 = vsub.f32 %v2797, %v2929
    %v2962 = vsub.f32 %v2798, %v2930
    %v2963 = vsub.f32 %v2799, %v2931
    %v2964 = vsub.f32 %v2800, %v2932
    %v2965 = vsub.f32 %v2801, %v2933
    %v2966 = vsub.f32 %v2802, %v2934
    %v2967 = vsub.f32 %v2803, %v2935
    %v2968 = vsub.f32 %v2804, %v2936
    %v2969 = vsub.f32 %v2805, %v2937
    %v2970 = vsub.f32 %v2806, %v2938
    %v2971 = vsub.f32 %v2807, %v2939
    %v2972 = vsub.f32 %v2808, %v2940
    %v2973 = vsub.f32 %v2809, %v2941
    %v2974 = vsub.f32 %v2810, %v2942
    %v2975 = vsub.f32 %v2811, %v2943
    %v2976 = vsub.f32 %v2812, %v2944
    %v2977 = vsub.f32 %v2813, %v2945
    %v2978 = vsub.f32 %v2814, %v2946
    %v2979 = vsub.f32 %v2815, %v2947
    %v2980 = vsub.f32 %v2816, %v2948
    %v2981 = vmul.f32 %v2949, %v2949
    %v2982 = vmul.f32 %v2950, %v2950
    %v2983 = vmul.f32 %v2951, %v2951
    %v2984 = vmul.f32 %v2952, %v2952
    %v2985 = vmul.f32 %v2953, %v2953
    %v2986 = vmul.f32 %v2954, %v2954
    %v2987 = vmul.f32 %v2955, %v2955
    %v2988 = vmul.f32 %v2956, %v2956
    %v2989 = vmul.f32 %v2957, %v2957
    %v2990 = vmul.f32 %v2958, %v2958
    %v2991 = vmul.f32 %v2959, %v2959
    %v2992 = vmul.f32 %v2960, %v2960
    %v2993 = vmul.f32 %v2961, %v2961
    %v2994 = vmul.f32 %v2962, %v2962
    %v2995 = vmul.f32 %v2963, %v2963
    %v2996 = vmul.f32 %v2964, %v2964
    %v2997 = vmul.f32 %v2965, %v2965
    %v2998 = vmul.f32 %v2966, %v2966
    %v2999 = vmul.f32 %v2967, %v2967
    %v3000 = vmul.f32 %v2968, %v2968
    %v3001 = vmul.f32 %v2969, %v2969
    %v3002 = vmul.f32 %v2970, %v2970
    %v3003 = vmul.f32 %v2971, %v2971
    %v3004 = vmul.f32 %v2972, %v2972
    %v3005 = vmul.f32 %v2973, %v2973
    %v3006 = vmul.f32 %v2974, %v2974
    %v3007 = vmul.f32 %v2975, %v2975
    %v3008 = vmul.f32 %v2976, %v2976
    %v3009 = vmul.f32 %v2977, %v2977
    %v3010 = vmul.f32 %v2978, %v2978
    %v3011 = vmul.f32 %v2979, %v2979
    %v3012 = vmul.f32 %v2980, %v2980
    %v3013 = vsel %vm300, %v2981, 0.0
    %3014 = vadd.xlane.f32.xlu0 %v3013
    %v3015 = vpop.xlane.xlu0 %3014
    %v3016 = vsel %vm300, %v2982, 0.0
    %3017 = vadd.xlane.f32.xlu0 %v3016
    %v3018 = vpop.xlane.xlu0 %3017
    %v3019 = vsel %vm300, %v2983, 0.0
    %3020 = vadd.xlane.f32.xlu0 %v3019
    %v3021 = vpop.xlane.xlu0 %3020
    %v3022 = vsel %vm300, %v2984, 0.0
    %3023 = vadd.xlane.f32.xlu0 %v3022
    %v3024 = vpop.xlane.xlu0 %3023
    %v3025 = vsel %vm300, %v2985, 0.0
    %3026 = vadd.xlane.f32.xlu0 %v3025
    %v3027 = vpop.xlane.xlu0 %3026
    %v3028 = vsel %vm300, %v2986, 0.0
    %3029 = vadd.xlane.f32.xlu0 %v3028
    %v3030 = vpop.xlane.xlu0 %3029
    %v3031 = vsel %vm300, %v2987, 0.0
    %3032 = vadd.xlane.f32.xlu0 %v3031
    %v3033 = vpop.xlane.xlu0 %3032
    %v3034 = vsel %vm300, %v2988, 0.0
    %3035 = vadd.xlane.f32.xlu0 %v3034
    %v3036 = vpop.xlane.xlu0 %3035
    %v3037 = vsel %vm300, %v2989, 0.0
    %3038 = vadd.xlane.f32.xlu0 %v3037
    %v3039 = vpop.xlane.xlu0 %3038
    %v3040 = vsel %vm300, %v2990, 0.0
    %3041 = vadd.xlane.f32.xlu0 %v3040
    %v3042 = vpop.xlane.xlu0 %3041
    %v3043 = vsel %vm300, %v2991, 0.0
    %3044 = vadd.xlane.f32.xlu0 %v3043
    %v3045 = vpop.xlane.xlu0 %3044
    %v3046 = vsel %vm300, %v2992, 0.0
    %3047 = vadd.xlane.f32.xlu0 %v3046
    %v3048 = vpop.xlane.xlu0 %3047
    %v3049 = vsel %vm300, %v2993, 0.0
    %3050 = vadd.xlane.f32.xlu0 %v3049
    %v3051 = vpop.xlane.xlu0 %3050
    %v3052 = vsel %vm300, %v2994, 0.0
    %3053 = vadd.xlane.f32.xlu0 %v3052
    %v3054 = vpop.xlane.xlu0 %3053
    %v3055 = vsel %vm300, %v2995, 0.0
    %3056 = vadd.xlane.f32.xlu0 %v3055
    %v3057 = vpop.xlane.xlu0 %3056
    %v3058 = vsel %vm300, %v2996, 0.0
    %3059 = vadd.xlane.f32.xlu0 %v3058
    %v3060 = vpop.xlane.xlu0 %3059
    %v3061 = vsel %vm300, %v2997, 0.0
    %3062 = vadd.xlane.f32.xlu0 %v3061
    %v3063 = vpop.xlane.xlu0 %3062
    %v3064 = vsel %vm300, %v2998, 0.0
    %3065 = vadd.xlane.f32.xlu0 %v3064
    %v3066 = vpop.xlane.xlu0 %3065
    %v3067 = vsel %vm300, %v2999, 0.0
    %3068 = vadd.xlane.f32.xlu0 %v3067
    %v3069 = vpop.xlane.xlu0 %3068
    %v3070 = vsel %vm300, %v3000, 0.0
    %3071 = vadd.xlane.f32.xlu0 %v3070
    %v3072 = vpop.xlane.xlu0 %3071
    %v3073 = vsel %vm300, %v3001, 0.0
    %3074 = vadd.xlane.f32.xlu0 %v3073
    %v3075 = vpop.xlane.xlu0 %3074
    %v3076 = vsel %vm300, %v3002, 0.0
    %3077 = vadd.xlane.f32.xlu0 %v3076
    %v3078 = vpop.xlane.xlu0 %3077
    %v3079 = vsel %vm300, %v3003, 0.0
    %3080 = vadd.xlane.f32.xlu0 %v3079
    %v3081 = vpop.xlane.xlu0 %3080
    %v3082 = vsel %vm300, %v3004, 0.0
    %3083 = vadd.xlane.f32.xlu0 %v3082
    %v3084 = vpop.xlane.xlu0 %3083
    %v3085 = vsel %vm300, %v3005, 0.0
    %3086 = vadd.xlane.f32.xlu0 %v3085
    %v3087 = vpop.xlane.xlu0 %3086
    %v3088 = vsel %vm300, %v3006, 0.0
    %3089 = vadd.xlane.f32.xlu0 %v3088
    %v3090 = vpop.xlane.xlu0 %3089
    %v3091 = vsel %vm300, %v3007, 0.0
    %3092 = vadd.xlane.f32.xlu0 %v3091
    %v3093 = vpop.xlane.xlu0 %3092
    %v3094 = vsel %vm300, %v3008, 0.0
    %3095 = vadd.xlane.f32.xlu0 %v3094
    %v3096 = vpop.xlane.xlu0 %3095
    %v3097 = vsel %vm300, %v3009, 0.0
    %3098 = vadd.xlane.f32.xlu0 %v3097
    %v3099 = vpop.xlane.xlu0 %3098
    %v3100 = vsel %vm300, %v3010, 0.0
    %3101 = vadd.xlane.f32.xlu0 %v3100
    %v3102 = vpop.xlane.xlu0 %3101
    %v3103 = vsel %vm300, %v3011, 0.0
    %3104 = vadd.xlane.f32.xlu0 %v3103
    %v3105 = vpop.xlane.xlu0 %3104
    %v3106 = vsel %vm300, %v3012, 0.0
    %3107 = vadd.xlane.f32.xlu0 %v3106
    %v3108 = vpop.xlane.xlu0 %3107
    %v3109 = vmul.f32 %v3015, %v403
    %v3110 = vmul.f32 %v3018, %v403
    %v3111 = vmul.f32 %v3021, %v403
    %v3112 = vmul.f32 %v3024, %v403
    %v3113 = vmul.f32 %v3027, %v403
    %v3114 = vmul.f32 %v3030, %v403
    %v3115 = vmul.f32 %v3033, %v403
    %v3116 = vmul.f32 %v3036, %v403
    %v3117 = vmul.f32 %v3039, %v403
    %v3118 = vmul.f32 %v3042, %v403
    %v3119 = vmul.f32 %v3045, %v403
    %v3120 = vmul.f32 %v3048, %v403
    %v3121 = vmul.f32 %v3051, %v403
    %v3122 = vmul.f32 %v3054, %v403
    %v3123 = vmul.f32 %v3057, %v403
    %v3124 = vmul.f32 %v3060, %v403
    %v3125 = vmul.f32 %v3063, %v403
    %v3126 = vmul.f32 %v3066, %v403
    %v3127 = vmul.f32 %v3069, %v403
    %v3128 = vmul.f32 %v3072, %v403
    %v3129 = vmul.f32 %v3075, %v403
    %v3130 = vmul.f32 %v3078, %v403
    %v3131 = vmul.f32 %v3081, %v403
    %v3132 = vmul.f32 %v3084, %v403
    %v3133 = vmul.f32 %v3087, %v403
    %v3134 = vmul.f32 %v3090, %v403
    %v3135 = vmul.f32 %v3093, %v403
    %v3136 = vmul.f32 %v3096, %v403
    %v3137 = vmul.f32 %v3099, %v403
    %v3138 = vmul.f32 %v3102, %v403
    %v3139 = vmul.f32 %v3105, %v403
    %v3140 = vmul.f32 %v3108, %v403
    %v3141 = vadd.f32 %v3109, 1e-05
    %v3142 = vadd.f32 %v3110, 1e-05
    %v3143 = vadd.f32 %v3111, 1e-05
    %v3144 = vadd.f32 %v3112, 1e-05
    %v3145 = vadd.f32 %v3113, 1e-05
    %v3146 = vadd.f32 %v3114, 1e-05
    %v3147 = vadd.f32 %v3115, 1e-05
    %v3148 = vadd.f32 %v3116, 1e-05
    %v3149 = vadd.f32 %v3117, 1e-05
    %v3150 = vadd.f32 %v3118, 1e-05
    %v3151 = vadd.f32 %v3119, 1e-05
    %v3152 = vadd.f32 %v3120, 1e-05
    %v3153 = vadd.f32 %v3121, 1e-05
    %v3154 = vadd.f32 %v3122, 1e-05
    %v3155 = vadd.f32 %v3123, 1e-05
    %v3156 = vadd.f32 %v3124, 1e-05
    %v3157 = vadd.f32 %v3125, 1e-05
    %v3158 = vadd.f32 %v3126, 1e-05
    %v3159 = vadd.f32 %v3127, 1e-05
    %v3160 = vadd.f32 %v3128, 1e-05
    %v3161 = vadd.f32 %v3129, 1e-05
    %v3162 = vadd.f32 %v3130, 1e-05
    %v3163 = vadd.f32 %v3131, 1e-05
    %v3164 = vadd.f32 %v3132, 1e-05
    %v3165 = vadd.f32 %v3133, 1e-05
    %v3166 = vadd.f32 %v3134, 1e-05
    %v3167 = vadd.f32 %v3135, 1e-05
    %v3168 = vadd.f32 %v3136, 1e-05
    %v3169 = vadd.f32 %v3137, 1e-05
    %v3170 = vadd.f32 %v3138, 1e-05
    %v3171 = vadd.f32 %v3139, 1e-05
    %v3172 = vadd.f32 %v3140, 1e-05
    %v3173 = vrsqrt.pop %v3141
    %v3174 = vmul.f32 %v3173, %v3141
    %v3175 = vmul.f32 %v3174, %v3173
    %v3176 = vmul.f32 0.5, %v3175
    %v3177 = vsub.f32 1.5, %v3176
    %v3178 = vmul.f32 %v3173, %v3177
    %vm3179 = vweird.f32 %v3141
    %vm3180 = vweird.f32 %v3173
    %vm3181 = vmor %vm3179, %vm3180
    %v3182 = vsel %vm3181, %v3173, %v3178
    %v3183 = vrsqrt.pop %v3142
    %v3184 = vmul.f32 %v3183, %v3142
    %v3185 = vmul.f32 %v3184, %v3183
    %v3186 = vmul.f32 0.5, %v3185
    %v3187 = vsub.f32 1.5, %v3186
    %v3188 = vmul.f32 %v3183, %v3187
    %vm3189 = vweird.f32 %v3142
    %vm3190 = vweird.f32 %v3183
    %vm3191 = vmor %vm3189, %vm3190
    %v3192 = vsel %vm3191, %v3183, %v3188
    %v3193 = vrsqrt.pop %v3143
    %v3194 = vmul.f32 %v3193, %v3143
    %v3195 = vmul.f32 %v3194, %v3193
    %v3196 = vmul.f32 0.5, %v3195
    %v3197 = vsub.f32 1.5, %v3196
    %v3198 = vmul.f32 %v3193, %v3197
    %vm3199 = vweird.f32 %v3143
    %vm3200 = vweird.f32 %v3193
    %vm3201 = vmor %vm3199, %vm3200
    %v3202 = vsel %vm3201, %v3193, %v3198
    %v3203 = vrsqrt.pop %v3144
    %v3204 = vmul.f32 %v3203, %v3144
    %v3205 = vmul.f32 %v3204, %v3203
    %v3206 = vmul.f32 0.5, %v3205
    %v3207 = vsub.f32 1.5, %v3206
    %v3208 = vmul.f32 %v3203, %v3207
    %vm3209 = vweird.f32 %v3144
    %vm3210 = vweird.f32 %v3203
    %vm3211 = vmor %vm3209, %vm3210
    %v3212 = vsel %vm3211, %v3203, %v3208
    %v3213 = vrsqrt.pop %v3145
    %v3214 = vmul.f32 %v3213, %v3145
    %v3215 = vmul.f32 %v3214, %v3213
    %v3216 = vmul.f32 0.5, %v3215
    %v3217 = vsub.f32 1.5, %v3216
    %v3218 = vmul.f32 %v3213, %v3217
    %vm3219 = vweird.f32 %v3145
    %vm3220 = vweird.f32 %v3213
    %vm3221 = vmor %vm3219, %vm3220
    %v3222 = vsel %vm3221, %v3213, %v3218
    %v3223 = vrsqrt.pop %v3146
    %v3224 = vmul.f32 %v3223, %v3146
    %v3225 = vmul.f32 %v3224, %v3223
    %v3226 = vmul.f32 0.5, %v3225
    %v3227 = vsub.f32 1.5, %v3226
    %v3228 = vmul.f32 %v3223, %v3227
    %vm3229 = vweird.f32 %v3146
    %vm3230 = vweird.f32 %v3223
    %vm3231 = vmor %vm3229, %vm3230
    %v3232 = vsel %vm3231, %v3223, %v3228
    %v3233 = vrsqrt.pop %v3147
    %v3234 = vmul.f32 %v3233, %v3147
    %v3235 = vmul.f32 %v3234, %v3233
    %v3236 = vmul.f32 0.5, %v3235
    %v3237 = vsub.f32 1.5, %v3236
    %v3238 = vmul.f32 %v3233, %v3237
    %vm3239 = vweird.f32 %v3147
    %vm3240 = vweird.f32 %v3233
    %vm3241 = vmor %vm3239, %vm3240
    %v3242 = vsel %vm3241, %v3233, %v3238
    %v3243 = vrsqrt.pop %v3148
    %v3244 = vmul.f32 %v3243, %v3148
    %v3245 = vmul.f32 %v3244, %v3243
    %v3246 = vmul.f32 0.5, %v3245
    %v3247 = vsub.f32 1.5, %v3246
    %v3248 = vmul.f32 %v3243, %v3247
    %vm3249 = vweird.f32 %v3148
    %vm3250 = vweird.f32 %v3243
    %vm3251 = vmor %vm3249, %vm3250
    %v3252 = vsel %vm3251, %v3243, %v3248
    %v3253 = vrsqrt.pop %v3149
    %v3254 = vmul.f32 %v3253, %v3149
    %v3255 = vmul.f32 %v3254, %v3253
    %v3256 = vmul.f32 0.5, %v3255
    %v3257 = vsub.f32 1.5, %v3256
    %v3258 = vmul.f32 %v3253, %v3257
    %vm3259 = vweird.f32 %v3149
    %vm3260 = vweird.f32 %v3253
    %vm3261 = vmor %vm3259, %vm3260
    %v3262 = vsel %vm3261, %v3253, %v3258
    %v3263 = vrsqrt.pop %v3150
    %v3264 = vmul.f32 %v3263, %v3150
    %v3265 = vmul.f32 %v3264, %v3263
    %v3266 = vmul.f32 0.5, %v3265
    %v3267 = vsub.f32 1.5, %v3266
    %v3268 = vmul.f32 %v3263, %v3267
    %vm3269 = vweird.f32 %v3150
    %vm3270 = vweird.f32 %v3263
    %vm3271 = vmor %vm3269, %vm3270
    %v3272 = vsel %vm3271, %v3263, %v3268
    %v3273 = vrsqrt.pop %v3151
    %v3274 = vmul.f32 %v3273, %v3151
    %v3275 = vmul.f32 %v3274, %v3273
    %v3276 = vmul.f32 0.5, %v3275
    %v3277 = vsub.f32 1.5, %v3276
    %v3278 = vmul.f32 %v3273, %v3277
    %vm3279 = vweird.f32 %v3151
    %vm3280 = vweird.f32 %v3273
    %vm3281 = vmor %vm3279, %vm3280
    %v3282 = vsel %vm3281, %v3273, %v3278
    %v3283 = vrsqrt.pop %v3152
    %v3284 = vmul.f32 %v3283, %v3152
    %v3285 = vmul.f32 %v3284, %v3283
    %v3286 = vmul.f32 0.5, %v3285
    %v3287 = vsub.f32 1.5, %v3286
    %v3288 = vmul.f32 %v3283, %v3287
    %vm3289 = vweird.f32 %v3152
    %vm3290 = vweird.f32 %v3283
    %vm3291 = vmor %vm3289, %vm3290
    %v3292 = vsel %vm3291, %v3283, %v3288
    %v3293 = vrsqrt.pop %v3153
    %v3294 = vmul.f32 %v3293, %v3153
    %v3295 = vmul.f32 %v3294, %v3293
    %v3296 = vmul.f32 0.5, %v3295
    %v3297 = vsub.f32 1.5, %v3296
    %v3298 = vmul.f32 %v3293, %v3297
    %vm3299 = vweird.f32 %v3153
    %vm3300 = vweird.f32 %v3293
    %vm3301 = vmor %vm3299, %vm3300
    %v3302 = vsel %vm3301, %v3293, %v3298
    %v3303 = vrsqrt.pop %v3154
    %v3304 = vmul.f32 %v3303, %v3154
    %v3305 = vmul.f32 %v3304, %v3303
    %v3306 = vmul.f32 0.5, %v3305
    %v3307 = vsub.f32 1.5, %v3306
    %v3308 = vmul.f32 %v3303, %v3307
    %vm3309 = vweird.f32 %v3154
    %vm3310 = vweird.f32 %v3303
    %vm3311 = vmor %vm3309, %vm3310
    %v3312 = vsel %vm3311, %v3303, %v3308
    %v3313 = vrsqrt.pop %v3155
    %v3314 = vmul.f32 %v3313, %v3155
    %v3315 = vmul.f32 %v3314, %v3313
    %v3316 = vmul.f32 0.5, %v3315
    %v3317 = vsub.f32 1.5, %v3316
    %v3318 = vmul.f32 %v3313, %v3317
    %vm3319 = vweird.f32 %v3155
    %vm3320 = vweird.f32 %v3313
    %vm3321 = vmor %vm3319, %vm3320
    %v3322 = vsel %vm3321, %v3313, %v3318
    %v3323 = vrsqrt.pop %v3156
    %v3324 = vmul.f32 %v3323, %v3156
    %v3325 = vmul.f32 %v3324, %v3323
    %v3326 = vmul.f32 0.5, %v3325
    %v3327 = vsub.f32 1.5, %v3326
    %v3328 = vmul.f32 %v3323, %v3327
    %vm3329 = vweird.f32 %v3156
    %vm3330 = vweird.f32 %v3323
    %vm3331 = vmor %vm3329, %vm3330
    %v3332 = vsel %vm3331, %v3323, %v3328
    %v3333 = vrsqrt.pop %v3157
    %v3334 = vmul.f32 %v3333, %v3157
    %v3335 = vmul.f32 %v3334, %v3333
    %v3336 = vmul.f32 0.5, %v3335
    %v3337 = vsub.f32 1.5, %v3336
    %v3338 = vmul.f32 %v3333, %v3337
    %vm3339 = vweird.f32 %v3157
    %vm3340 = vweird.f32 %v3333
    %vm3341 = vmor %vm3339, %vm3340
    %v3342 = vsel %vm3341, %v3333, %v3338
    %v3343 = vrsqrt.pop %v3158
    %v3344 = vmul.f32 %v3343, %v3158
    %v3345 = vmul.f32 %v3344, %v3343
    %v3346 = vmul.f32 0.5, %v3345
    %v3347 = vsub.f32 1.5, %v3346
    %v3348 = vmul.f32 %v3343, %v3347
    %vm3349 = vweird.f32 %v3158
    %vm3350 = vweird.f32 %v3343
    %vm3351 = vmor %vm3349, %vm3350
    %v3352 = vsel %vm3351, %v3343, %v3348
    %v3353 = vrsqrt.pop %v3159
    %v3354 = vmul.f32 %v3353, %v3159
    %v3355 = vmul.f32 %v3354, %v3353
    %v3356 = vmul.f32 0.5, %v3355
    %v3357 = vsub.f32 1.5, %v3356
    %v3358 = vmul.f32 %v3353, %v3357
    %vm3359 = vweird.f32 %v3159
    %vm3360 = vweird.f32 %v3353
    %vm3361 = vmor %vm3359, %vm3360
    %v3362 = vsel %vm3361, %v3353, %v3358
    %v3363 = vrsqrt.pop %v3160
    %v3364 = vmul.f32 %v3363, %v3160
    %v3365 = vmul.f32 %v3364, %v3363
    %v3366 = vmul.f32 0.5, %v3365
    %v3367 = vsub.f32 1.5, %v3366
    %v3368 = vmul.f32 %v3363, %v3367
    %vm3369 = vweird.f32 %v3160
    %vm3370 = vweird.f32 %v3363
    %vm3371 = vmor %vm3369, %vm3370
    %v3372 = vsel %vm3371, %v3363, %v3368
    %v3373 = vrsqrt.pop %v3161
    %v3374 = vmul.f32 %v3373, %v3161
    %v3375 = vmul.f32 %v3374, %v3373
    %v3376 = vmul.f32 0.5, %v3375
    %v3377 = vsub.f32 1.5, %v3376
    %v3378 = vmul.f32 %v3373, %v3377
    %vm3379 = vweird.f32 %v3161
    %vm3380 = vweird.f32 %v3373
    %vm3381 = vmor %vm3379, %vm3380
    %v3382 = vsel %vm3381, %v3373, %v3378
    %v3383 = vrsqrt.pop %v3162
    %v3384 = vmul.f32 %v3383, %v3162
    %v3385 = vmul.f32 %v3384, %v3383
    %v3386 = vmul.f32 0.5, %v3385
    %v3387 = vsub.f32 1.5, %v3386
    %v3388 = vmul.f32 %v3383, %v3387
    %vm3389 = vweird.f32 %v3162
    %vm3390 = vweird.f32 %v3383
    %vm3391 = vmor %vm3389, %vm3390
    %v3392 = vsel %vm3391, %v3383, %v3388
    %v3393 = vrsqrt.pop %v3163
    %v3394 = vmul.f32 %v3393, %v3163
    %v3395 = vmul.f32 %v3394, %v3393
    %v3396 = vmul.f32 0.5, %v3395
    %v3397 = vsub.f32 1.5, %v3396
    %v3398 = vmul.f32 %v3393, %v3397
    %vm3399 = vweird.f32 %v3163
    %vm3400 = vweird.f32 %v3393
    %vm3401 = vmor %vm3399, %vm3400
    %v3402 = vsel %vm3401, %v3393, %v3398
    %v3403 = vrsqrt.pop %v3164
    %v3404 = vmul.f32 %v3403, %v3164
    %v3405 = vmul.f32 %v3404, %v3403
    %v3406 = vmul.f32 0.5, %v3405
    %v3407 = vsub.f32 1.5, %v3406
    %v3408 = vmul.f32 %v3403, %v3407
    %vm3409 = vweird.f32 %v3164
    %vm3410 = vweird.f32 %v3403
    %vm3411 = vmor %vm3409, %vm3410
    %v3412 = vsel %vm3411, %v3403, %v3408
    %v3413 = vrsqrt.pop %v3165
    %v3414 = vmul.f32 %v3413, %v3165
    %v3415 = vmul.f32 %v3414, %v3413
    %v3416 = vmul.f32 0.5, %v3415
    %v3417 = vsub.f32 1.5, %v3416
    %v3418 = vmul.f32 %v3413, %v3417
    %vm3419 = vweird.f32 %v3165
    %vm3420 = vweird.f32 %v3413
    %vm3421 = vmor %vm3419, %vm3420
    %v3422 = vsel %vm3421, %v3413, %v3418
    %v3423 = vrsqrt.pop %v3166
    %v3424 = vmul.f32 %v3423, %v3166
    %v3425 = vmul.f32 %v3424, %v3423
    %v3426 = vmul.f32 0.5, %v3425
    %v3427 = vsub.f32 1.5, %v3426
    %v3428 = vmul.f32 %v3423, %v3427
    %vm3429 = vweird.f32 %v3166
    %vm3430 = vweird.f32 %v3423
    %vm3431 = vmor %vm3429, %vm3430
    %v3432 = vsel %vm3431, %v3423, %v3428
    %v3433 = vrsqrt.pop %v3167
    %v3434 = vmul.f32 %v3433, %v3167
    %v3435 = vmul.f32 %v3434, %v3433
    %v3436 = vmul.f32 0.5, %v3435
    %v3437 = vsub.f32 1.5, %v3436
    %v3438 = vmul.f32 %v3433, %v3437
    %vm3439 = vweird.f32 %v3167
    %vm3440 = vweird.f32 %v3433
    %vm3441 = vmor %vm3439, %vm3440
    %v3442 = vsel %vm3441, %v3433, %v3438
    %v3443 = vrsqrt.pop %v3168
    %v3444 = vmul.f32 %v3443, %v3168
    %v3445 = vmul.f32 %v3444, %v3443
    %v3446 = vmul.f32 0.5, %v3445
    %v3447 = vsub.f32 1.5, %v3446
    %v3448 = vmul.f32 %v3443, %v3447
    %vm3449 = vweird.f32 %v3168
    %vm3450 = vweird.f32 %v3443
    %vm3451 = vmor %vm3449, %vm3450
    %v3452 = vsel %vm3451, %v3443, %v3448
    %v3453 = vrsqrt.pop %v3169
    %v3454 = vmul.f32 %v3453, %v3169
    %v3455 = vmul.f32 %v3454, %v3453
    %v3456 = vmul.f32 0.5, %v3455
    %v3457 = vsub.f32 1.5, %v3456
    %v3458 = vmul.f32 %v3453, %v3457
    %vm3459 = vweird.f32 %v3169
    %vm3460 = vweird.f32 %v3453
    %vm3461 = vmor %vm3459, %vm3460
    %v3462 = vsel %vm3461, %v3453, %v3458
    %v3463 = vrsqrt.pop %v3170
    %v3464 = vmul.f32 %v3463, %v3170
    %v3465 = vmul.f32 %v3464, %v3463
    %v3466 = vmul.f32 0.5, %v3465
    %v3467 = vsub.f32 1.5, %v3466
    %v3468 = vmul.f32 %v3463, %v3467
    %vm3469 = vweird.f32 %v3170
    %vm3470 = vweird.f32 %v3463
    %vm3471 = vmor %vm3469, %vm3470
    %v3472 = vsel %vm3471, %v3463, %v3468
    %v3473 = vrsqrt.pop %v3171
    %v3474 = vmul.f32 %v3473, %v3171
    %v3475 = vmul.f32 %v3474, %v3473
    %v3476 = vmul.f32 0.5, %v3475
    %v3477 = vsub.f32 1.5, %v3476
    %v3478 = vmul.f32 %v3473, %v3477
    %vm3479 = vweird.f32 %v3171
    %vm3480 = vweird.f32 %v3473
    %vm3481 = vmor %vm3479, %vm3480
    %v3482 = vsel %vm3481, %v3473, %v3478
    %v3483 = vrsqrt.pop %v3172
    %v3484 = vmul.f32 %v3483, %v3172
    %v3485 = vmul.f32 %v3484, %v3483
    %v3486 = vmul.f32 0.5, %v3485
    %v3487 = vsub.f32 1.5, %v3486
    %v3488 = vmul.f32 %v3483, %v3487
    %vm3489 = vweird.f32 %v3172
    %vm3490 = vweird.f32 %v3483
    %vm3491 = vmor %vm3489, %vm3490
    %v3492 = vsel %vm3491, %v3483, %v3488
    %v3493 = vmul.f32 %v2949, %v3182
    %v3494 = vmul.f32 %v2950, %v3192
    %v3495 = vmul.f32 %v2951, %v3202
    %v3496 = vmul.f32 %v2952, %v3212
    %v3497 = vmul.f32 %v2953, %v3222
    %v3498 = vmul.f32 %v2954, %v3232
    %v3499 = vmul.f32 %v2955, %v3242
    %v3500 = vmul.f32 %v2956, %v3252
    %v3501 = vmul.f32 %v2957, %v3262
    %v3502 = vmul.f32 %v2958, %v3272
    %v3503 = vmul.f32 %v2959, %v3282
    %v3504 = vmul.f32 %v2960, %v3292
    %v3505 = vmul.f32 %v2961, %v3302
    %v3506 = vmul.f32 %v2962, %v3312
    %v3507 = vmul.f32 %v2963, %v3322
    %v3508 = vmul.f32 %v2964, %v3332
    %v3509 = vmul.f32 %v2965, %v3342
    %v3510 = vmul.f32 %v2966, %v3352
    %v3511 = vmul.f32 %v2967, %v3362
    %v3512 = vmul.f32 %v2968, %v3372
    %v3513 = vmul.f32 %v2969, %v3382
    %v3514 = vmul.f32 %v2970, %v3392
    %v3515 = vmul.f32 %v2971, %v3402
    %v3516 = vmul.f32 %v2972, %v3412
    %v3517 = vmul.f32 %v2973, %v3422
    %v3518 = vmul.f32 %v2974, %v3432
    %v3519 = vmul.f32 %v2975, %v3442
    %v3520 = vmul.f32 %v2976, %v3452
    %v3521 = vmul.f32 %v2977, %v3462
    %v3522 = vmul.f32 %v2978, %v3472
    %v3523 = vmul.f32 %v2979, %v3482
    %v3524 = vmul.f32 %v2980, %v3492
    %v3526 = vperm.slane %v2818, 0
    %v3528 = vmul.f32 %v3493, %v3526
    %v3529 = vmul.f32 %v3494, %v3526
    %v3530 = vmul.f32 %v3495, %v3526
    %v3531 = vmul.f32 %v3496, %v3526
    %v3532 = vmul.f32 %v3497, %v3526
    %v3533 = vmul.f32 %v3498, %v3526
    %v3534 = vmul.f32 %v3499, %v3526
    %v3535 = vmul.f32 %v3500, %v3526
    %v3536 = vmul.f32 %v3501, %v3526
    %v3537 = vmul.f32 %v3502, %v3526
    %v3538 = vmul.f32 %v3503, %v3526
    %v3539 = vmul.f32 %v3504, %v3526
    %v3540 = vmul.f32 %v3505, %v3526
    %v3541 = vmul.f32 %v3506, %v3526
    %v3542 = vmul.f32 %v3507, %v3526
    %v3543 = vmul.f32 %v3508, %v3526
    %v3544 = vmul.f32 %v3509, %v3526
    %v3545 = vmul.f32 %v3510, %v3526
    %v3546 = vmul.f32 %v3511, %v3526
    %v3547 = vmul.f32 %v3512, %v3526
    %v3548 = vmul.f32 %v3513, %v3526
    %v3549 = vmul.f32 %v3514, %v3526
    %v3550 = vmul.f32 %v3515, %v3526
    %v3551 = vmul.f32 %v3516, %v3526
    %v3552 = vmul.f32 %v3517, %v3526
    %v3553 = vmul.f32 %v3518, %v3526
    %v3554 = vmul.f32 %v3519, %v3526
    %v3555 = vmul.f32 %v3520, %v3526
    %v3556 = vmul.f32 %v3521, %v3526
    %v3557 = vmul.f32 %v3522, %v3526
    %v3558 = vmul.f32 %v3523, %v3526
    %v3559 = vmul.f32 %v3524, %v3526
    %v3561 = vperm.slane %v2820, 0
    %v3563 = vadd.f32 %v3528, %v3561
    %v3564 = vadd.f32 %v3529, %v3561
    %v3565 = vadd.f32 %v3530, %v3561
    %v3566 = vadd.f32 %v3531, %v3561
    %v3567 = vadd.f32 %v3532, %v3561
    %v3568 = vadd.f32 %v3533, %v3561
    %v3569 = vadd.f32 %v3534, %v3561
    %v3570 = vadd.f32 %v3535, %v3561
    %v3571 = vadd.f32 %v3536, %v3561
    %v3572 = vadd.f32 %v3537, %v3561
    %v3573 = vadd.f32 %v3538, %v3561
    %v3574 = vadd.f32 %v3539, %v3561
    %v3575 = vadd.f32 %v3540, %v3561
    %v3576 = vadd.f32 %v3541, %v3561
    %v3577 = vadd.f32 %v3542, %v3561
    %v3578 = vadd.f32 %v3543, %v3561
    %v3579 = vadd.f32 %v3544, %v3561
    %v3580 = vadd.f32 %v3545, %v3561
    %v3581 = vadd.f32 %v3546, %v3561
    %v3582 = vadd.f32 %v3547, %v3561
    %v3583 = vadd.f32 %v3548, %v3561
    %v3584 = vadd.f32 %v3549, %v3561
    %v3585 = vadd.f32 %v3550, %v3561
    %v3586 = vadd.f32 %v3551, %v3561
    %v3587 = vadd.f32 %v3552, %v3561
    %v3588 = vadd.f32 %v3553, %v3561
    %v3589 = vadd.f32 %v3554, %v3561
    %v3590 = vadd.f32 %v3555, %v3561
    %v3591 = vadd.f32 %v3556, %v3561
    %v3592 = vadd.f32 %v3557, %v3561
    %v3593 = vadd.f32 %v3558, %v3561
    %v3594 = vadd.f32 %v3559, %v3561
    %v3595 = vmax.f32 %v3563, 0.0
    %v3596 = vmax.f32 %v3564, 0.0
    %v3597 = vmax.f32 %v3565, 0.0
    %v3598 = vmax.f32 %v3566, 0.0
    %v3599 = vmax.f32 %v3567, 0.0
    %v3600 = vmax.f32 %v3568, 0.0
    %v3601 = vmax.f32 %v3569, 0.0
    %v3602 = vmax.f32 %v3570, 0.0
    %v3603 = vmax.f32 %v3571, 0.0
    %v3604 = vmax.f32 %v3572, 0.0
    %v3605 = vmax.f32 %v3573, 0.0
    %v3606 = vmax.f32 %v3574, 0.0
    %v3607 = vmax.f32 %v3575, 0.0
    %v3608 = vmax.f32 %v3576, 0.0
    %v3609 = vmax.f32 %v3577, 0.0
    %v3610 = vmax.f32 %v3578, 0.0
    %v3611 = vmax.f32 %v3579, 0.0
    %v3612 = vmax.f32 %v3580, 0.0
    %v3613 = vmax.f32 %v3581, 0.0
    %v3614 = vmax.f32 %v3582, 0.0
    %v3615 = vmax.f32 %v3583, 0.0
    %v3616 = vmax.f32 %v3584, 0.0
    %v3617 = vmax.f32 %v3585, 0.0
    %v3618 = vmax.f32 %v3586, 0.0
    %v3619 = vmax.f32 %v3587, 0.0
    %v3620 = vmax.f32 %v3588, 0.0
    %v3621 = vmax.f32 %v3589, 0.0
    %v3622 = vmax.f32 %v3590, 0.0
    %v3623 = vmax.f32 %v3591, 0.0
    %v3624 = vmax.f32 %v3592, 0.0
    %v3625 = vmax.f32 %v3593, 0.0
    %v3626 = vmax.f32 %v3594, 0.0
    %s3627 = scalar_lea.vmem [#allocation2], 192
    %v3628 = vld [vmem:[%s3627] sm:$0xff]
    %v3629 = vld [vmem:[%s3627 + $0x8] sm:$0xff]
    %v3630 = vld [vmem:[%s3627 + $0x10] sm:$0xff]
    %v3631 = vld [vmem:[%s3627 + $0x18] sm:$0xff]
    %v3632 = vld [vmem:[%s3627 + $0x20] sm:$0xff]
    %v3633 = vld [vmem:[%s3627 + $0x28] sm:$0xff]
    %v3634 = vld [vmem:[%s3627 + $0x30] sm:$0xff]
    %v3635 = vld [vmem:[%s3627 + $0x38] sm:$0xff]
    %v3636 = vld [vmem:[%s3627 + $0x40] sm:$0xff]
    %v3637 = vld [vmem:[%s3627 + $0x48] sm:$0xff]
    %v3638 = vld [vmem:[%s3627 + $0x50] sm:$0xff]
    %v3639 = vld [vmem:[%s3627 + $0x58] sm:$0xff]
    %v3640 = vld [vmem:[%s3627 + $0x60] sm:$0xff]
    %v3641 = vld [vmem:[%s3627 + $0x68] sm:$0xff]
    %v3642 = vld [vmem:[%s3627 + $0x70] sm:$0xff]
    %v3643 = vld [vmem:[%s3627 + $0x78] sm:$0xff]
    %v3644 = vld [vmem:[%s3627 + $0x80] sm:$0xff]
    %v3645 = vld [vmem:[%s3627 + $0x88] sm:$0xff]
    %v3646 = vld [vmem:[%s3627 + $0x90] sm:$0xff]
    %v3647 = vld [vmem:[%s3627 + $0x98] sm:$0xff]
    %v3648 = vld [vmem:[%s3627 + $0xa0] sm:$0xff]
    %v3649 = vld [vmem:[%s3627 + $0xa8] sm:$0xff]
    %v3650 = vld [vmem:[%s3627 + $0xb0] sm:$0xff]
    %v3651 = vld [vmem:[%s3627 + $0xb8] sm:$0xff]
    %s3652 = scalar_lea.vmem %s6, 3
    %v3653 = vld [vmem:[%s3652] sm:$0x7]
    %v3655 = vperm.slane %v3653, 0
    %v3656 = vperm.slane %v3653, 1
    %v3657 = vperm.slane %v3653, 2
    %v3662 = vsel %vm300, %v3595, 0
    %v3665 = vsel %vm300, %v3596, 0
    %v3668 = vsel %vm300, %v3597, 0
    %v3671 = vsel %vm300, %v3598, 0
    %v3674 = vsel %vm300, %v3599, 0
    %v3677 = vsel %vm300, %v3600, 0
    %v3680 = vsel %vm300, %v3601, 0
    %v3683 = vsel %vm300, %v3602, 0
    %v3686 = vsel %vm300, %v3603, 0
    %v3689 = vsel %vm300, %v3604, 0
    %v3692 = vsel %vm300, %v3605, 0
    %v3695 = vsel %vm300, %v3606, 0
    %v3698 = vsel %vm300, %v3607, 0
    %v3701 = vsel %vm300, %v3608, 0
    %v3704 = vsel %vm300, %v3609, 0
    %v3707 = vsel %vm300, %v3610, 0
    %v3710 = vsel %vm300, %v3611, 0
    %v3713 = vsel %vm300, %v3612, 0
    %v3716 = vsel %vm300, %v3613, 0
    %v3719 = vsel %vm300, %v3614, 0
    %v3722 = vsel %vm300, %v3615, 0
    %v3725 = vsel %vm300, %v3616, 0
    %v3728 = vsel %vm300, %v3617, 0
    %v3731 = vsel %vm300, %v3618, 0
    %v3734 = vsel %vm300, %v3619, 0
    %v3737 = vsel %vm300, %v3620, 0
    %v3740 = vsel %vm300, %v3621, 0
    %v3743 = vsel %vm300, %v3622, 0
    %v3746 = vsel %vm300, %v3623, 0
    %v3749 = vsel %vm300, %v3624, 0
    %v3752 = vsel %vm300, %v3625, 0
    %v3755 = vsel %vm300, %v3626, 0
    %3757 = vmatpush.msra.mxu0 0.0
    %3758 = vmatpush.msra.mxu0 0.0
    %3759 = vmatpush.msra.mxu0 0.0
    %3760 = vmatpush.msra.mxu0 0.0
    %3761 = vmatpush.msra.mxu0 0.0
    %3762 = vmatpush.msra.mxu0 0.0
    %3763 = vmatpush.msra.mxu0 0.0
    %3764 = vmatpush.msra.mxu0 0.0
    %3765 = vmatpush.msra.mxu0 %v3649
    %3766 = vmatpush.msra.mxu0 %v3646
    %3767 = vmatpush.msra.mxu0 %v3643
    %3768 = vmatpush.msra.mxu0 %v3640
    %3769 = vmatpush.msra.mxu0 %v3637
    %3770 = vmatpush.msra.mxu0 %v3634
    %3771 = vmatpush.msra.mxu0 %v3631
    %3772 = vmatpush.msra.mxu0 %v3628
    %3773 = vmatmul.f32.gmra.mxu0 %v3662
    %v3774 = vpop.f32.mrf.mxu0
    %v3775 = vadd.f32 %v3655, %v3774
    %3776 = vmatmul.f32.gmra.mxu0 %v3665
    %v3777 = vpop.f32.mrf.mxu0
    %v3778 = vadd.f32 %v3655, %v3777
    %3779 = vmatmul.f32.gmra.mxu0 %v3668
    %v3780 = vpop.f32.mrf.mxu0
    %v3781 = vadd.f32 %v3655, %v3780
    %3782 = vmatmul.f32.gmra.mxu0 %v3671
    %v3783 = vpop.f32.mrf.mxu0
    %v3784 = vadd.f32 %v3655, %v3783
    %3785 = vmatmul.f32.gmra.mxu0 %v3674
    %v3786 = vpop.f32.mrf.mxu0
    %v3787 = vadd.f32 %v3655, %v3786
    %3788 = vmatmul.f32.gmra.mxu0 %v3677
    %v3789 = vpop.f32.mrf.mxu0
    %v3790 = vadd.f32 %v3655, %v3789
    %3791 = vmatmul.f32.gmra.mxu0 %v3680
    %v3792 = vpop.f32.mrf.mxu0
    %v3793 = vadd.f32 %v3655, %v3792
    %3794 = vmatmul.f32.gmra.mxu0 %v3683
    %v3795 = vpop.f32.mrf.mxu0
    %v3796 = vadd.f32 %v3655, %v3795
    %3797 = vmatmul.f32.gmra.mxu0 %v3686
    %v3798 = vpop.f32.mrf.mxu0
    %v3799 = vadd.f32 %v3655, %v3798
    %3800 = vmatmul.f32.gmra.mxu0 %v3689
    %v3801 = vpop.f32.mrf.mxu0
    %v3802 = vadd.f32 %v3655, %v3801
    %3803 = vmatmul.f32.gmra.mxu0 %v3692
    %v3804 = vpop.f32.mrf.mxu0
    %v3805 = vadd.f32 %v3655, %v3804
    %3806 = vmatmul.f32.gmra.mxu0 %v3695
    %v3807 = vpop.f32.mrf.mxu0
    %v3808 = vadd.f32 %v3655, %v3807
    %3809 = vmatmul.f32.gmra.mxu0 %v3698
    %v3810 = vpop.f32.mrf.mxu0
    %v3811 = vadd.f32 %v3655, %v3810
    %3812 = vmatmul.f32.gmra.mxu0 %v3701
    %v3813 = vpop.f32.mrf.mxu0
    %v3814 = vadd.f32 %v3655, %v3813
    %3815 = vmatmul.f32.gmra.mxu0 %v3704
    %v3816 = vpop.f32.mrf.mxu0
    %v3817 = vadd.f32 %v3655, %v3816
    %3818 = vmatmul.f32.gmra.mxu0 %v3707
    %v3819 = vpop.f32.mrf.mxu0
    %v3820 = vadd.f32 %v3655, %v3819
    %3821 = vmatmul.f32.gmra.mxu0 %v3710
    %v3822 = vpop.f32.mrf.mxu0
    %v3823 = vadd.f32 %v3655, %v3822
    %3824 = vmatmul.f32.gmra.mxu0 %v3713
    %v3825 = vpop.f32.mrf.mxu0
    %v3826 = vadd.f32 %v3655, %v3825
    %3827 = vmatmul.f32.gmra.mxu0 %v3716
    %v3828 = vpop.f32.mrf.mxu0
    %v3829 = vadd.f32 %v3655, %v3828
    %3830 = vmatmul.f32.gmra.mxu0 %v3719
    %v3831 = vpop.f32.mrf.mxu0
    %v3832 = vadd.f32 %v3655, %v3831
    %3833 = vmatmul.f32.gmra.mxu0 %v3722
    %v3834 = vpop.f32.mrf.mxu0
    %v3835 = vadd.f32 %v3655, %v3834
    %3836 = vmatmul.f32.gmra.mxu0 %v3725
    %v3837 = vpop.f32.mrf.mxu0
    %v3838 = vadd.f32 %v3655, %v3837
    %3839 = vmatmul.f32.gmra.mxu0 %v3728
    %v3840 = vpop.f32.mrf.mxu0
    %v3841 = vadd.f32 %v3655, %v3840
    %3842 = vmatmul.f32.gmra.mxu0 %v3731
    %v3843 = vpop.f32.mrf.mxu0
    %v3844 = vadd.f32 %v3655, %v3843
    %3845 = vmatmul.f32.gmra.mxu0 %v3734
    %v3846 = vpop.f32.mrf.mxu0
    %v3847 = vadd.f32 %v3655, %v3846
    %3848 = vmatmul.f32.gmra.mxu0 %v3737
    %v3849 = vpop.f32.mrf.mxu0
    %v3850 = vadd.f32 %v3655, %v3849
    %3851 = vmatmul.f32.gmra.mxu0 %v3740
    %v3852 = vpop.f32.mrf.mxu0
    %v3853 = vadd.f32 %v3655, %v3852
    %3854 = vmatmul.f32.gmra.mxu0 %v3743
    %v3855 = vpop.f32.mrf.mxu0
    %v3856 = vadd.f32 %v3655, %v3855
    %3857 = vmatmul.f32.gmra.mxu0 %v3746
    %v3858 = vpop.f32.mrf.mxu0
    %v3859 = vadd.f32 %v3655, %v3858
    %3860 = vmatmul.f32.gmra.mxu0 %v3749
    %v3861 = vpop.f32.mrf.mxu0
    %v3862 = vadd.f32 %v3655, %v3861
    %3863 = vmatmul.f32.gmra.mxu0 %v3752
    %v3864 = vpop.f32.mrf.mxu0
    %v3865 = vadd.f32 %v3655, %v3864
    %3866 = vmatmul.f32.gmra.mxu0 %v3755
    %v3867 = vpop.f32.mrf.mxu0
    %v3868 = vadd.f32 %v3655, %v3867
    %3869 = vdwg.mxu0
    %3870 = vmatpush.msra.mxu0 0.0
    %3871 = vmatpush.msra.mxu0 0.0
    %3872 = vmatpush.msra.mxu0 0.0
    %3873 = vmatpush.msra.mxu0 0.0
    %3874 = vmatpush.msra.mxu0 0.0
    %3875 = vmatpush.msra.mxu0 0.0
    %3876 = vmatpush.msra.mxu0 0.0
    %3877 = vmatpush.msra.mxu0 0.0
    %3878 = vmatpush.msra.mxu0 %v3650
    %3879 = vmatpush.msra.mxu0 %v3647
    %3880 = vmatpush.msra.mxu0 %v3644
    %3881 = vmatpush.msra.mxu0 %v3641
    %3882 = vmatpush.msra.mxu0 %v3638
    %3883 = vmatpush.msra.mxu0 %v3635
    %3884 = vmatpush.msra.mxu0 %v3632
    %3885 = vmatpush.msra.mxu0 %v3629
    %3886 = vmatmul.f32.gmra.mxu0 %v3662
    %v3887 = vpop.f32.mrf.mxu0
    %v3888 = vadd.f32 %v3656, %v3887
    %3889 = vmatmul.f32.gmra.mxu0 %v3665
    %v3890 = vpop.f32.mrf.mxu0
    %v3891 = vadd.f32 %v3656, %v3890
    %3892 = vmatmul.f32.gmra.mxu0 %v3668
    %v3893 = vpop.f32.mrf.mxu0
    %v3894 = vadd.f32 %v3656, %v3893
    %3895 = vmatmul.f32.gmra.mxu0 %v3671
    %v3896 = vpop.f32.mrf.mxu0
    %v3897 = vadd.f32 %v3656, %v3896
    %3898 = vmatmul.f32.gmra.mxu0 %v3674
    %v3899 = vpop.f32.mrf.mxu0
    %v3900 = vadd.f32 %v3656, %v3899
    %3901 = vmatmul.f32.gmra.mxu0 %v3677
    %v3902 = vpop.f32.mrf.mxu0
    %v3903 = vadd.f32 %v3656, %v3902
    %3904 = vmatmul.f32.gmra.mxu0 %v3680
    %v3905 = vpop.f32.mrf.mxu0
    %v3906 = vadd.f32 %v3656, %v3905
    %3907 = vmatmul.f32.gmra.mxu0 %v3683
    %v3908 = vpop.f32.mrf.mxu0
    %v3909 = vadd.f32 %v3656, %v3908
    %3910 = vmatmul.f32.gmra.mxu0 %v3686
    %v3911 = vpop.f32.mrf.mxu0
    %v3912 = vadd.f32 %v3656, %v3911
    %3913 = vmatmul.f32.gmra.mxu0 %v3689
    %v3914 = vpop.f32.mrf.mxu0
    %v3915 = vadd.f32 %v3656, %v3914
    %3916 = vmatmul.f32.gmra.mxu0 %v3692
    %v3917 = vpop.f32.mrf.mxu0
    %v3918 = vadd.f32 %v3656, %v3917
    %3919 = vmatmul.f32.gmra.mxu0 %v3695
    %v3920 = vpop.f32.mrf.mxu0
    %v3921 = vadd.f32 %v3656, %v3920
    %3922 = vmatmul.f32.gmra.mxu0 %v3698
    %v3923 = vpop.f32.mrf.mxu0
    %v3924 = vadd.f32 %v3656, %v3923
    %3925 = vmatmul.f32.gmra.mxu0 %v3701
    %v3926 = vpop.f32.mrf.mxu0
    %v3927 = vadd.f32 %v3656, %v3926
    %3928 = vmatmul.f32.gmra.mxu0 %v3704
    %v3929 = vpop.f32.mrf.mxu0
    %v3930 = vadd.f32 %v3656, %v3929
    %3931 = vmatmul.f32.gmra.mxu0 %v3707
    %v3932 = vpop.f32.mrf.mxu0
    %v3933 = vadd.f32 %v3656, %v3932
    %3934 = vmatmul.f32.gmra.mxu0 %v3710
    %v3935 = vpop.f32.mrf.mxu0
    %v3936 = vadd.f32 %v3656, %v3935
    %3937 = vmatmul.f32.gmra.mxu0 %v3713
    %v3938 = vpop.f32.mrf.mxu0
    %v3939 = vadd.f32 %v3656, %v3938
    %3940 = vmatmul.f32.gmra.mxu0 %v3716
    %v3941 = vpop.f32.mrf.mxu0
    %v3942 = vadd.f32 %v3656, %v3941
    %3943 = vmatmul.f32.gmra.mxu0 %v3719
    %v3944 = vpop.f32.mrf.mxu0
    %v3945 = vadd.f32 %v3656, %v3944
    %3946 = vmatmul.f32.gmra.mxu0 %v3722
    %v3947 = vpop.f32.mrf.mxu0
    %v3948 = vadd.f32 %v3656, %v3947
    %3949 = vmatmul.f32.gmra.mxu0 %v3725
    %v3950 = vpop.f32.mrf.mxu0
    %v3951 = vadd.f32 %v3656, %v3950
    %3952 = vmatmul.f32.gmra.mxu0 %v3728
    %v3953 = vpop.f32.mrf.mxu0
    %v3954 = vadd.f32 %v3656, %v3953
    %3955 = vmatmul.f32.gmra.mxu0 %v3731
    %v3956 = vpop.f32.mrf.mxu0
    %v3957 = vadd.f32 %v3656, %v3956
    %3958 = vmatmul.f32.gmra.mxu0 %v3734
    %v3959 = vpop.f32.mrf.mxu0
    %v3960 = vadd.f32 %v3656, %v3959
    %3961 = vmatmul.f32.gmra.mxu0 %v3737
    %v3962 = vpop.f32.mrf.mxu0
    %v3963 = vadd.f32 %v3656, %v3962
    %3964 = vmatmul.f32.gmra.mxu0 %v3740
    %v3965 = vpop.f32.mrf.mxu0
    %v3966 = vadd.f32 %v3656, %v3965
    %3967 = vmatmul.f32.gmra.mxu0 %v3743
    %v3968 = vpop.f32.mrf.mxu0
    %v3969 = vadd.f32 %v3656, %v3968
    %3970 = vmatmul.f32.gmra.mxu0 %v3746
    %v3971 = vpop.f32.mrf.mxu0
    %v3972 = vadd.f32 %v3656, %v3971
    %3973 = vmatmul.f32.gmra.mxu0 %v3749
    %v3974 = vpop.f32.mrf.mxu0
    %v3975 = vadd.f32 %v3656, %v3974
    %3976 = vmatmul.f32.gmra.mxu0 %v3752
    %v3977 = vpop.f32.mrf.mxu0
    %v3978 = vadd.f32 %v3656, %v3977
    %3979 = vmatmul.f32.gmra.mxu0 %v3755
    %v3980 = vpop.f32.mrf.mxu0
    %v3981 = vadd.f32 %v3656, %v3980
    %3982 = vdwg.mxu0
    %3983 = vmatpush.msra.mxu0 0.0
    %3984 = vmatpush.msra.mxu0 0.0
    %3985 = vmatpush.msra.mxu0 0.0
    %3986 = vmatpush.msra.mxu0 0.0
    %3987 = vmatpush.msra.mxu0 0.0
    %3988 = vmatpush.msra.mxu0 0.0
    %3989 = vmatpush.msra.mxu0 0.0
    %3990 = vmatpush.msra.mxu0 0.0
    %3991 = vmatpush.msra.mxu0 %v3651
    %3992 = vmatpush.msra.mxu0 %v3648
    %3993 = vmatpush.msra.mxu0 %v3645
    %3994 = vmatpush.msra.mxu0 %v3642
    %3995 = vmatpush.msra.mxu0 %v3639
    %3996 = vmatpush.msra.mxu0 %v3636
    %3997 = vmatpush.msra.mxu0 %v3633
    %3998 = vmatpush.msra.mxu0 %v3630
    %3999 = vmatmul.f32.gmra.mxu0 %v3662
    %v4000 = vpop.f32.mrf.mxu0
    %v4001 = vadd.f32 %v3657, %v4000
    %4002 = vmatmul.f32.gmra.mxu0 %v3665
    %v4003 = vpop.f32.mrf.mxu0
    %v4004 = vadd.f32 %v3657, %v4003
    %4005 = vmatmul.f32.gmra.mxu0 %v3668
    %v4006 = vpop.f32.mrf.mxu0
    %v4007 = vadd.f32 %v3657, %v4006
    %4008 = vmatmul.f32.gmra.mxu0 %v3671
    %v4009 = vpop.f32.mrf.mxu0
    %v4010 = vadd.f32 %v3657, %v4009
    %4011 = vmatmul.f32.gmra.mxu0 %v3674
    %v4012 = vpop.f32.mrf.mxu0
    %v4013 = vadd.f32 %v3657, %v4012
    %4014 = vmatmul.f32.gmra.mxu0 %v3677
    %v4015 = vpop.f32.mrf.mxu0
    %v4016 = vadd.f32 %v3657, %v4015
    %4017 = vmatmul.f32.gmra.mxu0 %v3680
    %v4018 = vpop.f32.mrf.mxu0
    %v4019 = vadd.f32 %v3657, %v4018
    %4020 = vmatmul.f32.gmra.mxu0 %v3683
    %v4021 = vpop.f32.mrf.mxu0
    %v4022 = vadd.f32 %v3657, %v4021
    %4023 = vmatmul.f32.gmra.mxu0 %v3686
    %v4024 = vpop.f32.mrf.mxu0
    %v4025 = vadd.f32 %v3657, %v4024
    %4026 = vmatmul.f32.gmra.mxu0 %v3689
    %v4027 = vpop.f32.mrf.mxu0
    %v4028 = vadd.f32 %v3657, %v4027
    %4029 = vmatmul.f32.gmra.mxu0 %v3692
    %v4030 = vpop.f32.mrf.mxu0
    %v4031 = vadd.f32 %v3657, %v4030
    %4032 = vmatmul.f32.gmra.mxu0 %v3695
    %v4033 = vpop.f32.mrf.mxu0
    %v4034 = vadd.f32 %v3657, %v4033
    %4035 = vmatmul.f32.gmra.mxu0 %v3698
    %v4036 = vpop.f32.mrf.mxu0
    %v4037 = vadd.f32 %v3657, %v4036
    %4038 = vmatmul.f32.gmra.mxu0 %v3701
    %v4039 = vpop.f32.mrf.mxu0
    %v4040 = vadd.f32 %v3657, %v4039
    %4041 = vmatmul.f32.gmra.mxu0 %v3704
    %v4042 = vpop.f32.mrf.mxu0
    %v4043 = vadd.f32 %v3657, %v4042
    %4044 = vmatmul.f32.gmra.mxu0 %v3707
    %v4045 = vpop.f32.mrf.mxu0
    %v4046 = vadd.f32 %v3657, %v4045
    %4047 = vmatmul.f32.gmra.mxu0 %v3710
    %v4048 = vpop.f32.mrf.mxu0
    %v4049 = vadd.f32 %v3657, %v4048
    %4050 = vmatmul.f32.gmra.mxu0 %v3713
    %v4051 = vpop.f32.mrf.mxu0
    %v4052 = vadd.f32 %v3657, %v4051
    %4053 = vmatmul.f32.gmra.mxu0 %v3716
    %v4054 = vpop.f32.mrf.mxu0
    %v4055 = vadd.f32 %v3657, %v4054
    %4056 = vmatmul.f32.gmra.mxu0 %v3719
    %v4057 = vpop.f32.mrf.mxu0
    %v4058 = vadd.f32 %v3657, %v4057
    %4059 = vmatmul.f32.gmra.mxu0 %v3722
    %v4060 = vpop.f32.mrf.mxu0
    %v4061 = vadd.f32 %v3657, %v4060
    %4062 = vmatmul.f32.gmra.mxu0 %v3725
    %v4063 = vpop.f32.mrf.mxu0
    %v4064 = vadd.f32 %v3657, %v4063
    %4065 = vmatmul.f32.gmra.mxu0 %v3728
    %v4066 = vpop.f32.mrf.mxu0
    %v4067 = vadd.f32 %v3657, %v4066
    %4068 = vmatmul.f32.gmra.mxu0 %v3731
    %v4069 = vpop.f32.mrf.mxu0
    %v4070 = vadd.f32 %v3657, %v4069
    %4071 = vmatmul.f32.gmra.mxu0 %v3734
    %v4072 = vpop.f32.mrf.mxu0
    %v4073 = vadd.f32 %v3657, %v4072
    %4074 = vmatmul.f32.gmra.mxu0 %v3737
    %v4075 = vpop.f32.mrf.mxu0
    %v4076 = vadd.f32 %v3657, %v4075
    %4077 = vmatmul.f32.gmra.mxu0 %v3740
    %v4078 = vpop.f32.mrf.mxu0
    %v4079 = vadd.f32 %v3657, %v4078
    %4080 = vmatmul.f32.gmra.mxu0 %v3743
    %v4081 = vpop.f32.mrf.mxu0
    %v4082 = vadd.f32 %v3657, %v4081
    %4083 = vmatmul.f32.gmra.mxu0 %v3746
    %v4084 = vpop.f32.mrf.mxu0
    %v4085 = vadd.f32 %v3657, %v4084
    %4086 = vmatmul.f32.gmra.mxu0 %v3749
    %v4087 = vpop.f32.mrf.mxu0
    %v4088 = vadd.f32 %v3657, %v4087
    %4089 = vmatmul.f32.gmra.mxu0 %v3752
    %v4090 = vpop.f32.mrf.mxu0
    %v4091 = vadd.f32 %v3657, %v4090
    %4092 = vmatmul.f32.gmra.mxu0 %v3755
    %v4093 = vpop.f32.mrf.mxu0
    %v4094 = vadd.f32 %v3657, %v4093
    %4095 = vdwg.mxu0
    %v4096 = vmul.f32 %v3775, %v3775
    %v4097 = vmul.f32 %v3778, %v3778
    %v4098 = vmul.f32 %v3781, %v3781
    %v4099 = vmul.f32 %v3784, %v3784
    %v4100 = vmul.f32 %v3787, %v3787
    %v4101 = vmul.f32 %v3790, %v3790
    %v4102 = vmul.f32 %v3793, %v3793
    %v4103 = vmul.f32 %v3796, %v3796
    %v4104 = vmul.f32 %v3799, %v3799
    %v4105 = vmul.f32 %v3802, %v3802
    %v4106 = vmul.f32 %v3805, %v3805
    %v4107 = vmul.f32 %v3808, %v3808
    %v4108 = vmul.f32 %v3811, %v3811
    %v4109 = vmul.f32 %v3814, %v3814
    %v4110 = vmul.f32 %v3817, %v3817
    %v4111 = vmul.f32 %v3820, %v3820
    %v4112 = vmul.f32 %v3823, %v3823
    %v4113 = vmul.f32 %v3826, %v3826
    %v4114 = vmul.f32 %v3829, %v3829
    %v4115 = vmul.f32 %v3832, %v3832
    %v4116 = vmul.f32 %v3835, %v3835
    %v4117 = vmul.f32 %v3838, %v3838
    %v4118 = vmul.f32 %v3841, %v3841
    %v4119 = vmul.f32 %v3844, %v3844
    %v4120 = vmul.f32 %v3847, %v3847
    %v4121 = vmul.f32 %v3850, %v3850
    %v4122 = vmul.f32 %v3853, %v3853
    %v4123 = vmul.f32 %v3856, %v3856
    %v4124 = vmul.f32 %v3859, %v3859
    %v4125 = vmul.f32 %v3862, %v3862
    %v4126 = vmul.f32 %v3865, %v3865
    %v4127 = vmul.f32 %v3868, %v3868
    %v4128 = vadd.f32 %v4096, %v4097
    %v4129 = vadd.f32 %v4128, %v4098
    %v4130 = vadd.f32 %v4129, %v4099
    %v4131 = vadd.f32 %v4130, %v4100
    %v4132 = vadd.f32 %v4131, %v4101
    %v4133 = vadd.f32 %v4132, %v4102
    %v4134 = vadd.f32 %v4133, %v4103
    %v4135 = vadd.f32 %v4134, %v4104
    %v4136 = vadd.f32 %v4135, %v4105
    %v4137 = vadd.f32 %v4136, %v4106
    %v4138 = vadd.f32 %v4137, %v4107
    %v4139 = vadd.f32 %v4138, %v4108
    %v4140 = vadd.f32 %v4139, %v4109
    %v4141 = vadd.f32 %v4140, %v4110
    %v4142 = vadd.f32 %v4141, %v4111
    %v4143 = vadd.f32 %v4142, %v4112
    %v4144 = vadd.f32 %v4143, %v4113
    %v4145 = vadd.f32 %v4144, %v4114
    %v4146 = vadd.f32 %v4145, %v4115
    %v4147 = vadd.f32 %v4146, %v4116
    %v4148 = vadd.f32 %v4147, %v4117
    %v4149 = vadd.f32 %v4148, %v4118
    %v4150 = vadd.f32 %v4149, %v4119
    %v4151 = vadd.f32 %v4150, %v4120
    %v4152 = vadd.f32 %v4151, %v4121
    %v4153 = vadd.f32 %v4152, %v4122
    %v4154 = vadd.f32 %v4153, %v4123
    %v4155 = vadd.f32 %v4154, %v4124
    %v4156 = vadd.f32 %v4155, %v4125
    %v4157 = vadd.f32 %v4156, %v4126
    %v4158 = vadd.f32 %v4157, %v4127
    %4159 = vadd.xlane.f32.xlu0 %v4158
    %v4160 = vpop.xlane.xlu0 %4159
    %v4161 = vrot.slane %v4160, 4
    %v4162 = vadd.f32 %v4160, %v4161
    %v4163 = vrot.slane %v4162, 2
    %v4164 = vadd.f32 %v4162, %v4163
    %v4165 = vrot.slane %v4164, 1
    %v4166 = vadd.f32 %v4164, %v4165
    %s4167 = vtos %v4166
    %v4168 = vstv %s4167
    %v4169 = vrsqrt.pop %v4168
    %v4170 = vmul.f32 %v4169, %v4168
    %v4171 = vmul.f32 %v4170, %v4169
    %v4172 = vmul.f32 0.5, %v4171
    %v4173 = vsub.f32 1.5, %v4172
    %v4174 = vmul.f32 %v4169, %v4173
    %vm4175 = vweird.f32 %v4168
    %vm4176 = vweird.f32 %v4169
    %vm4177 = vmor %vm4175, %vm4176
    %v4178 = vsel %vm4177, %v4169, %v4174
    %s4179 = vtos %v4178
    %v4180 = vmul.f32 %v3888, %v3888
    %v4181 = vmul.f32 %v3891, %v3891
    %v4182 = vmul.f32 %v3894, %v3894
    %v4183 = vmul.f32 %v3897, %v3897
    %v4184 = vmul.f32 %v3900, %v3900
    %v4185 = vmul.f32 %v3903, %v3903
    %v4186 = vmul.f32 %v3906, %v3906
    %v4187 = vmul.f32 %v3909, %v3909
    %v4188 = vmul.f32 %v3912, %v3912
    %v4189 = vmul.f32 %v3915, %v3915
    %v4190 = vmul.f32 %v3918, %v3918
    %v4191 = vmul.f32 %v3921, %v3921
    %v4192 = vmul.f32 %v3924, %v3924
    %v4193 = vmul.f32 %v3927, %v3927
    %v4194 = vmul.f32 %v3930, %v3930
    %v4195 = vmul.f32 %v3933, %v3933
    %v4196 = vmul.f32 %v3936, %v3936
    %v4197 = vmul.f32 %v3939, %v3939
    %v4198 = vmul.f32 %v3942, %v3942
    %v4199 = vmul.f32 %v3945, %v3945
    %v4200 = vmul.f32 %v3948, %v3948
    %v4201 = vmul.f32 %v3951, %v3951
    %v4202 = vmul.f32 %v3954, %v3954
    %v4203 = vmul.f32 %v3957, %v3957
    %v4204 = vmul.f32 %v3960, %v3960
    %v4205 = vmul.f32 %v3963, %v3963
    %v4206 = vmul.f32 %v3966, %v3966
    %v4207 = vmul.f32 %v3969, %v3969
    %v4208 = vmul.f32 %v3972, %v3972
    %v4209 = vmul.f32 %v3975, %v3975
    %v4210 = vmul.f32 %v3978, %v3978
    %v4211 = vmul.f32 %v3981, %v3981
    %v4212 = vadd.f32 %v4180, %v4181
    %v4213 = vadd.f32 %v4212, %v4182
    %v4214 = vadd.f32 %v4213, %v4183
    %v4215 = vadd.f32 %v4214, %v4184
    %v4216 = vadd.f32 %v4215, %v4185
    %v4217 = vadd.f32 %v4216, %v4186
    %v4218 = vadd.f32 %v4217, %v4187
    %v4219 = vadd.f32 %v4218, %v4188
    %v4220 = vadd.f32 %v4219, %v4189
    %v4221 = vadd.f32 %v4220, %v4190
    %v4222 = vadd.f32 %v4221, %v4191
    %v4223 = vadd.f32 %v4222, %v4192
    %v4224 = vadd.f32 %v4223, %v4193
    %v4225 = vadd.f32 %v4224, %v4194
    %v4226 = vadd.f32 %v4225, %v4195
    %v4227 = vadd.f32 %v4226, %v4196
    %v4228 = vadd.f32 %v4227, %v4197
    %v4229 = vadd.f32 %v4228, %v4198
    %v4230 = vadd.f32 %v4229, %v4199
    %v4231 = vadd.f32 %v4230, %v4200
    %v4232 = vadd.f32 %v4231, %v4201
    %v4233 = vadd.f32 %v4232, %v4202
    %v4234 = vadd.f32 %v4233, %v4203
    %v4235 = vadd.f32 %v4234, %v4204
    %v4236 = vadd.f32 %v4235, %v4205
    %v4237 = vadd.f32 %v4236, %v4206
    %v4238 = vadd.f32 %v4237, %v4207
    %v4239 = vadd.f32 %v4238, %v4208
    %v4240 = vadd.f32 %v4239, %v4209
    %v4241 = vadd.f32 %v4240, %v4210
    %v4242 = vadd.f32 %v4241, %v4211
    %4243 = vadd.xlane.f32.xlu0 %v4242
    %v4244 = vpop.xlane.xlu0 %4243
    %v4245 = vrot.slane %v4244, 4
    %v4246 = vadd.f32 %v4244, %v4245
    %v4247 = vrot.slane %v4246, 2
    %v4248 = vadd.f32 %v4246, %v4247
    %v4249 = vrot.slane %v4248, 1
    %v4250 = vadd.f32 %v4248, %v4249
    %s4251 = vtos %v4250
    %v4252 = vstv %s4251
    %v4253 = vrsqrt.pop %v4252
    %v4254 = vmul.f32 %v4253, %v4252
    %v4255 = vmul.f32 %v4254, %v4253
    %v4256 = vmul.f32 0.5, %v4255
    %v4257 = vsub.f32 1.5, %v4256
    %v4258 = vmul.f32 %v4253, %v4257
    %vm4259 = vweird.f32 %v4252
    %vm4260 = vweird.f32 %v4253
    %vm4261 = vmor %vm4259, %vm4260
    %v4262 = vsel %vm4261, %v4253, %v4258
    %s4263 = vtos %v4262
    %s4264 = smul.f32 %s4179, %s4263
    %4265 = vxpose.xlu0.b32.start [1/16] %v3888, 128
    %4266 = vxpose.xlu0.b32.cont [2/16] %v3891, 128
    %4267 = vxpose.xlu0.b32.cont [3/16] %v3894, 128
    %4268 = vxpose.xlu0.b32.cont [4/16] %v3897, 128
    %4269 = vxpose.xlu0.b32.cont [5/16] %v3900, 128
    %4270 = vxpose.xlu0.b32.cont [6/16] %v3903, 128
    %4271 = vxpose.xlu0.b32.cont [7/16] %v3906, 128
    %4272 = vxpose.xlu0.b32.cont [8/16] %v3909, 128
    %4273 = vxpose.xlu0.b32.cont [9/16] %v3912, 128
    %4274 = vxpose.xlu0.b32.cont [10/16] %v3915, 128
    %4275 = vxpose.xlu0.b32.cont [11/16] %v3918, 128
    %4276 = vxpose.xlu0.b32.cont [12/16] %v3921, 128
    %4277 = vxpose.xlu0.b32.cont [13/16] %v3924, 128
    %4278 = vxpose.xlu0.b32.cont [14/16] %v3927, 128
    %4279 = vxpose.xlu0.b32.cont [15/16] %v3930, 128
    %4280 = vxpose.xlu0.b32.end [16/16] %v3933, 128
    %v4281 = vpop.trf.xlu0
    %v4282 = vpop.trf.xlu0
    %v4283 = vpop.trf.xlu0
    %v4284 = vpop.trf.xlu0
    %v4285 = vpop.trf.xlu0
    %v4286 = vpop.trf.xlu0
    %v4287 = vpop.trf.xlu0
    %v4288 = vpop.trf.xlu0
    %v4289 = vpop.trf.xlu0
    %v4290 = vpop.trf.xlu0
    %v4291 = vpop.trf.xlu0
    %v4292 = vpop.trf.xlu0
    %v4293 = vpop.trf.xlu0
    %v4294 = vpop.trf.xlu0
    %v4295 = vpop.trf.xlu0
    %v4296 = vpop.trf.xlu0
    %4297 = vxpose.xlu0.b32.start [1/16] %v3936, 128
    %4298 = vxpose.xlu0.b32.cont [2/16] %v3939, 128
    %4299 = vxpose.xlu0.b32.cont [3/16] %v3942, 128
    %4300 = vxpose.xlu0.b32.cont [4/16] %v3945, 128
    %4301 = vxpose.xlu0.b32.cont [5/16] %v3948, 128
    %4302 = vxpose.xlu0.b32.cont [6/16] %v3951, 128
    %4303 = vxpose.xlu0.b32.cont [7/16] %v3954, 128
    %4304 = vxpose.xlu0.b32.cont [8/16] %v3957, 128
    %4305 = vxpose.xlu0.b32.cont [9/16] %v3960, 128
    %4306 = vxpose.xlu0.b32.cont [10/16] %v3963, 128
    %4307 = vxpose.xlu0.b32.cont [11/16] %v3966, 128
    %4308 = vxpose.xlu0.b32.cont [12/16] %v3969, 128
    %4309 = vxpose.xlu0.b32.cont [13/16] %v3972, 128
    %4310 = vxpose.xlu0.b32.cont [14/16] %v3975, 128
    %4311 = vxpose.xlu0.b32.cont [15/16] %v3978, 128
    %4312 = vxpose.xlu0.b32.end [16/16] %v3981, 128
    %v4313 = vpop.trf.xlu0
    %v4314 = vpop.trf.xlu0
    %v4315 = vpop.trf.xlu0
    %v4316 = vpop.trf.xlu0
    %v4317 = vpop.trf.xlu0
    %v4318 = vpop.trf.xlu0
    %v4319 = vpop.trf.xlu0
    %v4320 = vpop.trf.xlu0
    %v4321 = vpop.trf.xlu0
    %v4322 = vpop.trf.xlu0
    %v4323 = vpop.trf.xlu0
    %v4324 = vpop.trf.xlu0
    %v4325 = vpop.trf.xlu0
    %v4326 = vpop.trf.xlu0
    %v4327 = vpop.trf.xlu0
    %v4328 = vpop.trf.xlu0
    %4329 = vmatpush.msra.mxu0 %v4046
    %4330 = vmatpush.msra.mxu0 %v4043
    %4331 = vmatpush.msra.mxu0 %v4040
    %4332 = vmatpush.msra.mxu0 %v4037
    %4333 = vmatpush.msra.mxu0 %v4034
    %4334 = vmatpush.msra.mxu0 %v4031
    %4335 = vmatpush.msra.mxu0 %v4028
    %4336 = vmatpush.msra.mxu0 %v4025
    %4337 = vmatpush.msra.mxu0 %v4022
    %4338 = vmatpush.msra.mxu0 %v4019
    %4339 = vmatpush.msra.mxu0 %v4016
    %4340 = vmatpush.msra.mxu0 %v4013
    %4341 = vmatpush.msra.mxu0 %v4010
    %4342 = vmatpush.msra.mxu0 %v4007
    %4343 = vmatpush.msra.mxu0 %v4004
    %4344 = vmatpush.msra.mxu0 %v4001
    %4345 = vmatmul.f32.gmra.mxu0 %v4281
    %v4346 = vpop.f32.mrf.mxu0
    %v4347 = vadd.f32 0.0, %v4346
    %4348 = vmatmul.f32.gmra.mxu0 %v4282
    %v4349 = vpop.f32.mrf.mxu0
    %v4350 = vadd.f32 0.0, %v4349
    %4351 = vmatmul.f32.gmra.mxu0 %v4283
    %v4352 = vpop.f32.mrf.mxu0
    %v4353 = vadd.f32 0.0, %v4352
    %4354 = vmatmul.f32.gmra.mxu0 %v4284
    %v4355 = vpop.f32.mrf.mxu0
    %v4356 = vadd.f32 0.0, %v4355
    %4357 = vmatmul.f32.gmra.mxu0 %v4285
    %v4358 = vpop.f32.mrf.mxu0
    %v4359 = vadd.f32 0.0, %v4358
    %4360 = vmatmul.f32.gmra.mxu0 %v4286
    %v4361 = vpop.f32.mrf.mxu0
    %v4362 = vadd.f32 0.0, %v4361
    %4363 = vmatmul.f32.gmra.mxu0 %v4287
    %v4364 = vpop.f32.mrf.mxu0
    %v4365 = vadd.f32 0.0, %v4364
    %4366 = vmatmul.f32.gmra.mxu0 %v4288
    %v4367 = vpop.f32.mrf.mxu0
    %v4368 = vadd.f32 0.0, %v4367
    %4369 = vmatmul.f32.gmra.mxu0 %v4289
    %v4370 = vpop.f32.mrf.mxu0
    %v4371 = vadd.f32 0.0, %v4370
    %4372 = vmatmul.f32.gmra.mxu0 %v4290
    %v4373 = vpop.f32.mrf.mxu0
    %v4374 = vadd.f32 0.0, %v4373
    %4375 = vmatmul.f32.gmra.mxu0 %v4291
    %v4376 = vpop.f32.mrf.mxu0
    %v4377 = vadd.f32 0.0, %v4376
    %4378 = vmatmul.f32.gmra.mxu0 %v4292
    %v4379 = vpop.f32.mrf.mxu0
    %v4380 = vadd.f32 0.0, %v4379
    %4381 = vmatmul.f32.gmra.mxu0 %v4293
    %v4382 = vpop.f32.mrf.mxu0
    %v4383 = vadd.f32 0.0, %v4382
    %4384 = vmatmul.f32.gmra.mxu0 %v4294
    %v4385 = vpop.f32.mrf.mxu0
    %v4386 = vadd.f32 0.0, %v4385
    %4387 = vmatmul.f32.gmra.mxu0 %v4295
    %v4388 = vpop.f32.mrf.mxu0
    %v4389 = vadd.f32 0.0, %v4388
    %4390 = vmatmul.f32.gmra.mxu0 %v4296
    %v4391 = vpop.f32.mrf.mxu0
    %v4392 = vadd.f32 0.0, %v4391
    %4393 = vdwg.mxu0
    %4394 = vmatpush.msra.mxu0 %v4094
    %4395 = vmatpush.msra.mxu0 %v4091
    %4396 = vmatpush.msra.mxu0 %v4088
    %4397 = vmatpush.msra.mxu0 %v4085
    %4398 = vmatpush.msra.mxu0 %v4082
    %4399 = vmatpush.msra.mxu0 %v4079
    %4400 = vmatpush.msra.mxu0 %v4076
    %4401 = vmatpush.msra.mxu0 %v4073
    %4402 = vmatpush.msra.mxu0 %v4070
    %4403 = vmatpush.msra.mxu0 %v4067
    %4404 = vmatpush.msra.mxu0 %v4064
    %4405 = vmatpush.msra.mxu0 %v4061
    %4406 = vmatpush.msra.mxu0 %v4058
    %4407 = vmatpush.msra.mxu0 %v4055
    %4408 = vmatpush.msra.mxu0 %v4052
    %4409 = vmatpush.msra.mxu0 %v4049
    %4410 = vmatmul.f32.gmra.mxu0 %v4313
    %v4411 = vpop.f32.mrf.mxu0
    %v4412 = vadd.f32 %v4347, %v4411
    %4413 = vmatmul.f32.gmra.mxu0 %v4314
    %v4414 = vpop.f32.mrf.mxu0
    %v4415 = vadd.f32 %v4350, %v4414
    %4416 = vmatmul.f32.gmra.mxu0 %v4315
    %v4417 = vpop.f32.mrf.mxu0
    %v4418 = vadd.f32 %v4353, %v4417
    %4419 = vmatmul.f32.gmra.mxu0 %v4316
    %v4420 = vpop.f32.mrf.mxu0
    %v4421 = vadd.f32 %v4356, %v4420
    %4422 = vmatmul.f32.gmra.mxu0 %v4317
    %v4423 = vpop.f32.mrf.mxu0
    %v4424 = vadd.f32 %v4359, %v4423
    %4425 = vmatmul.f32.gmra.mxu0 %v4318
    %v4426 = vpop.f32.mrf.mxu0
    %v4427 = vadd.f32 %v4362, %v4426
    %4428 = vmatmul.f32.gmra.mxu0 %v4319
    %v4429 = vpop.f32.mrf.mxu0
    %v4430 = vadd.f32 %v4365, %v4429
    %4431 = vmatmul.f32.gmra.mxu0 %v4320
    %v4432 = vpop.f32.mrf.mxu0
    %v4433 = vadd.f32 %v4368, %v4432
    %4434 = vmatmul.f32.gmra.mxu0 %v4321
    %v4435 = vpop.f32.mrf.mxu0
    %v4436 = vadd.f32 %v4371, %v4435
    %4437 = vmatmul.f32.gmra.mxu0 %v4322
    %v4438 = vpop.f32.mrf.mxu0
    %v4439 = vadd.f32 %v4374, %v4438
    %4440 = vmatmul.f32.gmra.mxu0 %v4323
    %v4441 = vpop.f32.mrf.mxu0
    %v4442 = vadd.f32 %v4377, %v4441
    %4443 = vmatmul.f32.gmra.mxu0 %v4324
    %v4444 = vpop.f32.mrf.mxu0
    %v4445 = vadd.f32 %v4380, %v4444
    %4446 = vmatmul.f32.gmra.mxu0 %v4325
    %v4447 = vpop.f32.mrf.mxu0
    %v4448 = vadd.f32 %v4383, %v4447
    %4449 = vmatmul.f32.gmra.mxu0 %v4326
    %v4450 = vpop.f32.mrf.mxu0
    %v4451 = vadd.f32 %v4386, %v4450
    %4452 = vmatmul.f32.gmra.mxu0 %v4327
    %v4453 = vpop.f32.mrf.mxu0
    %v4454 = vadd.f32 %v4389, %v4453
    %4455 = vmatmul.f32.gmra.mxu0 %v4328
    %v4456 = vpop.f32.mrf.mxu0
    %v4457 = vadd.f32 %v4392, %v4456
    %4458 = vdwg.mxu0
    %v4459 = vadd.f32 %v3888, %v3891
    %v4460 = vadd.f32 %v4459, %v3894
    %v4461 = vadd.f32 %v4460, %v3897
    %v4462 = vadd.f32 %v4461, %v3900
    %v4463 = vadd.f32 %v4462, %v3903
    %v4464 = vadd.f32 %v4463, %v3906
    %v4465 = vadd.f32 %v4464, %v3909
    %v4466 = vadd.f32 %v4465, %v3912
    %v4467 = vadd.f32 %v4466, %v3915
    %v4468 = vadd.f32 %v4467, %v3918
    %v4469 = vadd.f32 %v4468, %v3921
    %v4470 = vadd.f32 %v4469, %v3924
    %v4471 = vadd.f32 %v4470, %v3927
    %v4472 = vadd.f32 %v4471, %v3930
    %v4473 = vadd.f32 %v4472, %v3933
    %v4474 = vadd.f32 %v4473, %v3936
    %v4475 = vadd.f32 %v4474, %v3939
    %v4476 = vadd.f32 %v4475, %v3942
    %v4477 = vadd.f32 %v4476, %v3945
    %v4478 = vadd.f32 %v4477, %v3948
    %v4479 = vadd.f32 %v4478, %v3951
    %v4480 = vadd.f32 %v4479, %v3954
    %v4481 = vadd.f32 %v4480, %v3957
    %v4482 = vadd.f32 %v4481, %v3960
    %v4483 = vadd.f32 %v4482, %v3963
    %v4484 = vadd.f32 %v4483, %v3966
    %v4485 = vadd.f32 %v4484, %v3969
    %v4486 = vadd.f32 %v4485, %v3972
    %v4487 = vadd.f32 %v4486, %v3975
    %v4488 = vadd.f32 %v4487, %v3978
    %v4489 = vadd.f32 %v4488, %v3981
    %v4490 = vrot.slane %v4489, 4
    %v4491 = vadd.f32 %v4489, %v4490
    %v4492 = vrot.slane %v4491, 2
    %v4493 = vadd.f32 %v4491, %v4492
    %v4494 = vrot.slane %v4493, 1
    %v4495 = vadd.f32 %v4493, %v4494
    %v4496 = vmul.f32 %v4412, %v1114
    %v4497 = vmul.f32 %v4415, %v1115
    %v4498 = vmul.f32 %v4418, %v1116
    %v4499 = vmul.f32 %v4421, %v1117
    %v4500 = vmul.f32 %v4424, %v1118
    %v4501 = vmul.f32 %v4427, %v1119
    %v4502 = vmul.f32 %v4430, %v1120
    %v4503 = vmul.f32 %v4433, %v1121
    %v4504 = vmul.f32 %v4436, %v1122
    %v4505 = vmul.f32 %v4439, %v1123
    %v4506 = vmul.f32 %v4442, %v1124
    %v4507 = vmul.f32 %v4445, %v1125
    %v4508 = vmul.f32 %v4448, %v1126
    %v4509 = vmul.f32 %v4451, %v1127
    %v4510 = vmul.f32 %v4454, %v1128
    %v4511 = vmul.f32 %v4457, %v1129
    %4512 = vmatpush.msra.mxu0 %v4511
    %4513 = vmatpush.msra.mxu0 %v4510
    %4514 = vmatpush.msra.mxu0 %v4509
    %4515 = vmatpush.msra.mxu0 %v4508
    %4516 = vmatpush.msra.mxu0 %v4507
    %4517 = vmatpush.msra.mxu0 %v4506
    %4518 = vmatpush.msra.mxu0 %v4505
    %4519 = vmatpush.msra.mxu0 %v4504
    %4520 = vmatpush.msra.mxu0 %v4503
    %4521 = vmatpush.msra.mxu0 %v4502
    %4522 = vmatpush.msra.mxu0 %v4501
    %4523 = vmatpush.msra.mxu0 %v4500
    %4524 = vmatpush.msra.mxu0 %v4499
    %4525 = vmatpush.msra.mxu0 %v4498
    %4526 = vmatpush.msra.mxu0 %v4497
    %4527 = vmatpush.msra.mxu0 %v4496
    %4528 = vmatmul.f32.gmra.mxu0 %v3775
    %v4529 = vpop.f32.mrf.mxu0
    %v4530 = vadd.f32 0.0, %v4529
    %4531 = vmatmul.f32.gmra.mxu0 %v3778
    %v4532 = vpop.f32.mrf.mxu0
    %v4533 = vadd.f32 0.0, %v4532
    %4534 = vmatmul.f32.gmra.mxu0 %v3781
    %v4535 = vpop.f32.mrf.mxu0
    %v4536 = vadd.f32 0.0, %v4535
    %4537 = vmatmul.f32.gmra.mxu0 %v3784
    %v4538 = vpop.f32.mrf.mxu0
    %v4539 = vadd.f32 0.0, %v4538
    %4540 = vmatmul.f32.gmra.mxu0 %v3787
    %v4541 = vpop.f32.mrf.mxu0
    %v4542 = vadd.f32 0.0, %v4541
    %4543 = vmatmul.f32.gmra.mxu0 %v3790
    %v4544 = vpop.f32.mrf.mxu0
    %v4545 = vadd.f32 0.0, %v4544
    %4546 = vmatmul.f32.gmra.mxu0 %v3793
    %v4547 = vpop.f32.mrf.mxu0
    %v4548 = vadd.f32 0.0, %v4547
    %4549 = vmatmul.f32.gmra.mxu0 %v3796
    %v4550 = vpop.f32.mrf.mxu0
    %v4551 = vadd.f32 0.0, %v4550
    %4552 = vmatmul.f32.gmra.mxu0 %v3799
    %v4553 = vpop.f32.mrf.mxu0
    %v4554 = vadd.f32 0.0, %v4553
    %4555 = vmatmul.f32.gmra.mxu0 %v3802
    %v4556 = vpop.f32.mrf.mxu0
    %v4557 = vadd.f32 0.0, %v4556
    %4558 = vmatmul.f32.gmra.mxu0 %v3805
    %v4559 = vpop.f32.mrf.mxu0
    %v4560 = vadd.f32 0.0, %v4559
    %4561 = vmatmul.f32.gmra.mxu0 %v3808
    %v4562 = vpop.f32.mrf.mxu0
    %v4563 = vadd.f32 0.0, %v4562
    %4564 = vmatmul.f32.gmra.mxu0 %v3811
    %v4565 = vpop.f32.mrf.mxu0
    %v4566 = vadd.f32 0.0, %v4565
    %4567 = vmatmul.f32.gmra.mxu0 %v3814
    %v4568 = vpop.f32.mrf.mxu0
    %v4569 = vadd.f32 0.0, %v4568
    %4570 = vmatmul.f32.gmra.mxu0 %v3817
    %v4571 = vpop.f32.mrf.mxu0
    %v4572 = vadd.f32 0.0, %v4571
    %4573 = vmatmul.f32.gmra.mxu0 %v3820
    %v4574 = vpop.f32.mrf.mxu0
    %v4575 = vadd.f32 0.0, %v4574
    %4576 = vmatmul.f32.gmra.mxu0 %v3823
    %v4577 = vpop.f32.mrf.mxu0
    %v4578 = vadd.f32 0.0, %v4577
    %4579 = vmatmul.f32.gmra.mxu0 %v3826
    %v4580 = vpop.f32.mrf.mxu0
    %v4581 = vadd.f32 0.0, %v4580
    %4582 = vmatmul.f32.gmra.mxu0 %v3829
    %v4583 = vpop.f32.mrf.mxu0
    %v4584 = vadd.f32 0.0, %v4583
    %4585 = vmatmul.f32.gmra.mxu0 %v3832
    %v4586 = vpop.f32.mrf.mxu0
    %v4587 = vadd.f32 0.0, %v4586
    %4588 = vmatmul.f32.gmra.mxu0 %v3835
    %v4589 = vpop.f32.mrf.mxu0
    %v4590 = vadd.f32 0.0, %v4589
    %4591 = vmatmul.f32.gmra.mxu0 %v3838
    %v4592 = vpop.f32.mrf.mxu0
    %v4593 = vadd.f32 0.0, %v4592
    %4594 = vmatmul.f32.gmra.mxu0 %v3841
    %v4595 = vpop.f32.mrf.mxu0
    %v4596 = vadd.f32 0.0, %v4595
    %4597 = vmatmul.f32.gmra.mxu0 %v3844
    %v4598 = vpop.f32.mrf.mxu0
    %v4599 = vadd.f32 0.0, %v4598
    %4600 = vmatmul.f32.gmra.mxu0 %v3847
    %v4601 = vpop.f32.mrf.mxu0
    %v4602 = vadd.f32 0.0, %v4601
    %4603 = vmatmul.f32.gmra.mxu0 %v3850
    %v4604 = vpop.f32.mrf.mxu0
    %v4605 = vadd.f32 0.0, %v4604
    %4606 = vmatmul.f32.gmra.mxu0 %v3853
    %v4607 = vpop.f32.mrf.mxu0
    %v4608 = vadd.f32 0.0, %v4607
    %4609 = vmatmul.f32.gmra.mxu0 %v3856
    %v4610 = vpop.f32.mrf.mxu0
    %v4611 = vadd.f32 0.0, %v4610
    %4612 = vmatmul.f32.gmra.mxu0 %v3859
    %v4613 = vpop.f32.mrf.mxu0
    %v4614 = vadd.f32 0.0, %v4613
    %4615 = vmatmul.f32.gmra.mxu0 %v3862
    %v4616 = vpop.f32.mrf.mxu0
    %v4617 = vadd.f32 0.0, %v4616
    %4618 = vmatmul.f32.gmra.mxu0 %v3865
    %v4619 = vpop.f32.mrf.mxu0
    %v4620 = vadd.f32 0.0, %v4619
    %4621 = vmatmul.f32.gmra.mxu0 %v3868
    %v4622 = vpop.f32.mrf.mxu0
    %v4623 = vadd.f32 0.0, %v4622
    %4624 = vdwg.mxu0
    %v4625 = vstv %s4264
    %v4626 = vmul.f32 %v4625, %v4530
    %v4627 = vmul.f32 %v4625, %v4533
    %v4628 = vmul.f32 %v4625, %v4536
    %v4629 = vmul.f32 %v4625, %v4539
    %v4630 = vmul.f32 %v4625, %v4542
    %v4631 = vmul.f32 %v4625, %v4545
    %v4632 = vmul.f32 %v4625, %v4548
    %v4633 = vmul.f32 %v4625, %v4551
    %v4634 = vmul.f32 %v4625, %v4554
    %v4635 = vmul.f32 %v4625, %v4557
    %v4636 = vmul.f32 %v4625, %v4560
    %v4637 = vmul.f32 %v4625, %v4563
    %v4638 = vmul.f32 %v4625, %v4566
    %v4639 = vmul.f32 %v4625, %v4569
    %v4640 = vmul.f32 %v4625, %v4572
    %v4641 = vmul.f32 %v4625, %v4575
    %v4642 = vmul.f32 %v4625, %v4578
    %v4643 = vmul.f32 %v4625, %v4581
    %v4644 = vmul.f32 %v4625, %v4584
    %v4645 = vmul.f32 %v4625, %v4587
    %v4646 = vmul.f32 %v4625, %v4590
    %v4647 = vmul.f32 %v4625, %v4593
    %v4648 = vmul.f32 %v4625, %v4596
    %v4649 = vmul.f32 %v4625, %v4599
    %v4650 = vmul.f32 %v4625, %v4602
    %v4651 = vmul.f32 %v4625, %v4605
    %v4652 = vmul.f32 %v4625, %v4608
    %v4653 = vmul.f32 %v4625, %v4611
    %v4654 = vmul.f32 %v4625, %v4614
    %v4655 = vmul.f32 %v4625, %v4617
    %v4656 = vmul.f32 %v4625, %v4620
    %v4657 = vmul.f32 %v4625, %v4623
    %v4658 = vmul.f32 %v4001, 256.0
    %v4659 = vmul.f32 %v4004, 256.0
    %v4660 = vmul.f32 %v4007, 256.0
    %v4661 = vmul.f32 %v4010, 256.0
    %v4662 = vmul.f32 %v4013, 256.0
    %v4663 = vmul.f32 %v4016, 256.0
    %v4664 = vmul.f32 %v4019, 256.0
    %v4665 = vmul.f32 %v4022, 256.0
    %v4666 = vmul.f32 %v4025, 256.0
    %v4667 = vmul.f32 %v4028, 256.0
    %v4668 = vmul.f32 %v4031, 256.0
    %v4669 = vmul.f32 %v4034, 256.0
    %v4670 = vmul.f32 %v4037, 256.0
    %v4671 = vmul.f32 %v4040, 256.0
    %v4672 = vmul.f32 %v4043, 256.0
    %v4673 = vmul.f32 %v4046, 256.0
    %v4674 = vmul.f32 %v4049, 256.0
    %v4675 = vmul.f32 %v4052, 256.0
    %v4676 = vmul.f32 %v4055, 256.0
    %v4677 = vmul.f32 %v4058, 256.0
    %v4678 = vmul.f32 %v4061, 256.0
    %v4679 = vmul.f32 %v4064, 256.0
    %v4680 = vmul.f32 %v4067, 256.0
    %v4681 = vmul.f32 %v4070, 256.0
    %v4682 = vmul.f32 %v4073, 256.0
    %v4683 = vmul.f32 %v4076, 256.0
    %v4684 = vmul.f32 %v4079, 256.0
    %v4685 = vmul.f32 %v4082, 256.0
    %v4686 = vmul.f32 %v4085, 256.0
    %v4687 = vmul.f32 %v4088, 256.0
    %v4688 = vmul.f32 %v4091, 256.0
    %v4689 = vmul.f32 %v4094, 256.0
    %v4690 = vadd.f32 %v4626, %v4658
    %v4691 = vadd.f32 %v4627, %v4659
    %v4692 = vadd.f32 %v4628, %v4660
    %v4693 = vadd.f32 %v4629, %v4661
    %v4694 = vadd.f32 %v4630, %v4662
    %v4695 = vadd.f32 %v4631, %v4663
    %v4696 = vadd.f32 %v4632, %v4664
    %v4697 = vadd.f32 %v4633, %v4665
    %v4698 = vadd.f32 %v4634, %v4666
    %v4699 = vadd.f32 %v4635, %v4667
    %v4700 = vadd.f32 %v4636, %v4668
    %v4701 = vadd.f32 %v4637, %v4669
    %v4702 = vadd.f32 %v4638, %v4670
    %v4703 = vadd.f32 %v4639, %v4671
    %v4704 = vadd.f32 %v4640, %v4672
    %v4705 = vadd.f32 %v4641, %v4673
    %v4706 = vadd.f32 %v4642, %v4674
    %v4707 = vadd.f32 %v4643, %v4675
    %v4708 = vadd.f32 %v4644, %v4676
    %v4709 = vadd.f32 %v4645, %v4677
    %v4710 = vadd.f32 %v4646, %v4678
    %v4711 = vadd.f32 %v4647, %v4679
    %v4712 = vadd.f32 %v4648, %v4680
    %v4713 = vadd.f32 %v4649, %v4681
    %v4714 = vadd.f32 %v4650, %v4682
    %v4715 = vadd.f32 %v4651, %v4683
    %v4716 = vadd.f32 %v4652, %v4684
    %v4717 = vadd.f32 %v4653, %v4685
    %v4718 = vadd.f32 %v4654, %v4686
    %v4719 = vadd.f32 %v4655, %v4687
    %v4720 = vadd.f32 %v4656, %v4688
    %v4721 = vadd.f32 %v4657, %v4689
    %v4722 = vmul.f32 %v3775, %v4495
    %v4723 = vmul.f32 %v3778, %v4495
    %v4724 = vmul.f32 %v3781, %v4495
    %v4725 = vmul.f32 %v3784, %v4495
    %v4726 = vmul.f32 %v3787, %v4495
    %v4727 = vmul.f32 %v3790, %v4495
    %v4728 = vmul.f32 %v3793, %v4495
    %v4729 = vmul.f32 %v3796, %v4495
    %v4730 = vmul.f32 %v3799, %v4495
    %v4731 = vmul.f32 %v3802, %v4495
    %v4732 = vmul.f32 %v3805, %v4495
    %v4733 = vmul.f32 %v3808, %v4495
    %v4734 = vmul.f32 %v3811, %v4495
    %v4735 = vmul.f32 %v3814, %v4495
    %v4736 = vmul.f32 %v3817, %v4495
    %v4737 = vmul.f32 %v3820, %v4495
    %v4738 = vmul.f32 %v3823, %v4495
    %v4739 = vmul.f32 %v3826, %v4495
    %v4740 = vmul.f32 %v3829, %v4495
    %v4741 = vmul.f32 %v3832, %v4495
    %v4742 = vmul.f32 %v3835, %v4495
    %v4743 = vmul.f32 %v3838, %v4495
    %v4744 = vmul.f32 %v3841, %v4495
    %v4745 = vmul.f32 %v3844, %v4495
    %v4746 = vmul.f32 %v3847, %v4495
    %v4747 = vmul.f32 %v3850, %v4495
    %v4748 = vmul.f32 %v3853, %v4495
    %v4749 = vmul.f32 %v3856, %v4495
    %v4750 = vmul.f32 %v3859, %v4495
    %v4751 = vmul.f32 %v3862, %v4495
    %v4752 = vmul.f32 %v3865, %v4495
    %v4753 = vmul.f32 %v3868, %v4495
    %4754 = vmatpush.msra.mxu0 %v1129
    %4755 = vmatpush.msra.mxu0 %v1128
    %4756 = vmatpush.msra.mxu0 %v1127
    %4757 = vmatpush.msra.mxu0 %v1126
    %4758 = vmatpush.msra.mxu0 %v1125
    %4759 = vmatpush.msra.mxu0 %v1124
    %4760 = vmatpush.msra.mxu0 %v1123
    %4761 = vmatpush.msra.mxu0 %v1122
    %4762 = vmatpush.msra.mxu0 %v1121
    %4763 = vmatpush.msra.mxu0 %v1120
    %4764 = vmatpush.msra.mxu0 %v1119
    %4765 = vmatpush.msra.mxu0 %v1118
    %4766 = vmatpush.msra.mxu0 %v1117
    %4767 = vmatpush.msra.mxu0 %v1116
    %4768 = vmatpush.msra.mxu0 %v1115
    %4769 = vmatpush.msra.mxu0 %v1114
    %4770 = vmatmul.f32.gmra.mxu0 %v4722
    %v4771 = vpop.f32.mrf.mxu0
    %v4772 = vadd.f32 0.0, %v4771
    %4773 = vmatmul.f32.gmra.mxu0 %v4723
    %v4774 = vpop.f32.mrf.mxu0
    %v4775 = vadd.f32 0.0, %v4774
    %4776 = vmatmul.f32.gmra.mxu0 %v4724
    %v4777 = vpop.f32.mrf.mxu0
    %v4778 = vadd.f32 0.0, %v4777
    %4779 = vmatmul.f32.gmra.mxu0 %v4725
    %v4780 = vpop.f32.mrf.mxu0
    %v4781 = vadd.f32 0.0, %v4780
    %4782 = vmatmul.f32.gmra.mxu0 %v4726
    %v4783 = vpop.f32.mrf.mxu0
    %v4784 = vadd.f32 0.0, %v4783
    %4785 = vmatmul.f32.gmra.mxu0 %v4727
    %v4786 = vpop.f32.mrf.mxu0
    %v4787 = vadd.f32 0.0, %v4786
    %4788 = vmatmul.f32.gmra.mxu0 %v4728
    %v4789 = vpop.f32.mrf.mxu0
    %v4790 = vadd.f32 0.0, %v4789
    %4791 = vmatmul.f32.gmra.mxu0 %v4729
    %v4792 = vpop.f32.mrf.mxu0
    %v4793 = vadd.f32 0.0, %v4792
    %4794 = vmatmul.f32.gmra.mxu0 %v4730
    %v4795 = vpop.f32.mrf.mxu0
    %v4796 = vadd.f32 0.0, %v4795
    %4797 = vmatmul.f32.gmra.mxu0 %v4731
    %v4798 = vpop.f32.mrf.mxu0
    %v4799 = vadd.f32 0.0, %v4798
    %4800 = vmatmul.f32.gmra.mxu0 %v4732
    %v4801 = vpop.f32.mrf.mxu0
    %v4802 = vadd.f32 0.0, %v4801
    %4803 = vmatmul.f32.gmra.mxu0 %v4733
    %v4804 = vpop.f32.mrf.mxu0
    %v4805 = vadd.f32 0.0, %v4804
    %4806 = vmatmul.f32.gmra.mxu0 %v4734
    %v4807 = vpop.f32.mrf.mxu0
    %v4808 = vadd.f32 0.0, %v4807
    %4809 = vmatmul.f32.gmra.mxu0 %v4735
    %v4810 = vpop.f32.mrf.mxu0
    %v4811 = vadd.f32 0.0, %v4810
    %4812 = vmatmul.f32.gmra.mxu0 %v4736
    %v4813 = vpop.f32.mrf.mxu0
    %v4814 = vadd.f32 0.0, %v4813
    %4815 = vmatmul.f32.gmra.mxu0 %v4737
    %v4816 = vpop.f32.mrf.mxu0
    %v4817 = vadd.f32 0.0, %v4816
    %4818 = vmatmul.f32.gmra.mxu0 %v4738
    %v4819 = vpop.f32.mrf.mxu0
    %v4820 = vadd.f32 0.0, %v4819
    %4821 = vmatmul.f32.gmra.mxu0 %v4739
    %v4822 = vpop.f32.mrf.mxu0
    %v4823 = vadd.f32 0.0, %v4822
    %4824 = vmatmul.f32.gmra.mxu0 %v4740
    %v4825 = vpop.f32.mrf.mxu0
    %v4826 = vadd.f32 0.0, %v4825
    %4827 = vmatmul.f32.gmra.mxu0 %v4741
    %v4828 = vpop.f32.mrf.mxu0
    %v4829 = vadd.f32 0.0, %v4828
    %4830 = vmatmul.f32.gmra.mxu0 %v4742
    %v4831 = vpop.f32.mrf.mxu0
    %v4832 = vadd.f32 0.0, %v4831
    %4833 = vmatmul.f32.gmra.mxu0 %v4743
    %v4834 = vpop.f32.mrf.mxu0
    %v4835 = vadd.f32 0.0, %v4834
    %4836 = vmatmul.f32.gmra.mxu0 %v4744
    %v4837 = vpop.f32.mrf.mxu0
    %v4838 = vadd.f32 0.0, %v4837
    %4839 = vmatmul.f32.gmra.mxu0 %v4745
    %v4840 = vpop.f32.mrf.mxu0
    %v4841 = vadd.f32 0.0, %v4840
    %4842 = vmatmul.f32.gmra.mxu0 %v4746
    %v4843 = vpop.f32.mrf.mxu0
    %v4844 = vadd.f32 0.0, %v4843
    %4845 = vmatmul.f32.gmra.mxu0 %v4747
    %v4846 = vpop.f32.mrf.mxu0
    %v4847 = vadd.f32 0.0, %v4846
    %4848 = vmatmul.f32.gmra.mxu0 %v4748
    %v4849 = vpop.f32.mrf.mxu0
    %v4850 = vadd.f32 0.0, %v4849
    %4851 = vmatmul.f32.gmra.mxu0 %v4749
    %v4852 = vpop.f32.mrf.mxu0
    %v4853 = vadd.f32 0.0, %v4852
    %4854 = vmatmul.f32.gmra.mxu0 %v4750
    %v4855 = vpop.f32.mrf.mxu0
    %v4856 = vadd.f32 0.0, %v4855
    %4857 = vmatmul.f32.gmra.mxu0 %v4751
    %v4858 = vpop.f32.mrf.mxu0
    %v4859 = vadd.f32 0.0, %v4858
    %4860 = vmatmul.f32.gmra.mxu0 %v4752
    %v4861 = vpop.f32.mrf.mxu0
    %v4862 = vadd.f32 0.0, %v4861
    %4863 = vmatmul.f32.gmra.mxu0 %v4753
    %v4864 = vpop.f32.mrf.mxu0
    %v4865 = vadd.f32 0.0, %v4864
    %4866 = vdwg.mxu0
    %v4867 = vmul.f32 %v4625, %v4772
    %v4868 = vmul.f32 %v4625, %v4775
    %v4869 = vmul.f32 %v4625, %v4778
    %v4870 = vmul.f32 %v4625, %v4781
    %v4871 = vmul.f32 %v4625, %v4784
    %v4872 = vmul.f32 %v4625, %v4787
    %v4873 = vmul.f32 %v4625, %v4790
    %v4874 = vmul.f32 %v4625, %v4793
    %v4875 = vmul.f32 %v4625, %v4796
    %v4876 = vmul.f32 %v4625, %v4799
    %v4877 = vmul.f32 %v4625, %v4802
    %v4878 = vmul.f32 %v4625, %v4805
    %v4879 = vmul.f32 %v4625, %v4808
    %v4880 = vmul.f32 %v4625, %v4811
    %v4881 = vmul.f32 %v4625, %v4814
    %v4882 = vmul.f32 %v4625, %v4817
    %v4883 = vmul.f32 %v4625, %v4820
    %v4884 = vmul.f32 %v4625, %v4823
    %v4885 = vmul.f32 %v4625, %v4826
    %v4886 = vmul.f32 %v4625, %v4829
    %v4887 = vmul.f32 %v4625, %v4832
    %v4888 = vmul.f32 %v4625, %v4835
    %v4889 = vmul.f32 %v4625, %v4838
    %v4890 = vmul.f32 %v4625, %v4841
    %v4891 = vmul.f32 %v4625, %v4844
    %v4892 = vmul.f32 %v4625, %v4847
    %v4893 = vmul.f32 %v4625, %v4850
    %v4894 = vmul.f32 %v4625, %v4853
    %v4895 = vmul.f32 %v4625, %v4856
    %v4896 = vmul.f32 %v4625, %v4859
    %v4897 = vmul.f32 %v4625, %v4862
    %v4898 = vmul.f32 %v4625, %v4865
    %v4899 = vadd.f32 %v4867, 256.0
    %v4900 = vadd.f32 %v4868, 256.0
    %v4901 = vadd.f32 %v4869, 256.0
    %v4902 = vadd.f32 %v4870, 256.0
    %v4903 = vadd.f32 %v4871, 256.0
    %v4904 = vadd.f32 %v4872, 256.0
    %v4905 = vadd.f32 %v4873, 256.0
    %v4906 = vadd.f32 %v4874, 256.0
    %v4907 = vadd.f32 %v4875, 256.0
    %v4908 = vadd.f32 %v4876, 256.0
    %v4909 = vadd.f32 %v4877, 256.0
    %v4910 = vadd.f32 %v4878, 256.0
    %v4911 = vadd.f32 %v4879, 256.0
    %v4912 = vadd.f32 %v4880, 256.0
    %v4913 = vadd.f32 %v4881, 256.0
    %v4914 = vadd.f32 %v4882, 256.0
    %v4915 = vadd.f32 %v4883, 256.0
    %v4916 = vadd.f32 %v4884, 256.0
    %v4917 = vadd.f32 %v4885, 256.0
    %v4918 = vadd.f32 %v4886, 256.0
    %v4919 = vadd.f32 %v4887, 256.0
    %v4920 = vadd.f32 %v4888, 256.0
    %v4921 = vadd.f32 %v4889, 256.0
    %v4922 = vadd.f32 %v4890, 256.0
    %v4923 = vadd.f32 %v4891, 256.0
    %v4924 = vadd.f32 %v4892, 256.0
    %v4925 = vadd.f32 %v4893, 256.0
    %v4926 = vadd.f32 %v4894, 256.0
    %v4927 = vadd.f32 %v4895, 256.0
    %v4928 = vadd.f32 %v4896, 256.0
    %v4929 = vadd.f32 %v4897, 256.0
    %v4930 = vadd.f32 %v4898, 256.0
    %v4931 = vrcp.pop %v4899
    %v4932 = vrcp.pop %v4900
    %v4933 = vrcp.pop %v4901
    %v4934 = vrcp.pop %v4902
    %v4935 = vrcp.pop %v4903
    %v4936 = vrcp.pop %v4904
    %v4937 = vrcp.pop %v4905
    %v4938 = vrcp.pop %v4906
    %v4939 = vrcp.pop %v4907
    %v4940 = vrcp.pop %v4908
    %v4941 = vrcp.pop %v4909
    %v4942 = vrcp.pop %v4910
    %v4943 = vrcp.pop %v4911
    %v4944 = vrcp.pop %v4912
    %v4945 = vrcp.pop %v4913
    %v4946 = vrcp.pop %v4914
    %v4947 = vrcp.pop %v4915
    %v4948 = vrcp.pop %v4916
    %v4949 = vrcp.pop %v4917
    %v4950 = vrcp.pop %v4918
    %v4951 = vrcp.pop %v4919
    %v4952 = vrcp.pop %v4920
    %v4953 = vrcp.pop %v4921
    %v4954 = vrcp.pop %v4922
    %v4955 = vrcp.pop %v4923
    %v4956 = vrcp.pop %v4924
    %v4957 = vrcp.pop %v4925
    %v4958 = vrcp.pop %v4926
    %v4959 = vrcp.pop %v4927
    %v4960 = vrcp.pop %v4928
    %v4961 = vrcp.pop %v4929
    %v4962 = vrcp.pop %v4930
    %v4963 = vmul.f32 %v4899, %v4931
    %v4964 = vmul.f32 %v4900, %v4932
    %v4965 = vmul.f32 %v4901, %v4933
    %v4966 = vmul.f32 %v4902, %v4934
    %v4967 = vmul.f32 %v4903, %v4935
    %v4968 = vmul.f32 %v4904, %v4936
    %v4969 = vmul.f32 %v4905, %v4937
    %v4970 = vmul.f32 %v4906, %v4938
    %v4971 = vmul.f32 %v4907, %v4939
    %v4972 = vmul.f32 %v4908, %v4940
    %v4973 = vmul.f32 %v4909, %v4941
    %v4974 = vmul.f32 %v4910, %v4942
    %v4975 = vmul.f32 %v4911, %v4943
    %v4976 = vmul.f32 %v4912, %v4944
    %v4977 = vmul.f32 %v4913, %v4945
    %v4978 = vmul.f32 %v4914, %v4946
    %v4979 = vmul.f32 %v4915, %v4947
    %v4980 = vmul.f32 %v4916, %v4948
    %v4981 = vmul.f32 %v4917, %v4949
    %v4982 = vmul.f32 %v4918, %v4950
    %v4983 = vmul.f32 %v4919, %v4951
    %v4984 = vmul.f32 %v4920, %v4952
    %v4985 = vmul.f32 %v4921, %v4953
    %v4986 = vmul.f32 %v4922, %v4954
    %v4987 = vmul.f32 %v4923, %v4955
    %v4988 = vmul.f32 %v4924, %v4956
    %v4989 = vmul.f32 %v4925, %v4957
    %v4990 = vmul.f32 %v4926, %v4958
    %v4991 = vmul.f32 %v4927, %v4959
    %v4992 = vmul.f32 %v4928, %v4960
    %v4993 = vmul.f32 %v4929, %v4961
    %v4994 = vmul.f32 %v4930, %v4962
    %v4995 = vsub.f32 2.0, %v4963
    %v4996 = vsub.f32 2.0, %v4964
    %v4997 = vsub.f32 2.0, %v4965
    %v4998 = vsub.f32 2.0, %v4966
    %v4999 = vsub.f32 2.0, %v4967
    %v5000 = vsub.f32 2.0, %v4968
    %v5001 = vsub.f32 2.0, %v4969
    %v5002 = vsub.f32 2.0, %v4970
    %v5003 = vsub.f32 2.0, %v4971
    %v5004 = vsub.f32 2.0, %v4972
    %v5005 = vsub.f32 2.0, %v4973
    %v5006 = vsub.f32 2.0, %v4974
    %v5007 = vsub.f32 2.0, %v4975
    %v5008 = vsub.f32 2.0, %v4976
    %v5009 = vsub.f32 2.0, %v4977
    %v5010 = vsub.f32 2.0, %v4978
    %v5011 = vsub.f32 2.0, %v4979
    %v5012 = vsub.f32 2.0, %v4980
    %v5013 = vsub.f32 2.0, %v4981
    %v5014 = vsub.f32 2.0, %v4982
    %v5015 = vsub.f32 2.0, %v4983
    %v5016 = vsub.f32 2.0, %v4984
    %v5017 = vsub.f32 2.0, %v4985
    %v5018 = vsub.f32 2.0, %v4986
    %v5019 = vsub.f32 2.0, %v4987
    %v5020 = vsub.f32 2.0, %v4988
    %v5021 = vsub.f32 2.0, %v4989
    %v5022 = vsub.f32 2.0, %v4990
    %v5023 = vsub.f32 2.0, %v4991
    %v5024 = vsub.f32 2.0, %v4992
    %v5025 = vsub.f32 2.0, %v4993
    %v5026 = vsub.f32 2.0, %v4994
    %v5027 = vmul.f32 %v4931, %v4995
    %v5028 = vmul.f32 %v4932, %v4996
    %v5029 = vmul.f32 %v4933, %v4997
    %v5030 = vmul.f32 %v4934, %v4998
    %v5031 = vmul.f32 %v4935, %v4999
    %v5032 = vmul.f32 %v4936, %v5000
    %v5033 = vmul.f32 %v4937, %v5001
    %v5034 = vmul.f32 %v4938, %v5002
    %v5035 = vmul.f32 %v4939, %v5003
    %v5036 = vmul.f32 %v4940, %v5004
    %v5037 = vmul.f32 %v4941, %v5005
    %v5038 = vmul.f32 %v4942, %v5006
    %v5039 = vmul.f32 %v4943, %v5007
    %v5040 = vmul.f32 %v4944, %v5008
    %v5041 = vmul.f32 %v4945, %v5009
    %v5042 = vmul.f32 %v4946, %v5010
    %v5043 = vmul.f32 %v4947, %v5011
    %v5044 = vmul.f32 %v4948, %v5012
    %v5045 = vmul.f32 %v4949, %v5013
    %v5046 = vmul.f32 %v4950, %v5014
    %v5047 = vmul.f32 %v4951, %v5015
    %v5048 = vmul.f32 %v4952, %v5016
    %v5049 = vmul.f32 %v4953, %v5017
    %v5050 = vmul.f32 %v4954, %v5018
    %v5051 = vmul.f32 %v4955, %v5019
    %v5052 = vmul.f32 %v4956, %v5020
    %v5053 = vmul.f32 %v4957, %v5021
    %v5054 = vmul.f32 %v4958, %v5022
    %v5055 = vmul.f32 %v4959, %v5023
    %v5056 = vmul.f32 %v4960, %v5024
    %v5057 = vmul.f32 %v4961, %v5025
    %v5058 = vmul.f32 %v4962, %v5026
    %v5059 = vmul.f32 %v4690, %v5027
    %v5060 = vmul.f32 %v4691, %v5028
    %v5061 = vmul.f32 %v4692, %v5029
    %v5062 = vmul.f32 %v4693, %v5030
    %v5063 = vmul.f32 %v4694, %v5031
    %v5064 = vmul.f32 %v4695, %v5032
    %v5065 = vmul.f32 %v4696, %v5033
    %v5066 = vmul.f32 %v4697, %v5034
    %v5067 = vmul.f32 %v4698, %v5035
    %v5068 = vmul.f32 %v4699, %v5036
    %v5069 = vmul.f32 %v4700, %v5037
    %v5070 = vmul.f32 %v4701, %v5038
    %v5071 = vmul.f32 %v4702, %v5039
    %v5072 = vmul.f32 %v4703, %v5040
    %v5073 = vmul.f32 %v4704, %v5041
    %v5074 = vmul.f32 %v4705, %v5042
    %v5075 = vmul.f32 %v4706, %v5043
    %v5076 = vmul.f32 %v4707, %v5044
    %v5077 = vmul.f32 %v4708, %v5045
    %v5078 = vmul.f32 %v4709, %v5046
    %v5079 = vmul.f32 %v4710, %v5047
    %v5080 = vmul.f32 %v4711, %v5048
    %v5081 = vmul.f32 %v4712, %v5049
    %v5082 = vmul.f32 %v4713, %v5050
    %v5083 = vmul.f32 %v4714, %v5051
    %v5084 = vmul.f32 %v4715, %v5052
    %v5085 = vmul.f32 %v4716, %v5053
    %v5086 = vmul.f32 %v4717, %v5054
    %v5087 = vmul.f32 %v4718, %v5055
    %v5088 = vmul.f32 %v4719, %v5056
    %v5089 = vmul.f32 %v4720, %v5057
    %v5090 = vmul.f32 %v4721, %v5058
    %5091 = vmatpush.msra.mxu0 %v1145
    %5092 = vmatpush.msra.mxu0 %v1144
    %5093 = vmatpush.msra.mxu0 %v1143
    %5094 = vmatpush.msra.mxu0 %v1142
    %5095 = vmatpush.msra.mxu0 %v1141
    %5096 = vmatpush.msra.mxu0 %v1140
    %5097 = vmatpush.msra.mxu0 %v1139
    %5098 = vmatpush.msra.mxu0 %v1138
    %5099 = vmatpush.msra.mxu0 %v1137
    %5100 = vmatpush.msra.mxu0 %v1136
    %5101 = vmatpush.msra.mxu0 %v1135
    %5102 = vmatpush.msra.mxu0 %v1134
    %5103 = vmatpush.msra.mxu0 %v1133
    %5104 = vmatpush.msra.mxu0 %v1132
    %5105 = vmatpush.msra.mxu0 %v1131
    %5106 = vmatpush.msra.mxu0 %v1130
    %5107 = vmatmul.f32.gmra.mxu0 %v5059
    %v5108 = vpop.f32.mrf.mxu0
    %v5109 = vadd.f32 0.0, %v5108
    %5110 = vmatmul.f32.gmra.mxu0 %v5060
    %v5111 = vpop.f32.mrf.mxu0
    %v5112 = vadd.f32 0.0, %v5111
    %5113 = vmatmul.f32.gmra.mxu0 %v5061
    %v5114 = vpop.f32.mrf.mxu0
    %v5115 = vadd.f32 0.0, %v5114
    %5116 = vmatmul.f32.gmra.mxu0 %v5062
    %v5117 = vpop.f32.mrf.mxu0
    %v5118 = vadd.f32 0.0, %v5117
    %5119 = vmatmul.f32.gmra.mxu0 %v5063
    %v5120 = vpop.f32.mrf.mxu0
    %v5121 = vadd.f32 0.0, %v5120
    %5122 = vmatmul.f32.gmra.mxu0 %v5064
    %v5123 = vpop.f32.mrf.mxu0
    %v5124 = vadd.f32 0.0, %v5123
    %5125 = vmatmul.f32.gmra.mxu0 %v5065
    %v5126 = vpop.f32.mrf.mxu0
    %v5127 = vadd.f32 0.0, %v5126
    %5128 = vmatmul.f32.gmra.mxu0 %v5066
    %v5129 = vpop.f32.mrf.mxu0
    %v5130 = vadd.f32 0.0, %v5129
    %5131 = vmatmul.f32.gmra.mxu0 %v5067
    %v5132 = vpop.f32.mrf.mxu0
    %v5133 = vadd.f32 0.0, %v5132
    %5134 = vmatmul.f32.gmra.mxu0 %v5068
    %v5135 = vpop.f32.mrf.mxu0
    %v5136 = vadd.f32 0.0, %v5135
    %5137 = vmatmul.f32.gmra.mxu0 %v5069
    %v5138 = vpop.f32.mrf.mxu0
    %v5139 = vadd.f32 0.0, %v5138
    %5140 = vmatmul.f32.gmra.mxu0 %v5070
    %v5141 = vpop.f32.mrf.mxu0
    %v5142 = vadd.f32 0.0, %v5141
    %5143 = vmatmul.f32.gmra.mxu0 %v5071
    %v5144 = vpop.f32.mrf.mxu0
    %v5145 = vadd.f32 0.0, %v5144
    %5146 = vmatmul.f32.gmra.mxu0 %v5072
    %v5147 = vpop.f32.mrf.mxu0
    %v5148 = vadd.f32 0.0, %v5147
    %5149 = vmatmul.f32.gmra.mxu0 %v5073
    %v5150 = vpop.f32.mrf.mxu0
    %v5151 = vadd.f32 0.0, %v5150
    %5152 = vmatmul.f32.gmra.mxu0 %v5074
    %v5153 = vpop.f32.mrf.mxu0
    %v5154 = vadd.f32 0.0, %v5153
    %5155 = vmatmul.f32.gmra.mxu0 %v5075
    %v5156 = vpop.f32.mrf.mxu0
    %v5157 = vadd.f32 0.0, %v5156
    %5158 = vmatmul.f32.gmra.mxu0 %v5076
    %v5159 = vpop.f32.mrf.mxu0
    %v5160 = vadd.f32 0.0, %v5159
    %5161 = vmatmul.f32.gmra.mxu0 %v5077
    %v5162 = vpop.f32.mrf.mxu0
    %v5163 = vadd.f32 0.0, %v5162
    %5164 = vmatmul.f32.gmra.mxu0 %v5078
    %v5165 = vpop.f32.mrf.mxu0
    %v5166 = vadd.f32 0.0, %v5165
    %5167 = vmatmul.f32.gmra.mxu0 %v5079
    %v5168 = vpop.f32.mrf.mxu0
    %v5169 = vadd.f32 0.0, %v5168
    %5170 = vmatmul.f32.gmra.mxu0 %v5080
    %v5171 = vpop.f32.mrf.mxu0
    %v5172 = vadd.f32 0.0, %v5171
    %5173 = vmatmul.f32.gmra.mxu0 %v5081
    %v5174 = vpop.f32.mrf.mxu0
    %v5175 = vadd.f32 0.0, %v5174
    %5176 = vmatmul.f32.gmra.mxu0 %v5082
    %v5177 = vpop.f32.mrf.mxu0
    %v5178 = vadd.f32 0.0, %v5177
    %5179 = vmatmul.f32.gmra.mxu0 %v5083
    %v5180 = vpop.f32.mrf.mxu0
    %v5181 = vadd.f32 0.0, %v5180
    %5182 = vmatmul.f32.gmra.mxu0 %v5084
    %v5183 = vpop.f32.mrf.mxu0
    %v5184 = vadd.f32 0.0, %v5183
    %5185 = vmatmul.f32.gmra.mxu0 %v5085
    %v5186 = vpop.f32.mrf.mxu0
    %v5187 = vadd.f32 0.0, %v5186
    %5188 = vmatmul.f32.gmra.mxu0 %v5086
    %v5189 = vpop.f32.mrf.mxu0
    %v5190 = vadd.f32 0.0, %v5189
    %5191 = vmatmul.f32.gmra.mxu0 %v5087
    %v5192 = vpop.f32.mrf.mxu0
    %v5193 = vadd.f32 0.0, %v5192
    %5194 = vmatmul.f32.gmra.mxu0 %v5088
    %v5195 = vpop.f32.mrf.mxu0
    %v5196 = vadd.f32 0.0, %v5195
    %5197 = vmatmul.f32.gmra.mxu0 %v5089
    %v5198 = vpop.f32.mrf.mxu0
    %v5199 = vadd.f32 0.0, %v5198
    %5200 = vmatmul.f32.gmra.mxu0 %v5090
    %v5201 = vpop.f32.mrf.mxu0
    %v5202 = vadd.f32 0.0, %v5201
    %5203 = vdwg.mxu0
    %v5204 = vmul.f32 %v5109, 0.5
    %v5205 = vmul.f32 %v5112, 0.5
    %v5206 = vmul.f32 %v5115, 0.5
    %v5207 = vmul.f32 %v5118, 0.5
    %v5208 = vmul.f32 %v5121, 0.5
    %v5209 = vmul.f32 %v5124, 0.5
    %v5210 = vmul.f32 %v5127, 0.5
    %v5211 = vmul.f32 %v5130, 0.5
    %v5212 = vmul.f32 %v5133, 0.5
    %v5213 = vmul.f32 %v5136, 0.5
    %v5214 = vmul.f32 %v5139, 0.5
    %v5215 = vmul.f32 %v5142, 0.5
    %v5216 = vmul.f32 %v5145, 0.5
    %v5217 = vmul.f32 %v5148, 0.5
    %v5218 = vmul.f32 %v5151, 0.5
    %v5219 = vmul.f32 %v5154, 0.5
    %v5220 = vmul.f32 %v5157, 0.5
    %v5221 = vmul.f32 %v5160, 0.5
    %v5222 = vmul.f32 %v5163, 0.5
    %v5223 = vmul.f32 %v5166, 0.5
    %v5224 = vmul.f32 %v5169, 0.5
    %v5225 = vmul.f32 %v5172, 0.5
    %v5226 = vmul.f32 %v5175, 0.5
    %v5227 = vmul.f32 %v5178, 0.5
    %v5228 = vmul.f32 %v5181, 0.5
    %v5229 = vmul.f32 %v5184, 0.5
    %v5230 = vmul.f32 %v5187, 0.5
    %v5231 = vmul.f32 %v5190, 0.5
    %v5232 = vmul.f32 %v5193, 0.5
    %v5233 = vmul.f32 %v5196, 0.5
    %v5234 = vmul.f32 %v5199, 0.5
    %v5235 = vmul.f32 %v5202, 0.5
    %v5236 = vmul.f32 %v3595, 0.5
    %v5237 = vmul.f32 %v3596, 0.5
    %v5238 = vmul.f32 %v3597, 0.5
    %v5239 = vmul.f32 %v3598, 0.5
    %v5240 = vmul.f32 %v3599, 0.5
    %v5241 = vmul.f32 %v3600, 0.5
    %v5242 = vmul.f32 %v3601, 0.5
    %v5243 = vmul.f32 %v3602, 0.5
    %v5244 = vmul.f32 %v3603, 0.5
    %v5245 = vmul.f32 %v3604, 0.5
    %v5246 = vmul.f32 %v3605, 0.5
    %v5247 = vmul.f32 %v3606, 0.5
    %v5248 = vmul.f32 %v3607, 0.5
    %v5249 = vmul.f32 %v3608, 0.5
    %v5250 = vmul.f32 %v3609, 0.5
    %v5251 = vmul.f32 %v3610, 0.5
    %v5252 = vmul.f32 %v3611, 0.5
    %v5253 = vmul.f32 %v3612, 0.5
    %v5254 = vmul.f32 %v3613, 0.5
    %v5255 = vmul.f32 %v3614, 0.5
    %v5256 = vmul.f32 %v3615, 0.5
    %v5257 = vmul.f32 %v3616, 0.5
    %v5258 = vmul.f32 %v3617, 0.5
    %v5259 = vmul.f32 %v3618, 0.5
    %v5260 = vmul.f32 %v3619, 0.5
    %v5261 = vmul.f32 %v3620, 0.5
    %v5262 = vmul.f32 %v3621, 0.5
    %v5263 = vmul.f32 %v3622, 0.5
    %v5264 = vmul.f32 %v3623, 0.5
    %v5265 = vmul.f32 %v3624, 0.5
    %v5266 = vmul.f32 %v3625, 0.5
    %v5267 = vmul.f32 %v3626, 0.5
    %v5268 = vadd.f32 %v5204, %v5236
    %v5269 = vadd.f32 %v5205, %v5237
    %v5270 = vadd.f32 %v5206, %v5238
    %v5271 = vadd.f32 %v5207, %v5239
    %v5272 = vadd.f32 %v5208, %v5240
    %v5273 = vadd.f32 %v5209, %v5241
    %v5274 = vadd.f32 %v5210, %v5242
    %v5275 = vadd.f32 %v5211, %v5243
    %v5276 = vadd.f32 %v5212, %v5244
    %v5277 = vadd.f32 %v5213, %v5245
    %v5278 = vadd.f32 %v5214, %v5246
    %v5279 = vadd.f32 %v5215, %v5247
    %v5280 = vadd.f32 %v5216, %v5248
    %v5281 = vadd.f32 %v5217, %v5249
    %v5282 = vadd.f32 %v5218, %v5250
    %v5283 = vadd.f32 %v5219, %v5251
    %v5284 = vadd.f32 %v5220, %v5252
    %v5285 = vadd.f32 %v5221, %v5253
    %v5286 = vadd.f32 %v5222, %v5254
    %v5287 = vadd.f32 %v5223, %v5255
    %v5288 = vadd.f32 %v5224, %v5256
    %v5289 = vadd.f32 %v5225, %v5257
    %v5290 = vadd.f32 %v5226, %v5258
    %v5291 = vadd.f32 %v5227, %v5259
    %v5292 = vadd.f32 %v5228, %v5260
    %v5293 = vadd.f32 %v5229, %v5261
    %v5294 = vadd.f32 %v5230, %v5262
    %v5295 = vadd.f32 %v5231, %v5263
    %v5296 = vadd.f32 %v5232, %v5264
    %v5297 = vadd.f32 %v5233, %v5265
    %v5298 = vadd.f32 %v5234, %v5266
    %v5299 = vadd.f32 %v5235, %v5267
    %s5300 = scalar_lea.vmem %s3, 2
    %v5301 = vld [vmem:[%s5300] sm:$0x1]
    %s5302 = scalar_lea.vmem %s4, 2
    %v5303 = vld [vmem:[%s5302] sm:$0x1]
    %v5304 = vsel %vm300, %v5268, 0.0
    %5305 = vadd.xlane.f32.xlu0 %v5304
    %v5306 = vpop.xlane.xlu0 %5305
    %v5307 = vsel %vm300, %v5269, 0.0
    %5308 = vadd.xlane.f32.xlu0 %v5307
    %v5309 = vpop.xlane.xlu0 %5308
    %v5310 = vsel %vm300, %v5270, 0.0
    %5311 = vadd.xlane.f32.xlu0 %v5310
    %v5312 = vpop.xlane.xlu0 %5311
    %v5313 = vsel %vm300, %v5271, 0.0
    %5314 = vadd.xlane.f32.xlu0 %v5313
    %v5315 = vpop.xlane.xlu0 %5314
    %v5316 = vsel %vm300, %v5272, 0.0
    %5317 = vadd.xlane.f32.xlu0 %v5316
    %v5318 = vpop.xlane.xlu0 %5317
    %v5319 = vsel %vm300, %v5273, 0.0
    %5320 = vadd.xlane.f32.xlu0 %v5319
    %v5321 = vpop.xlane.xlu0 %5320
    %v5322 = vsel %vm300, %v5274, 0.0
    %5323 = vadd.xlane.f32.xlu0 %v5322
    %v5324 = vpop.xlane.xlu0 %5323
    %v5325 = vsel %vm300, %v5275, 0.0
    %5326 = vadd.xlane.f32.xlu0 %v5325
    %v5327 = vpop.xlane.xlu0 %5326
    %v5328 = vsel %vm300, %v5276, 0.0
    %5329 = vadd.xlane.f32.xlu0 %v5328
    %v5330 = vpop.xlane.xlu0 %5329
    %v5331 = vsel %vm300, %v5277, 0.0
    %5332 = vadd.xlane.f32.xlu0 %v5331
    %v5333 = vpop.xlane.xlu0 %5332
    %v5334 = vsel %vm300, %v5278, 0.0
    %5335 = vadd.xlane.f32.xlu0 %v5334
    %v5336 = vpop.xlane.xlu0 %5335
    %v5337 = vsel %vm300, %v5279, 0.0
    %5338 = vadd.xlane.f32.xlu0 %v5337
    %v5339 = vpop.xlane.xlu0 %5338
    %v5340 = vsel %vm300, %v5280, 0.0
    %5341 = vadd.xlane.f32.xlu0 %v5340
    %v5342 = vpop.xlane.xlu0 %5341
    %v5343 = vsel %vm300, %v5281, 0.0
    %5344 = vadd.xlane.f32.xlu0 %v5343
    %v5345 = vpop.xlane.xlu0 %5344
    %v5346 = vsel %vm300, %v5282, 0.0
    %5347 = vadd.xlane.f32.xlu0 %v5346
    %v5348 = vpop.xlane.xlu0 %5347
    %v5349 = vsel %vm300, %v5283, 0.0
    %5350 = vadd.xlane.f32.xlu0 %v5349
    %v5351 = vpop.xlane.xlu0 %5350
    %v5352 = vsel %vm300, %v5284, 0.0
    %5353 = vadd.xlane.f32.xlu0 %v5352
    %v5354 = vpop.xlane.xlu0 %5353
    %v5355 = vsel %vm300, %v5285, 0.0
    %5356 = vadd.xlane.f32.xlu0 %v5355
    %v5357 = vpop.xlane.xlu0 %5356
    %v5358 = vsel %vm300, %v5286, 0.0
    %5359 = vadd.xlane.f32.xlu0 %v5358
    %v5360 = vpop.xlane.xlu0 %5359
    %v5361 = vsel %vm300, %v5287, 0.0
    %5362 = vadd.xlane.f32.xlu0 %v5361
    %v5363 = vpop.xlane.xlu0 %5362
    %v5364 = vsel %vm300, %v5288, 0.0
    %5365 = vadd.xlane.f32.xlu0 %v5364
    %v5366 = vpop.xlane.xlu0 %5365
    %v5367 = vsel %vm300, %v5289, 0.0
    %5368 = vadd.xlane.f32.xlu0 %v5367
    %v5369 = vpop.xlane.xlu0 %5368
    %v5370 = vsel %vm300, %v5290, 0.0
    %5371 = vadd.xlane.f32.xlu0 %v5370
    %v5372 = vpop.xlane.xlu0 %5371
    %v5373 = vsel %vm300, %v5291, 0.0
    %5374 = vadd.xlane.f32.xlu0 %v5373
    %v5375 = vpop.xlane.xlu0 %5374
    %v5376 = vsel %vm300, %v5292, 0.0
    %5377 = vadd.xlane.f32.xlu0 %v5376
    %v5378 = vpop.xlane.xlu0 %5377
    %v5379 = vsel %vm300, %v5293, 0.0
    %5380 = vadd.xlane.f32.xlu0 %v5379
    %v5381 = vpop.xlane.xlu0 %5380
    %v5382 = vsel %vm300, %v5294, 0.0
    %5383 = vadd.xlane.f32.xlu0 %v5382
    %v5384 = vpop.xlane.xlu0 %5383
    %v5385 = vsel %vm300, %v5295, 0.0
    %5386 = vadd.xlane.f32.xlu0 %v5385
    %v5387 = vpop.xlane.xlu0 %5386
    %v5388 = vsel %vm300, %v5296, 0.0
    %5389 = vadd.xlane.f32.xlu0 %v5388
    %v5390 = vpop.xlane.xlu0 %5389
    %v5391 = vsel %vm300, %v5297, 0.0
    %5392 = vadd.xlane.f32.xlu0 %v5391
    %v5393 = vpop.xlane.xlu0 %5392
    %v5394 = vsel %vm300, %v5298, 0.0
    %5395 = vadd.xlane.f32.xlu0 %v5394
    %v5396 = vpop.xlane.xlu0 %5395
    %v5397 = vsel %vm300, %v5299, 0.0
    %5398 = vadd.xlane.f32.xlu0 %v5397
    %v5399 = vpop.xlane.xlu0 %5398
    %v5400 = vmul.f32 %v5306, %v403
    %v5401 = vmul.f32 %v5309, %v403
    %v5402 = vmul.f32 %v5312, %v403
    %v5403 = vmul.f32 %v5315, %v403
    %v5404 = vmul.f32 %v5318, %v403
    %v5405 = vmul.f32 %v5321, %v403
    %v5406 = vmul.f32 %v5324, %v403
    %v5407 = vmul.f32 %v5327, %v403
    %v5408 = vmul.f32 %v5330, %v403
    %v5409 = vmul.f32 %v5333, %v403
    %v5410 = vmul.f32 %v5336, %v403
    %v5411 = vmul.f32 %v5339, %v403
    %v5412 = vmul.f32 %v5342, %v403
    %v5413 = vmul.f32 %v5345, %v403
    %v5414 = vmul.f32 %v5348, %v403
    %v5415 = vmul.f32 %v5351, %v403
    %v5416 = vmul.f32 %v5354, %v403
    %v5417 = vmul.f32 %v5357, %v403
    %v5418 = vmul.f32 %v5360, %v403
    %v5419 = vmul.f32 %v5363, %v403
    %v5420 = vmul.f32 %v5366, %v403
    %v5421 = vmul.f32 %v5369, %v403
    %v5422 = vmul.f32 %v5372, %v403
    %v5423 = vmul.f32 %v5375, %v403
    %v5424 = vmul.f32 %v5378, %v403
    %v5425 = vmul.f32 %v5381, %v403
    %v5426 = vmul.f32 %v5384, %v403
    %v5427 = vmul.f32 %v5387, %v403
    %v5428 = vmul.f32 %v5390, %v403
    %v5429 = vmul.f32 %v5393, %v403
    %v5430 = vmul.f32 %v5396, %v403
    %v5431 = vmul.f32 %v5399, %v403
    %v5432 = vsub.f32 %v5268, %v5400
    %v5433 = vsub.f32 %v5269, %v5401
    %v5434 = vsub.f32 %v5270, %v5402
    %v5435 = vsub.f32 %v5271, %v5403
    %v5436 = vsub.f32 %v5272, %v5404
    %v5437 = vsub.f32 %v5273, %v5405
    %v5438 = vsub.f32 %v5274, %v5406
    %v5439 = vsub.f32 %v5275, %v5407
    %v5440 = vsub.f32 %v5276, %v5408
    %v5441 = vsub.f32 %v5277, %v5409
    %v5442 = vsub.f32 %v5278, %v5410
    %v5443 = vsub.f32 %v5279, %v5411
    %v5444 = vsub.f32 %v5280, %v5412
    %v5445 = vsub.f32 %v5281, %v5413
    %v5446 = vsub.f32 %v5282, %v5414
    %v5447 = vsub.f32 %v5283, %v5415
    %v5448 = vsub.f32 %v5284, %v5416
    %v5449 = vsub.f32 %v5285, %v5417
    %v5450 = vsub.f32 %v5286, %v5418
    %v5451 = vsub.f32 %v5287, %v5419
    %v5452 = vsub.f32 %v5288, %v5420
    %v5453 = vsub.f32 %v5289, %v5421
    %v5454 = vsub.f32 %v5290, %v5422
    %v5455 = vsub.f32 %v5291, %v5423
    %v5456 = vsub.f32 %v5292, %v5424
    %v5457 = vsub.f32 %v5293, %v5425
    %v5458 = vsub.f32 %v5294, %v5426
    %v5459 = vsub.f32 %v5295, %v5427
    %v5460 = vsub.f32 %v5296, %v5428
    %v5461 = vsub.f32 %v5297, %v5429
    %v5462 = vsub.f32 %v5298, %v5430
    %v5463 = vsub.f32 %v5299, %v5431
    %v5464 = vmul.f32 %v5432, %v5432
    %v5465 = vmul.f32 %v5433, %v5433
    %v5466 = vmul.f32 %v5434, %v5434
    %v5467 = vmul.f32 %v5435, %v5435
    %v5468 = vmul.f32 %v5436, %v5436
    %v5469 = vmul.f32 %v5437, %v5437
    %v5470 = vmul.f32 %v5438, %v5438
    %v5471 = vmul.f32 %v5439, %v5439
    %v5472 = vmul.f32 %v5440, %v5440
    %v5473 = vmul.f32 %v5441, %v5441
    %v5474 = vmul.f32 %v5442, %v5442
    %v5475 = vmul.f32 %v5443, %v5443
    %v5476 = vmul.f32 %v5444, %v5444
    %v5477 = vmul.f32 %v5445, %v5445
    %v5478 = vmul.f32 %v5446, %v5446
    %v5479 = vmul.f32 %v5447, %v5447
    %v5480 = vmul.f32 %v5448, %v5448
    %v5481 = vmul.f32 %v5449, %v5449
    %v5482 = vmul.f32 %v5450, %v5450
    %v5483 = vmul.f32 %v5451, %v5451
    %v5484 = vmul.f32 %v5452, %v5452
    %v5485 = vmul.f32 %v5453, %v5453
    %v5486 = vmul.f32 %v5454, %v5454
    %v5487 = vmul.f32 %v5455, %v5455
    %v5488 = vmul.f32 %v5456, %v5456
    %v5489 = vmul.f32 %v5457, %v5457
    %v5490 = vmul.f32 %v5458, %v5458
    %v5491 = vmul.f32 %v5459, %v5459
    %v5492 = vmul.f32 %v5460, %v5460
    %v5493 = vmul.f32 %v5461, %v5461
    %v5494 = vmul.f32 %v5462, %v5462
    %v5495 = vmul.f32 %v5463, %v5463
    %v5496 = vsel %vm300, %v5464, 0.0
    %5497 = vadd.xlane.f32.xlu0 %v5496
    %v5498 = vpop.xlane.xlu0 %5497
    %v5499 = vsel %vm300, %v5465, 0.0
    %5500 = vadd.xlane.f32.xlu0 %v5499
    %v5501 = vpop.xlane.xlu0 %5500
    %v5502 = vsel %vm300, %v5466, 0.0
    %5503 = vadd.xlane.f32.xlu0 %v5502
    %v5504 = vpop.xlane.xlu0 %5503
    %v5505 = vsel %vm300, %v5467, 0.0
    %5506 = vadd.xlane.f32.xlu0 %v5505
    %v5507 = vpop.xlane.xlu0 %5506
    %v5508 = vsel %vm300, %v5468, 0.0
    %5509 = vadd.xlane.f32.xlu0 %v5508
    %v5510 = vpop.xlane.xlu0 %5509
    %v5511 = vsel %vm300, %v5469, 0.0
    %5512 = vadd.xlane.f32.xlu0 %v5511
    %v5513 = vpop.xlane.xlu0 %5512
    %v5514 = vsel %vm300, %v5470, 0.0
    %5515 = vadd.xlane.f32.xlu0 %v5514
    %v5516 = vpop.xlane.xlu0 %5515
    %v5517 = vsel %vm300, %v5471, 0.0
    %5518 = vadd.xlane.f32.xlu0 %v5517
    %v5519 = vpop.xlane.xlu0 %5518
    %v5520 = vsel %vm300, %v5472, 0.0
    %5521 = vadd.xlane.f32.xlu0 %v5520
    %v5522 = vpop.xlane.xlu0 %5521
    %v5523 = vsel %vm300, %v5473, 0.0
    %5524 = vadd.xlane.f32.xlu0 %v5523
    %v5525 = vpop.xlane.xlu0 %5524
    %v5526 = vsel %vm300, %v5474, 0.0
    %5527 = vadd.xlane.f32.xlu0 %v5526
    %v5528 = vpop.xlane.xlu0 %5527
    %v5529 = vsel %vm300, %v5475, 0.0
    %5530 = vadd.xlane.f32.xlu0 %v5529
    %v5531 = vpop.xlane.xlu0 %5530
    %v5532 = vsel %vm300, %v5476, 0.0
    %5533 = vadd.xlane.f32.xlu0 %v5532
    %v5534 = vpop.xlane.xlu0 %5533
    %v5535 = vsel %vm300, %v5477, 0.0
    %5536 = vadd.xlane.f32.xlu0 %v5535
    %v5537 = vpop.xlane.xlu0 %5536
    %v5538 = vsel %vm300, %v5478, 0.0
    %5539 = vadd.xlane.f32.xlu0 %v5538
    %v5540 = vpop.xlane.xlu0 %5539
    %v5541 = vsel %vm300, %v5479, 0.0
    %5542 = vadd.xlane.f32.xlu0 %v5541
    %v5543 = vpop.xlane.xlu0 %5542
    %v5544 = vsel %vm300, %v5480, 0.0
    %5545 = vadd.xlane.f32.xlu0 %v5544
    %v5546 = vpop.xlane.xlu0 %5545
    %v5547 = vsel %vm300, %v5481, 0.0
    %5548 = vadd.xlane.f32.xlu0 %v5547
    %v5549 = vpop.xlane.xlu0 %5548
    %v5550 = vsel %vm300, %v5482, 0.0
    %5551 = vadd.xlane.f32.xlu0 %v5550
    %v5552 = vpop.xlane.xlu0 %5551
    %v5553 = vsel %vm300, %v5483, 0.0
    %5554 = vadd.xlane.f32.xlu0 %v5553
    %v5555 = vpop.xlane.xlu0 %5554
    %v5556 = vsel %vm300, %v5484, 0.0
    %5557 = vadd.xlane.f32.xlu0 %v5556
    %v5558 = vpop.xlane.xlu0 %5557
    %v5559 = vsel %vm300, %v5485, 0.0
    %5560 = vadd.xlane.f32.xlu0 %v5559
    %v5561 = vpop.xlane.xlu0 %5560
    %v5562 = vsel %vm300, %v5486, 0.0
    %5563 = vadd.xlane.f32.xlu0 %v5562
    %v5564 = vpop.xlane.xlu0 %5563
    %v5565 = vsel %vm300, %v5487, 0.0
    %5566 = vadd.xlane.f32.xlu0 %v5565
    %v5567 = vpop.xlane.xlu0 %5566
    %v5568 = vsel %vm300, %v5488, 0.0
    %5569 = vadd.xlane.f32.xlu0 %v5568
    %v5570 = vpop.xlane.xlu0 %5569
    %v5571 = vsel %vm300, %v5489, 0.0
    %5572 = vadd.xlane.f32.xlu0 %v5571
    %v5573 = vpop.xlane.xlu0 %5572
    %v5574 = vsel %vm300, %v5490, 0.0
    %5575 = vadd.xlane.f32.xlu0 %v5574
    %v5576 = vpop.xlane.xlu0 %5575
    %v5577 = vsel %vm300, %v5491, 0.0
    %5578 = vadd.xlane.f32.xlu0 %v5577
    %v5579 = vpop.xlane.xlu0 %5578
    %v5580 = vsel %vm300, %v5492, 0.0
    %5581 = vadd.xlane.f32.xlu0 %v5580
    %v5582 = vpop.xlane.xlu0 %5581
    %v5583 = vsel %vm300, %v5493, 0.0
    %5584 = vadd.xlane.f32.xlu0 %v5583
    %v5585 = vpop.xlane.xlu0 %5584
    %v5586 = vsel %vm300, %v5494, 0.0
    %5587 = vadd.xlane.f32.xlu0 %v5586
    %v5588 = vpop.xlane.xlu0 %5587
    %v5589 = vsel %vm300, %v5495, 0.0
    %5590 = vadd.xlane.f32.xlu0 %v5589
    %v5591 = vpop.xlane.xlu0 %5590
    %v5592 = vmul.f32 %v5498, %v403
    %v5593 = vmul.f32 %v5501, %v403
    %v5594 = vmul.f32 %v5504, %v403
    %v5595 = vmul.f32 %v5507, %v403
    %v5596 = vmul.f32 %v5510, %v403
    %v5597 = vmul.f32 %v5513, %v403
    %v5598 = vmul.f32 %v5516, %v403
    %v5599 = vmul.f32 %v5519, %v403
    %v5600 = vmul.f32 %v5522, %v403
    %v5601 = vmul.f32 %v5525, %v403
    %v5602 = vmul.f32 %v5528, %v403
    %v5603 = vmul.f32 %v5531, %v403
    %v5604 = vmul.f32 %v5534, %v403
    %v5605 = vmul.f32 %v5537, %v403
    %v5606 = vmul.f32 %v5540, %v403
    %v5607 = vmul.f32 %v5543, %v403
    %v5608 = vmul.f32 %v5546, %v403
    %v5609 = vmul.f32 %v5549, %v403
    %v5610 = vmul.f32 %v5552, %v403
    %v5611 = vmul.f32 %v5555, %v403
    %v5612 = vmul.f32 %v5558, %v403
    %v5613 = vmul.f32 %v5561, %v403
    %v5614 = vmul.f32 %v5564, %v403
    %v5615 = vmul.f32 %v5567, %v403
    %v5616 = vmul.f32 %v5570, %v403
    %v5617 = vmul.f32 %v5573, %v403
    %v5618 = vmul.f32 %v5576, %v403
    %v5619 = vmul.f32 %v5579, %v403
    %v5620 = vmul.f32 %v5582, %v403
    %v5621 = vmul.f32 %v5585, %v403
    %v5622 = vmul.f32 %v5588, %v403
    %v5623 = vmul.f32 %v5591, %v403
    %v5624 = vadd.f32 %v5592, 1e-05
    %v5625 = vadd.f32 %v5593, 1e-05
    %v5626 = vadd.f32 %v5594, 1e-05
    %v5627 = vadd.f32 %v5595, 1e-05
    %v5628 = vadd.f32 %v5596, 1e-05
    %v5629 = vadd.f32 %v5597, 1e-05
    %v5630 = vadd.f32 %v5598, 1e-05
    %v5631 = vadd.f32 %v5599, 1e-05
    %v5632 = vadd.f32 %v5600, 1e-05
    %v5633 = vadd.f32 %v5601, 1e-05
    %v5634 = vadd.f32 %v5602, 1e-05
    %v5635 = vadd.f32 %v5603, 1e-05
    %v5636 = vadd.f32 %v5604, 1e-05
    %v5637 = vadd.f32 %v5605, 1e-05
    %v5638 = vadd.f32 %v5606, 1e-05
    %v5639 = vadd.f32 %v5607, 1e-05
    %v5640 = vadd.f32 %v5608, 1e-05
    %v5641 = vadd.f32 %v5609, 1e-05
    %v5642 = vadd.f32 %v5610, 1e-05
    %v5643 = vadd.f32 %v5611, 1e-05
    %v5644 = vadd.f32 %v5612, 1e-05
    %v5645 = vadd.f32 %v5613, 1e-05
    %v5646 = vadd.f32 %v5614, 1e-05
    %v5647 = vadd.f32 %v5615, 1e-05
    %v5648 = vadd.f32 %v5616, 1e-05
    %v5649 = vadd.f32 %v5617, 1e-05
    %v5650 = vadd.f32 %v5618, 1e-05
    %v5651 = vadd.f32 %v5619, 1e-05
    %v5652 = vadd.f32 %v5620, 1e-05
    %v5653 = vadd.f32 %v5621, 1e-05
    %v5654 = vadd.f32 %v5622, 1e-05
    %v5655 = vadd.f32 %v5623, 1e-05
    %v5656 = vrsqrt.pop %v5624
    %v5657 = vmul.f32 %v5656, %v5624
    %v5658 = vmul.f32 %v5657, %v5656
    %v5659 = vmul.f32 0.5, %v5658
    %v5660 = vsub.f32 1.5, %v5659
    %v5661 = vmul.f32 %v5656, %v5660
    %vm5662 = vweird.f32 %v5624
    %vm5663 = vweird.f32 %v5656
    %vm5664 = vmor %vm5662, %vm5663
    %v5665 = vsel %vm5664, %v5656, %v5661
    %v5666 = vrsqrt.pop %v5625
    %v5667 = vmul.f32 %v5666, %v5625
    %v5668 = vmul.f32 %v5667, %v5666
    %v5669 = vmul.f32 0.5, %v5668
    %v5670 = vsub.f32 1.5, %v5669
    %v5671 = vmul.f32 %v5666, %v5670
    %vm5672 = vweird.f32 %v5625
    %vm5673 = vweird.f32 %v5666
    %vm5674 = vmor %vm5672, %vm5673
    %v5675 = vsel %vm5674, %v5666, %v5671
    %v5676 = vrsqrt.pop %v5626
    %v5677 = vmul.f32 %v5676, %v5626
    %v5678 = vmul.f32 %v5677, %v5676
    %v5679 = vmul.f32 0.5, %v5678
    %v5680 = vsub.f32 1.5, %v5679
    %v5681 = vmul.f32 %v5676, %v5680
    %vm5682 = vweird.f32 %v5626
    %vm5683 = vweird.f32 %v5676
    %vm5684 = vmor %vm5682, %vm5683
    %v5685 = vsel %vm5684, %v5676, %v5681
    %v5686 = vrsqrt.pop %v5627
    %v5687 = vmul.f32 %v5686, %v5627
    %v5688 = vmul.f32 %v5687, %v5686
    %v5689 = vmul.f32 0.5, %v5688
    %v5690 = vsub.f32 1.5, %v5689
    %v5691 = vmul.f32 %v5686, %v5690
    %vm5692 = vweird.f32 %v5627
    %vm5693 = vweird.f32 %v5686
    %vm5694 = vmor %vm5692, %vm5693
    %v5695 = vsel %vm5694, %v5686, %v5691
    %v5696 = vrsqrt.pop %v5628
    %v5697 = vmul.f32 %v5696, %v5628
    %v5698 = vmul.f32 %v5697, %v5696
    %v5699 = vmul.f32 0.5, %v5698
    %v5700 = vsub.f32 1.5, %v5699
    %v5701 = vmul.f32 %v5696, %v5700
    %vm5702 = vweird.f32 %v5628
    %vm5703 = vweird.f32 %v5696
    %vm5704 = vmor %vm5702, %vm5703
    %v5705 = vsel %vm5704, %v5696, %v5701
    %v5706 = vrsqrt.pop %v5629
    %v5707 = vmul.f32 %v5706, %v5629
    %v5708 = vmul.f32 %v5707, %v5706
    %v5709 = vmul.f32 0.5, %v5708
    %v5710 = vsub.f32 1.5, %v5709
    %v5711 = vmul.f32 %v5706, %v5710
    %vm5712 = vweird.f32 %v5629
    %vm5713 = vweird.f32 %v5706
    %vm5714 = vmor %vm5712, %vm5713
    %v5715 = vsel %vm5714, %v5706, %v5711
    %v5716 = vrsqrt.pop %v5630
    %v5717 = vmul.f32 %v5716, %v5630
    %v5718 = vmul.f32 %v5717, %v5716
    %v5719 = vmul.f32 0.5, %v5718
    %v5720 = vsub.f32 1.5, %v5719
    %v5721 = vmul.f32 %v5716, %v5720
    %vm5722 = vweird.f32 %v5630
    %vm5723 = vweird.f32 %v5716
    %vm5724 = vmor %vm5722, %vm5723
    %v5725 = vsel %vm5724, %v5716, %v5721
    %v5726 = vrsqrt.pop %v5631
    %v5727 = vmul.f32 %v5726, %v5631
    %v5728 = vmul.f32 %v5727, %v5726
    %v5729 = vmul.f32 0.5, %v5728
    %v5730 = vsub.f32 1.5, %v5729
    %v5731 = vmul.f32 %v5726, %v5730
    %vm5732 = vweird.f32 %v5631
    %vm5733 = vweird.f32 %v5726
    %vm5734 = vmor %vm5732, %vm5733
    %v5735 = vsel %vm5734, %v5726, %v5731
    %v5736 = vrsqrt.pop %v5632
    %v5737 = vmul.f32 %v5736, %v5632
    %v5738 = vmul.f32 %v5737, %v5736
    %v5739 = vmul.f32 0.5, %v5738
    %v5740 = vsub.f32 1.5, %v5739
    %v5741 = vmul.f32 %v5736, %v5740
    %vm5742 = vweird.f32 %v5632
    %vm5743 = vweird.f32 %v5736
    %vm5744 = vmor %vm5742, %vm5743
    %v5745 = vsel %vm5744, %v5736, %v5741
    %v5746 = vrsqrt.pop %v5633
    %v5747 = vmul.f32 %v5746, %v5633
    %v5748 = vmul.f32 %v5747, %v5746
    %v5749 = vmul.f32 0.5, %v5748
    %v5750 = vsub.f32 1.5, %v5749
    %v5751 = vmul.f32 %v5746, %v5750
    %vm5752 = vweird.f32 %v5633
    %vm5753 = vweird.f32 %v5746
    %vm5754 = vmor %vm5752, %vm5753
    %v5755 = vsel %vm5754, %v5746, %v5751
    %v5756 = vrsqrt.pop %v5634
    %v5757 = vmul.f32 %v5756, %v5634
    %v5758 = vmul.f32 %v5757, %v5756
    %v5759 = vmul.f32 0.5, %v5758
    %v5760 = vsub.f32 1.5, %v5759
    %v5761 = vmul.f32 %v5756, %v5760
    %vm5762 = vweird.f32 %v5634
    %vm5763 = vweird.f32 %v5756
    %vm5764 = vmor %vm5762, %vm5763
    %v5765 = vsel %vm5764, %v5756, %v5761
    %v5766 = vrsqrt.pop %v5635
    %v5767 = vmul.f32 %v5766, %v5635
    %v5768 = vmul.f32 %v5767, %v5766
    %v5769 = vmul.f32 0.5, %v5768
    %v5770 = vsub.f32 1.5, %v5769
    %v5771 = vmul.f32 %v5766, %v5770
    %vm5772 = vweird.f32 %v5635
    %vm5773 = vweird.f32 %v5766
    %vm5774 = vmor %vm5772, %vm5773
    %v5775 = vsel %vm5774, %v5766, %v5771
    %v5776 = vrsqrt.pop %v5636
    %v5777 = vmul.f32 %v5776, %v5636
    %v5778 = vmul.f32 %v5777, %v5776
    %v5779 = vmul.f32 0.5, %v5778
    %v5780 = vsub.f32 1.5, %v5779
    %v5781 = vmul.f32 %v5776, %v5780
    %vm5782 = vweird.f32 %v5636
    %vm5783 = vweird.f32 %v5776
    %vm5784 = vmor %vm5782, %vm5783
    %v5785 = vsel %vm5784, %v5776, %v5781
    %v5786 = vrsqrt.pop %v5637
    %v5787 = vmul.f32 %v5786, %v5637
    %v5788 = vmul.f32 %v5787, %v5786
    %v5789 = vmul.f32 0.5, %v5788
    %v5790 = vsub.f32 1.5, %v5789
    %v5791 = vmul.f32 %v5786, %v5790
    %vm5792 = vweird.f32 %v5637
    %vm5793 = vweird.f32 %v5786
    %vm5794 = vmor %vm5792, %vm5793
    %v5795 = vsel %vm5794, %v5786, %v5791
    %v5796 = vrsqrt.pop %v5638
    %v5797 = vmul.f32 %v5796, %v5638
    %v5798 = vmul.f32 %v5797, %v5796
    %v5799 = vmul.f32 0.5, %v5798
    %v5800 = vsub.f32 1.5, %v5799
    %v5801 = vmul.f32 %v5796, %v5800
    %vm5802 = vweird.f32 %v5638
    %vm5803 = vweird.f32 %v5796
    %vm5804 = vmor %vm5802, %vm5803
    %v5805 = vsel %vm5804, %v5796, %v5801
    %v5806 = vrsqrt.pop %v5639
    %v5807 = vmul.f32 %v5806, %v5639
    %v5808 = vmul.f32 %v5807, %v5806
    %v5809 = vmul.f32 0.5, %v5808
    %v5810 = vsub.f32 1.5, %v5809
    %v5811 = vmul.f32 %v5806, %v5810
    %vm5812 = vweird.f32 %v5639
    %vm5813 = vweird.f32 %v5806
    %vm5814 = vmor %vm5812, %vm5813
    %v5815 = vsel %vm5814, %v5806, %v5811
    %v5816 = vrsqrt.pop %v5640
    %v5817 = vmul.f32 %v5816, %v5640
    %v5818 = vmul.f32 %v5817, %v5816
    %v5819 = vmul.f32 0.5, %v5818
    %v5820 = vsub.f32 1.5, %v5819
    %v5821 = vmul.f32 %v5816, %v5820
    %vm5822 = vweird.f32 %v5640
    %vm5823 = vweird.f32 %v5816
    %vm5824 = vmor %vm5822, %vm5823
    %v5825 = vsel %vm5824, %v5816, %v5821
    %v5826 = vrsqrt.pop %v5641
    %v5827 = vmul.f32 %v5826, %v5641
    %v5828 = vmul.f32 %v5827, %v5826
    %v5829 = vmul.f32 0.5, %v5828
    %v5830 = vsub.f32 1.5, %v5829
    %v5831 = vmul.f32 %v5826, %v5830
    %vm5832 = vweird.f32 %v5641
    %vm5833 = vweird.f32 %v5826
    %vm5834 = vmor %vm5832, %vm5833
    %v5835 = vsel %vm5834, %v5826, %v5831
    %v5836 = vrsqrt.pop %v5642
    %v5837 = vmul.f32 %v5836, %v5642
    %v5838 = vmul.f32 %v5837, %v5836
    %v5839 = vmul.f32 0.5, %v5838
    %v5840 = vsub.f32 1.5, %v5839
    %v5841 = vmul.f32 %v5836, %v5840
    %vm5842 = vweird.f32 %v5642
    %vm5843 = vweird.f32 %v5836
    %vm5844 = vmor %vm5842, %vm5843
    %v5845 = vsel %vm5844, %v5836, %v5841
    %v5846 = vrsqrt.pop %v5643
    %v5847 = vmul.f32 %v5846, %v5643
    %v5848 = vmul.f32 %v5847, %v5846
    %v5849 = vmul.f32 0.5, %v5848
    %v5850 = vsub.f32 1.5, %v5849
    %v5851 = vmul.f32 %v5846, %v5850
    %vm5852 = vweird.f32 %v5643
    %vm5853 = vweird.f32 %v5846
    %vm5854 = vmor %vm5852, %vm5853
    %v5855 = vsel %vm5854, %v5846, %v5851
    %v5856 = vrsqrt.pop %v5644
    %v5857 = vmul.f32 %v5856, %v5644
    %v5858 = vmul.f32 %v5857, %v5856
    %v5859 = vmul.f32 0.5, %v5858
    %v5860 = vsub.f32 1.5, %v5859
    %v5861 = vmul.f32 %v5856, %v5860
    %vm5862 = vweird.f32 %v5644
    %vm5863 = vweird.f32 %v5856
    %vm5864 = vmor %vm5862, %vm5863
    %v5865 = vsel %vm5864, %v5856, %v5861
    %v5866 = vrsqrt.pop %v5645
    %v5867 = vmul.f32 %v5866, %v5645
    %v5868 = vmul.f32 %v5867, %v5866
    %v5869 = vmul.f32 0.5, %v5868
    %v5870 = vsub.f32 1.5, %v5869
    %v5871 = vmul.f32 %v5866, %v5870
    %vm5872 = vweird.f32 %v5645
    %vm5873 = vweird.f32 %v5866
    %vm5874 = vmor %vm5872, %vm5873
    %v5875 = vsel %vm5874, %v5866, %v5871
    %v5876 = vrsqrt.pop %v5646
    %v5877 = vmul.f32 %v5876, %v5646
    %v5878 = vmul.f32 %v5877, %v5876
    %v5879 = vmul.f32 0.5, %v5878
    %v5880 = vsub.f32 1.5, %v5879
    %v5881 = vmul.f32 %v5876, %v5880
    %vm5882 = vweird.f32 %v5646
    %vm5883 = vweird.f32 %v5876
    %vm5884 = vmor %vm5882, %vm5883
    %v5885 = vsel %vm5884, %v5876, %v5881
    %v5886 = vrsqrt.pop %v5647
    %v5887 = vmul.f32 %v5886, %v5647
    %v5888 = vmul.f32 %v5887, %v5886
    %v5889 = vmul.f32 0.5, %v5888
    %v5890 = vsub.f32 1.5, %v5889
    %v5891 = vmul.f32 %v5886, %v5890
    %vm5892 = vweird.f32 %v5647
    %vm5893 = vweird.f32 %v5886
    %vm5894 = vmor %vm5892, %vm5893
    %v5895 = vsel %vm5894, %v5886, %v5891
    %v5896 = vrsqrt.pop %v5648
    %v5897 = vmul.f32 %v5896, %v5648
    %v5898 = vmul.f32 %v5897, %v5896
    %v5899 = vmul.f32 0.5, %v5898
    %v5900 = vsub.f32 1.5, %v5899
    %v5901 = vmul.f32 %v5896, %v5900
    %vm5902 = vweird.f32 %v5648
    %vm5903 = vweird.f32 %v5896
    %vm5904 = vmor %vm5902, %vm5903
    %v5905 = vsel %vm5904, %v5896, %v5901
    %v5906 = vrsqrt.pop %v5649
    %v5907 = vmul.f32 %v5906, %v5649
    %v5908 = vmul.f32 %v5907, %v5906
    %v5909 = vmul.f32 0.5, %v5908
    %v5910 = vsub.f32 1.5, %v5909
    %v5911 = vmul.f32 %v5906, %v5910
    %vm5912 = vweird.f32 %v5649
    %vm5913 = vweird.f32 %v5906
    %vm5914 = vmor %vm5912, %vm5913
    %v5915 = vsel %vm5914, %v5906, %v5911
    %v5916 = vrsqrt.pop %v5650
    %v5917 = vmul.f32 %v5916, %v5650
    %v5918 = vmul.f32 %v5917, %v5916
    %v5919 = vmul.f32 0.5, %v5918
    %v5920 = vsub.f32 1.5, %v5919
    %v5921 = vmul.f32 %v5916, %v5920
    %vm5922 = vweird.f32 %v5650
    %vm5923 = vweird.f32 %v5916
    %vm5924 = vmor %vm5922, %vm5923
    %v5925 = vsel %vm5924, %v5916, %v5921
    %v5926 = vrsqrt.pop %v5651
    %v5927 = vmul.f32 %v5926, %v5651
    %v5928 = vmul.f32 %v5927, %v5926
    %v5929 = vmul.f32 0.5, %v5928
    %v5930 = vsub.f32 1.5, %v5929
    %v5931 = vmul.f32 %v5926, %v5930
    %vm5932 = vweird.f32 %v5651
    %vm5933 = vweird.f32 %v5926
    %vm5934 = vmor %vm5932, %vm5933
    %v5935 = vsel %vm5934, %v5926, %v5931
    %v5936 = vrsqrt.pop %v5652
    %v5937 = vmul.f32 %v5936, %v5652
    %v5938 = vmul.f32 %v5937, %v5936
    %v5939 = vmul.f32 0.5, %v5938
    %v5940 = vsub.f32 1.5, %v5939
    %v5941 = vmul.f32 %v5936, %v5940
    %vm5942 = vweird.f32 %v5652
    %vm5943 = vweird.f32 %v5936
    %vm5944 = vmor %vm5942, %vm5943
    %v5945 = vsel %vm5944, %v5936, %v5941
    %v5946 = vrsqrt.pop %v5653
    %v5947 = vmul.f32 %v5946, %v5653
    %v5948 = vmul.f32 %v5947, %v5946
    %v5949 = vmul.f32 0.5, %v5948
    %v5950 = vsub.f32 1.5, %v5949
    %v5951 = vmul.f32 %v5946, %v5950
    %vm5952 = vweird.f32 %v5653
    %vm5953 = vweird.f32 %v5946
    %vm5954 = vmor %vm5952, %vm5953
    %v5955 = vsel %vm5954, %v5946, %v5951
    %v5956 = vrsqrt.pop %v5654
    %v5957 = vmul.f32 %v5956, %v5654
    %v5958 = vmul.f32 %v5957, %v5956
    %v5959 = vmul.f32 0.5, %v5958
    %v5960 = vsub.f32 1.5, %v5959
    %v5961 = vmul.f32 %v5956, %v5960
    %vm5962 = vweird.f32 %v5654
    %vm5963 = vweird.f32 %v5956
    %vm5964 = vmor %vm5962, %vm5963
    %v5965 = vsel %vm5964, %v5956, %v5961
    %v5966 = vrsqrt.pop %v5655
    %v5967 = vmul.f32 %v5966, %v5655
    %v5968 = vmul.f32 %v5967, %v5966
    %v5969 = vmul.f32 0.5, %v5968
    %v5970 = vsub.f32 1.5, %v5969
    %v5971 = vmul.f32 %v5966, %v5970
    %vm5972 = vweird.f32 %v5655
    %vm5973 = vweird.f32 %v5966
    %vm5974 = vmor %vm5972, %vm5973
    %v5975 = vsel %vm5974, %v5966, %v5971
    %v5976 = vmul.f32 %v5432, %v5665
    %v5977 = vmul.f32 %v5433, %v5675
    %v5978 = vmul.f32 %v5434, %v5685
    %v5979 = vmul.f32 %v5435, %v5695
    %v5980 = vmul.f32 %v5436, %v5705
    %v5981 = vmul.f32 %v5437, %v5715
    %v5982 = vmul.f32 %v5438, %v5725
    %v5983 = vmul.f32 %v5439, %v5735
    %v5984 = vmul.f32 %v5440, %v5745
    %v5985 = vmul.f32 %v5441, %v5755
    %v5986 = vmul.f32 %v5442, %v5765
    %v5987 = vmul.f32 %v5443, %v5775
    %v5988 = vmul.f32 %v5444, %v5785
    %v5989 = vmul.f32 %v5445, %v5795
    %v5990 = vmul.f32 %v5446, %v5805
    %v5991 = vmul.f32 %v5447, %v5815
    %v5992 = vmul.f32 %v5448, %v5825
    %v5993 = vmul.f32 %v5449, %v5835
    %v5994 = vmul.f32 %v5450, %v5845
    %v5995 = vmul.f32 %v5451, %v5855
    %v5996 = vmul.f32 %v5452, %v5865
    %v5997 = vmul.f32 %v5453, %v5875
    %v5998 = vmul.f32 %v5454, %v5885
    %v5999 = vmul.f32 %v5455, %v5895
    %v6000 = vmul.f32 %v5456, %v5905
    %v6001 = vmul.f32 %v5457, %v5915
    %v6002 = vmul.f32 %v5458, %v5925
    %v6003 = vmul.f32 %v5459, %v5935
    %v6004 = vmul.f32 %v5460, %v5945
    %v6005 = vmul.f32 %v5461, %v5955
    %v6006 = vmul.f32 %v5462, %v5965
    %v6007 = vmul.f32 %v5463, %v5975
    %v6009 = vperm.slane %v5301, 0
    %v6011 = vmul.f32 %v5976, %v6009
    %v6012 = vmul.f32 %v5977, %v6009
    %v6013 = vmul.f32 %v5978, %v6009
    %v6014 = vmul.f32 %v5979, %v6009
    %v6015 = vmul.f32 %v5980, %v6009
    %v6016 = vmul.f32 %v5981, %v6009
    %v6017 = vmul.f32 %v5982, %v6009
    %v6018 = vmul.f32 %v5983, %v6009
    %v6019 = vmul.f32 %v5984, %v6009
    %v6020 = vmul.f32 %v5985, %v6009
    %v6021 = vmul.f32 %v5986, %v6009
    %v6022 = vmul.f32 %v5987, %v6009
    %v6023 = vmul.f32 %v5988, %v6009
    %v6024 = vmul.f32 %v5989, %v6009
    %v6025 = vmul.f32 %v5990, %v6009
    %v6026 = vmul.f32 %v5991, %v6009
    %v6027 = vmul.f32 %v5992, %v6009
    %v6028 = vmul.f32 %v5993, %v6009
    %v6029 = vmul.f32 %v5994, %v6009
    %v6030 = vmul.f32 %v5995, %v6009
    %v6031 = vmul.f32 %v5996, %v6009
    %v6032 = vmul.f32 %v5997, %v6009
    %v6033 = vmul.f32 %v5998, %v6009
    %v6034 = vmul.f32 %v5999, %v6009
    %v6035 = vmul.f32 %v6000, %v6009
    %v6036 = vmul.f32 %v6001, %v6009
    %v6037 = vmul.f32 %v6002, %v6009
    %v6038 = vmul.f32 %v6003, %v6009
    %v6039 = vmul.f32 %v6004, %v6009
    %v6040 = vmul.f32 %v6005, %v6009
    %v6041 = vmul.f32 %v6006, %v6009
    %v6042 = vmul.f32 %v6007, %v6009
    %v6044 = vperm.slane %v5303, 0
    %v6046 = vadd.f32 %v6011, %v6044
    %v6047 = vadd.f32 %v6012, %v6044
    %v6048 = vadd.f32 %v6013, %v6044
    %v6049 = vadd.f32 %v6014, %v6044
    %v6050 = vadd.f32 %v6015, %v6044
    %v6051 = vadd.f32 %v6016, %v6044
    %v6052 = vadd.f32 %v6017, %v6044
    %v6053 = vadd.f32 %v6018, %v6044
    %v6054 = vadd.f32 %v6019, %v6044
    %v6055 = vadd.f32 %v6020, %v6044
    %v6056 = vadd.f32 %v6021, %v6044
    %v6057 = vadd.f32 %v6022, %v6044
    %v6058 = vadd.f32 %v6023, %v6044
    %v6059 = vadd.f32 %v6024, %v6044
    %v6060 = vadd.f32 %v6025, %v6044
    %v6061 = vadd.f32 %v6026, %v6044
    %v6062 = vadd.f32 %v6027, %v6044
    %v6063 = vadd.f32 %v6028, %v6044
    %v6064 = vadd.f32 %v6029, %v6044
    %v6065 = vadd.f32 %v6030, %v6044
    %v6066 = vadd.f32 %v6031, %v6044
    %v6067 = vadd.f32 %v6032, %v6044
    %v6068 = vadd.f32 %v6033, %v6044
    %v6069 = vadd.f32 %v6034, %v6044
    %v6070 = vadd.f32 %v6035, %v6044
    %v6071 = vadd.f32 %v6036, %v6044
    %v6072 = vadd.f32 %v6037, %v6044
    %v6073 = vadd.f32 %v6038, %v6044
    %v6074 = vadd.f32 %v6039, %v6044
    %v6075 = vadd.f32 %v6040, %v6044
    %v6076 = vadd.f32 %v6041, %v6044
    %v6077 = vadd.f32 %v6042, %v6044
    %v6078 = vmax.f32 %v6046, 0.0
    %v6079 = vmax.f32 %v6047, 0.0
    %v6080 = vmax.f32 %v6048, 0.0
    %v6081 = vmax.f32 %v6049, 0.0
    %v6082 = vmax.f32 %v6050, 0.0
    %v6083 = vmax.f32 %v6051, 0.0
    %v6084 = vmax.f32 %v6052, 0.0
    %v6085 = vmax.f32 %v6053, 0.0
    %v6086 = vmax.f32 %v6054, 0.0
    %v6087 = vmax.f32 %v6055, 0.0
    %v6088 = vmax.f32 %v6056, 0.0
    %v6089 = vmax.f32 %v6057, 0.0
    %v6090 = vmax.f32 %v6058, 0.0
    %v6091 = vmax.f32 %v6059, 0.0
    %v6092 = vmax.f32 %v6060, 0.0
    %v6093 = vmax.f32 %v6061, 0.0
    %v6094 = vmax.f32 %v6062, 0.0
    %v6095 = vmax.f32 %v6063, 0.0
    %v6096 = vmax.f32 %v6064, 0.0
    %v6097 = vmax.f32 %v6065, 0.0
    %v6098 = vmax.f32 %v6066, 0.0
    %v6099 = vmax.f32 %v6067, 0.0
    %v6100 = vmax.f32 %v6068, 0.0
    %v6101 = vmax.f32 %v6069, 0.0
    %v6102 = vmax.f32 %v6070, 0.0
    %v6103 = vmax.f32 %v6071, 0.0
    %v6104 = vmax.f32 %v6072, 0.0
    %v6105 = vmax.f32 %v6073, 0.0
    %v6106 = vmax.f32 %v6074, 0.0
    %v6107 = vmax.f32 %v6075, 0.0
    %v6108 = vmax.f32 %v6076, 0.0
    %v6109 = vmax.f32 %v6077, 0.0
    %6110 = vst.msk [vmem:[%s9] sm:$0xff] %vm300, %v6078
    %6111 = vst.msk [vmem:[%s9 + $0x8] sm:$0xff] %vm300, %v6079
    %6112 = vst.msk [vmem:[%s9 + $0x10] sm:$0xff] %vm300, %v6080
    %6113 = vst.msk [vmem:[%s9 + $0x18] sm:$0xff] %vm300, %v6081
    %6114 = vst.msk [vmem:[%s9 + $0x20] sm:$0xff] %vm300, %v6082
    %6115 = vst.msk [vmem:[%s9 + $0x28] sm:$0xff] %vm300, %v6083
    %6116 = vst.msk [vmem:[%s9 + $0x30] sm:$0xff] %vm300, %v6084
    %6117 = vst.msk [vmem:[%s9 + $0x38] sm:$0xff] %vm300, %v6085
    %6118 = vst.msk [vmem:[%s9 + $0x40] sm:$0xff] %vm300, %v6086
    %6119 = vst.msk [vmem:[%s9 + $0x48] sm:$0xff] %vm300, %v6087
    %6120 = vst.msk [vmem:[%s9 + $0x50] sm:$0xff] %vm300, %v6088
    %6121 = vst.msk [vmem:[%s9 + $0x58] sm:$0xff] %vm300, %v6089
    %6122 = vst.msk [vmem:[%s9 + $0x60] sm:$0xff] %vm300, %v6090
    %6123 = vst.msk [vmem:[%s9 + $0x68] sm:$0xff] %vm300, %v6091
    %6124 = vst.msk [vmem:[%s9 + $0x70] sm:$0xff] %vm300, %v6092
    %6125 = vst.msk [vmem:[%s9 + $0x78] sm:$0xff] %vm300, %v6093
    %6126 = vst.msk [vmem:[%s9 + $0x80] sm:$0xff] %vm300, %v6094
    %6127 = vst.msk [vmem:[%s9 + $0x88] sm:$0xff] %vm300, %v6095
    %6128 = vst.msk [vmem:[%s9 + $0x90] sm:$0xff] %vm300, %v6096
    %6129 = vst.msk [vmem:[%s9 + $0x98] sm:$0xff] %vm300, %v6097
    %6130 = vst.msk [vmem:[%s9 + $0xa0] sm:$0xff] %vm300, %v6098
    %6131 = vst.msk [vmem:[%s9 + $0xa8] sm:$0xff] %vm300, %v6099
    %6132 = vst.msk [vmem:[%s9 + $0xb0] sm:$0xff] %vm300, %v6100
    %6133 = vst.msk [vmem:[%s9 + $0xb8] sm:$0xff] %vm300, %v6101
    %6134 = vst.msk [vmem:[%s9 + $0xc0] sm:$0xff] %vm300, %v6102
    %6135 = vst.msk [vmem:[%s9 + $0xc8] sm:$0xff] %vm300, %v6103
    %6136 = vst.msk [vmem:[%s9 + $0xd0] sm:$0xff] %vm300, %v6104
    %6137 = vst.msk [vmem:[%s9 + $0xd8] sm:$0xff] %vm300, %v6105
    %6138 = vst.msk [vmem:[%s9 + $0xe0] sm:$0xff] %vm300, %v6106
    %6139 = vst.msk [vmem:[%s9 + $0xe8] sm:$0xff] %vm300, %v6107
    %6140 = vst.msk [vmem:[%s9 + $0xf0] sm:$0xff] %vm300, %v6108
    %6141 = vst.msk [vmem:[%s9 + $0xf8] sm:$0xff] %vm300, %v6109
    // Predicated region
    $region42: #{_forward_resident.1} parent=1 // pred_check
      _
    $region43: #{_forward_resident.1} parent=1 // pred_check_branch
      %6143 = sbr.rel (0) target = $region45
    $region44: #{_forward_resident.1} parent=1 // pred_region
      _
    $region45: #{_forward_resident.1} parent=1 // pred_fallthru
      _
    // Predicated region
    $region46: #{_forward_resident.1} parent=1 // pred_check
      _
    $region47: #{_forward_resident.1} parent=1 // pred_check_branch
      %6145 = sbr.rel (0) target = $region49
    $region48: #{_forward_resident.1} parent=1 // pred_region
      _
    $region49: #{_forward_resident.1} parent=1 // pred_fallthru
      _
    %6146 = vsyncpa [#allocation3], 1

</llo_original>
